<compile_context>
chip_gen: v6e
topology: v6e:2x2x1
jax: 0.10.0
libtpu: 0.0.40
codegen_flags: <defaults>
</compile_context>

<pallas_src>
import functools

import jax
import jax.numpy as jnp
import numpy as np
from jax.experimental import pallas as pl
from jax.experimental.pallas import tpu as pltpu

STEM_C = 16          # stem output channels
MID_C = 8            # bottleneck mid channels
OUT_C = 32           # bottleneck output channels
NUM_CLASSES = 10

BATCH = 2
IMG_H = IMG_W = 32
STEM_K = 7 * 7 * 3
STEM_K_PAD = 256     # pad the stem GEMM contraction dim up to an MXU-friendly 256

H1 = (IMG_H + 2 * 3 - 7) // 2 + 1      # 16 : stem 7x7/s2/p3 output spatial
W1 = (IMG_W + 2 * 3 - 7) // 2 + 1      # 16
H2 = (H1 + 2 * 1 - 3) // 2 + 1         # 8  : maxpool 3x3/s2/p1 output spatial
W2 = (W1 + 2 * 1 - 3) // 2 + 1         # 8
M1 = BATCH * H1 * W1                   # 512 lanes (lane-dense, multiple of 128)
M2 = BATCH * H2 * W2                   # 128 lanes


# ---------------------------------------------------------------------------
# The single fused Pallas kernel
# ---------------------------------------------------------------------------
def _fused_resnet_kernel(
    cols_ref,       # [STEM_K_PAD, M1] bf16 : stem im2col (K on sublanes, spatial on lanes)
    w_stem_ref,     # [STEM_C, STEM_K_PAD]  bf16
    b_stem_ref,     # [STEM_C, 1]           f32
    mask_pool_ref,  # [9, M1]               f32 : 3x3 window validity over H1 x W1
    s_pool_ref,     # [M1, M2]              bf16: stride-2 subsample selection matrix
    w1_ref,         # [MID_C, STEM_C]       bf16
    b1_ref,         # [MID_C, 1]            f32
    w2_ref,         # [9, MID_C, MID_C]     bf16: per-tap [cout, cin]
    b2_ref,         # [MID_C, 1]            f32
    mask_conv_ref,  # [9, M2]               f32 : 3x3 conv validity over H2 x W2
    w3_ref,         # [OUT_C, MID_C]        bf16
    b3_ref,         # [OUT_C, 1]            f32
    wsc_ref,        # [OUT_C, STEM_C]       bf16
    bsc_ref,        # [OUT_C, 1]            f32
    p_gap_ref,      # [M2, BATCH]           bf16: per-batch mean (GAP folded into a GEMM)
    wfc_ref,        # [NUM_CLASSES, OUT_C]  bf16
    bfc_ref,        # [NUM_CLASSES, 1]      f32
    out_ref,        # [NUM_CLASSES, BATCH]  f32 : transposed logits
    *, w1_spatial, w2_spatial,
):
    f32 = jnp.float32
    bf16 = jnp.bfloat16

    # Probe the lane-rotate convention once so the shifted-window reads are correct
    # regardless of the roll direction convention of this jax/Mosaic version.
    lane_idx = jax.lax.broadcasted_iota(jnp.int32, (8, 128), 1)
    probe = pltpu.roll(lane_idx, 1, axis=1)[0, 0]
    sign = jnp.where(probe == 127, -1, 1).astype(jnp.int32)

    def shift_lanes(x, off):
        # y[:, m] == x[:, m + off]  (circular; callers mask wrapped positions)
        if off == 0:
            return x
        n = x.shape[-1]
        return pltpu.roll(x, (sign * off) % n, axis=1)

    # ---- stem: 7x7/s2 conv as one bf16 GEMM + bias + ReLU (f32 epilogue) -----
    stem = jnp.dot(w_stem_ref[...], cols_ref[...], preferred_element_type=f32)
    stem = jnp.maximum(stem + b_stem_ref[...], 0.0)            # [STEM_C, M1]

    # ---- maxpool 3x3/s2/p1 ----------------------------------------------------
    # stride-1 3x3 running max over masked shifted views (VPU/XLU), then the
    # stride-2 subsample as a constant-selection GEMM (keeps lanes dense).
    mask_pool = mask_pool_ref[...]
    neg = jnp.float32(-1e30)
    maxfull = None
    for t in range(9):
        di, dj = t // 3 - 1, t % 3 - 1
        cand = shift_lanes(stem, di * w1_spatial + dj)
        cand = jnp.where(mask_pool[t:t + 1, :] > 0.5, cand, neg)
        maxfull = cand if maxfull is None else jnp.maximum(maxfull, cand)
    pooled = jnp.dot(maxfull.astype(bf16), s_pool_ref[...],
                     preferred_element_type=f32)               # [STEM_C, M2]
    pooled_bf = pooled.astype(bf16)

    # ---- bottleneck residual block --------------------------------------------
    # 1x1 (STEM_C -> MID_C) + ReLU
    y = jnp.dot(w1_ref[...], pooled_bf, preferred_element_type=f32) + b1_ref[...]
    y = jnp.maximum(y, 0.0)                                    # [MID_C, M2]

    # 3x3/p1 (MID_C -> MID_C): 9 accumulated masked shifted-view GEMMs + ReLU
    w2 = w2_ref[...]
    mask_conv = mask_conv_ref[...]
    acc = None
    for t in range(9):
        di, dj = t // 3 - 1, t % 3 - 1
        sh = shift_lanes(y, di * w2_spatial + dj) * mask_conv[t:t + 1, :]
        part = jnp.dot(w2[t], sh.astype(bf16), preferred_element_type=f32)
        acc = part if acc is None else acc + part
    y = jnp.maximum(acc + b2_ref[...], 0.0)                    # [MID_C, M2]

    # 1x1 (MID_C -> OUT_C), no ReLU
    y = jnp.dot(w3_ref[...], y.astype(bf16), preferred_element_type=f32) + b3_ref[...]

    # 1x1 shortcut (STEM_C -> OUT_C), no ReLU
    sc = jnp.dot(wsc_ref[...], pooled_bf, preferred_element_type=f32) + bsc_ref[...]

    # residual add + ReLU (f32)
    act = jnp.maximum(y + sc, 0.0)                             # [OUT_C, M2]

    # ---- global average pool (folded into a GEMM) + FC head -------------------
    gap = jnp.dot(act.astype(bf16), p_gap_ref[...],
                  preferred_element_type=f32)                  # [OUT_C, BATCH]
    logits_t = jnp.dot(wfc_ref[...], gap.astype(bf16), preferred_element_type=f32)
    out_ref[...] = logits_t + bfc_ref[...]                     # [NUM_CLASSES, BATCH]


# ---------------------------------------------------------------------------
# Host-side constant / parameter packing
# ---------------------------------------------------------------------------
def _pool_conv_constants():
    """Masks and selection matrices for the fixed (BATCH, H1, W1, H2, W2) config."""
    m1 = np.arange(M1)
    oh1, ow1 = (m1 % (H1 * W1)) // W1, m1 % W1
    m2 = np.arange(M2)
    oh2, ow2 = (m2 % (H2 * W2)) // W2, m2 % W2
    mask_pool = np.zeros((9, M1), np.float32)
    mask_conv = np.zeros((9, M2), np.float32)
    for t in range(9):
        di, dj = t // 3 - 1, t % 3 - 1
        mask_pool[t] = ((oh1 + di >= 0) & (oh1 + di < H1) &
                        (ow1 + dj >= 0) & (ow1 + dj < W1)).astype(np.float32)
        mask_conv[t] = ((oh2 + di >= 0) & (oh2 + di < H2) &
                        (ow2 + dj >= 0) & (ow2 + dj < W2)).astype(np.float32)
    s_pool = np.zeros((M1, M2), np.float32)     # stride-2 subsample selection
    p_gap = np.zeros((M2, BATCH), np.float32)   # per-batch mean
    for b in range(BATCH):
        for i in range(H2):
            for j in range(W2):
                dst = b * H2 * W2 + i * W2 + j
                src = b * H1 * W1 + (2 * i) * W1 + (2 * j)
                s_pool[src, dst] = 1.0
        p_gap[b * H2 * W2:(b + 1) * H2 * W2, b] = 1.0 / (H2 * W2)
    return (jnp.asarray(mask_pool), jnp.asarray(mask_conv),
            jnp.asarray(s_pool, jnp.bfloat16), jnp.asarray(p_gap, jnp.bfloat16))


def init_params(key):
    ks = jax.random.split(key, 6)

    def w(k, shape, fan_in):
        return (jax.random.normal(k, shape, jnp.float32) / np.sqrt(fan_in)).astype(jnp.float32)

    return {
        "stem_w": w(ks[0], (7, 7, 3, STEM_C), 7 * 7 * 3),
        "stem_b": jnp.zeros((STEM_C,), jnp.float32),
        "b1_w": w(ks[1], (1, 1, STEM_C, MID_C), STEM_C),
        "b1_b": jnp.zeros((MID_C,), jnp.float32),
        "b2_w": w(ks[2], (3, 3, MID_C, MID_C), 3 * 3 * MID_C),
        "b2_b": jnp.zeros((MID_C,), jnp.float32),
        "b3_w": w(ks[3], (1, 1, MID_C, OUT_C), MID_C),
        "b3_b": jnp.zeros((OUT_C,), jnp.float32),
        "sc_w": w(ks[4], (1, 1, STEM_C, OUT_C), STEM_C),
        "sc_b": jnp.zeros((OUT_C,), jnp.float32),
        "fc_w": w(ks[5], (OUT_C, NUM_CLASSES), OUT_C),
        "fc_b": jnp.zeros((NUM_CLASSES,), jnp.float32),
    }


def pack_params(params):
    """Rearrange weights into the kernel's transposed, bf16, MXU-friendly layout."""
    def conv1x1(w):                       # [1,1,cin,cout] -> [cout,cin] bf16
        return jnp.asarray(w[0, 0].T, jnp.bfloat16)

    w_stem = params["stem_w"].transpose(3, 0, 1, 2).reshape(STEM_C, STEM_K)
    w_stem = jnp.pad(w_stem, ((0, 0), (0, STEM_K_PAD - STEM_K))).astype(jnp.bfloat16)
    w2 = params["b2_w"].transpose(0, 1, 3, 2).reshape(9, MID_C, MID_C).astype(jnp.bfloat16)
    mask_pool, mask_conv, s_pool, p_gap = _pool_conv_constants()
    col = lambda b: jnp.asarray(b.reshape(-1, 1), jnp.float32)
    return dict(
        w_stem=w_stem, b_stem=col(params["stem_b"]),
        mask_pool=mask_pool, s_pool=s_pool,
        w1=conv1x1(params["b1_w"]), b1=col(params["b1_b"]),
        w2=w2, b2=col(params["b2_b"]), mask_conv=mask_conv,
        w3=conv1x1(params["b3_w"]), b3=col(params["b3_b"]),
        wsc=conv1x1(params["sc_w"]), bsc=col(params["sc_b"]),
        p_gap=p_gap,
        wfc=jnp.asarray(params["fc_w"].T, jnp.bfloat16), bfc=col(params["fc_b"]),
    )


def _stem_im2col(x_nhwc):
    """7x7/s2/p3 im2col in transposed [K, B*H1*W1] layout; K zero-padded to 256, bf16."""
    B = x_nhwc.shape[0]
    xp = jnp.pad(x_nhwc, ((0, 0), (3, 3), (3, 3), (0, 0)))
    taps = []
    for i in range(7):
        for j in range(7):
            taps.append(xp[:, i:i + 2 * H1:2, j:j + 2 * W1:2, :])   # [B, H1, W1, 3]
    cols = jnp.stack(taps, axis=0)                                  # [49, B, H1, W1, 3]
    cols = cols.transpose(0, 4, 1, 2, 3).reshape(STEM_K, B * H1 * W1)
    cols = jnp.pad(cols, ((0, STEM_K_PAD - STEM_K), (0, 0)))
    return cols.astype(jnp.bfloat16)


# ---------------------------------------------------------------------------
# Forward (HuggingfaceToTensorModelWrapper.forward equivalent: x -> logits)
# ---------------------------------------------------------------------------
def forward(packed, x_nchw):
    # NCHW (PyTorch convention) -> NHWC, then the fused kernel works in [C, B*H*W].
    x = jnp.transpose(x_nchw, (0, 2, 3, 1)).astype(jnp.float32)
    cols = _stem_im2col(x)
    # TODO(synk): at real ResNet-50 sizes the stem im2col must also move in-kernel
    #             (shifted-window reads over an M/K-tiled grid) instead of XLA.
    kernel = functools.partial(_fused_resnet_kernel, w1_spatial=W1, w2_spatial=W2)
    vmem = pl.BlockSpec(memory_space=pltpu.MemorySpace.VMEM)
    logits_t = pl.pallas_call(
        kernel,
        out_shape=jax.ShapeDtypeStruct((NUM_CLASSES, x.shape[0]), jnp.float32),
        in_specs=[vmem] * 17,
        out_specs=vmem,
    )(cols, packed["w_stem"], packed["b_stem"], packed["mask_pool"], packed["s_pool"],
      packed["w1"], packed["b1"], packed["w2"], packed["b2"], packed["mask_conv"],
      packed["w3"], packed["b3"], packed["wsc"], packed["bsc"],
      packed["p_gap"], packed["wfc"], packed["bfc"])
    return logits_t.T                                           # [B, NUM_CLASSES]


if __name__ == "__main__":
    key = jax.random.PRNGKey(0)
    kx, kp = jax.random.split(key)
    x = jax.random.normal(kx, (BATCH, 3, IMG_H, IMG_W), jnp.float32)   # NCHW, like PyTorch
    params = init_params(kp)
    packed = pack_params(params)

    logits = jax.jit(forward)(packed, x)
    logits = jax.block_until_ready(logits)

    assert logits.shape == (BATCH, NUM_CLASSES), logits.shape
    assert logits.dtype == jnp.float32
    assert bool(jnp.all(jnp.isfinite(logits)))
    print("KERNEL_OK")
</pallas_src>

<mosaic_0001>
module attributes {stable_mosaic.version = 11 : i64} {
  func.func @_fused_resnet_kernel(%arg0: memref<256x512xbf16, #tpu.memory_space<vmem>>, %arg1: memref<16x256xbf16, #tpu.memory_space<vmem>>, %arg2: memref<16x1xf32, #tpu.memory_space<vmem>>, %arg3: memref<9x512xf32, #tpu.memory_space<vmem>>, %arg4: memref<512x128xbf16, #tpu.memory_space<vmem>>, %arg5: memref<8x16xbf16, #tpu.memory_space<vmem>>, %arg6: memref<8x1xf32, #tpu.memory_space<vmem>>, %arg7: memref<9x8x8xbf16, #tpu.memory_space<vmem>>, %arg8: memref<8x1xf32, #tpu.memory_space<vmem>>, %arg9: memref<9x128xf32, #tpu.memory_space<vmem>>, %arg10: memref<32x8xbf16, #tpu.memory_space<vmem>>, %arg11: memref<32x1xf32, #tpu.memory_space<vmem>>, %arg12: memref<32x16xbf16, #tpu.memory_space<vmem>>, %arg13: memref<32x1xf32, #tpu.memory_space<vmem>>, %arg14: memref<128x2xbf16, #tpu.memory_space<vmem>>, %arg15: memref<10x32xbf16, #tpu.memory_space<vmem>>, %arg16: memref<10x1xf32, #tpu.memory_space<vmem>>, %arg17: memref<10x2xf32, #tpu.memory_space<vmem>>) attributes {dimension_semantics = [], scalar_prefetch = 0 : i64, scratch_operands = 0 : i64, tpu.core_type = #tpu.core_type<tc>} {
    %0 = tpu.iota {dimensions = array<i32: 1>} : vector<8x128xi32>
    %c1_i32 = arith.constant 1 : i32
    %1 = tpu.dynamic_rotate %0 by %c1_i32 dim 1 : vector<8x128xi32>, i32 -> vector<8x128xi32>
    %2 = vector.extract_strided_slice %1 {offsets = [0, 0], sizes = [1, 1], strides = [1, 1]} : vector<8x128xi32> to vector<1x1xi32>
    %3 = vector.extract %2[0, 0] : i32 from vector<1x1xi32>
    %c127_i32 = arith.constant 127 : i32
    %4 = arith.cmpi eq, %3, %c127_i32 : i32
    %c-1_i32 = arith.constant -1 : i32
    %c1_i32_0 = arith.constant 1 : i32
    %5 = arith.select %4, %c-1_i32, %c1_i32_0 : i32
    %c0 = arith.constant 0 : index
    %c0_1 = arith.constant 0 : index
    %6 = vector.load %arg1[%c0, %c0_1] : memref<16x256xbf16, #tpu.memory_space<vmem>>, vector<16x256xbf16>
    %c0_2 = arith.constant 0 : index
    %c0_3 = arith.constant 0 : index
    %7 = vector.load %arg0[%c0_2, %c0_3] : memref<256x512xbf16, #tpu.memory_space<vmem>>, vector<256x512xbf16>
    %cst = arith.constant dense<0.000000e+00> : vector<16x512xf32>
    %8 = tpu.matmul %6, %7, %cst {dimension_numbers = #tpu.dot_dimension_numbers<[1], [0], [0], [1], [0, 0, 1, 1], [], []>} : vector<16x256xbf16>, vector<256x512xbf16>, vector<16x512xf32> -> vector<16x512xf32>
    %c0_4 = arith.constant 0 : index
    %c0_5 = arith.constant 0 : index
    %9 = vector.load %arg2[%c0_4, %c0_5] : memref<16x1xf32, #tpu.memory_space<vmem>>, vector<16x1xf32>
    %10 = vector.broadcast %9 : vector<16x1xf32> to vector<16x512xf32>
    %11 = arith.addf %8, %10 : vector<16x512xf32>
    %cst_6 = arith.constant 0.000000e+00 : f32
    %12 = vector.broadcast %cst_6 : f32 to vector<16x512xf32>
    %13 = arith.maximumf %11, %12 : vector<16x512xf32>
    %c0_7 = arith.constant 0 : index
    %c0_8 = arith.constant 0 : index
    %14 = vector.load %arg3[%c0_7, %c0_8] : memref<9x512xf32, #tpu.memory_space<vmem>>, vector<9x512xf32>
    %c-17_i32 = arith.constant -17 : i32
    %15 = arith.muli %5, %c-17_i32 : i32
    %c512_i32 = arith.constant 512 : i32
    %c0_i32 = arith.constant 0 : i32
    %16 = arith.cmpi eq, %c512_i32, %c0_i32 : i32
    %c1_i32_9 = arith.constant 1 : i32
    %17 = arith.select %16, %c1_i32_9, %c512_i32 : i32
    %18 = arith.remsi %15, %17 : i32
    %c0_i32_10 = arith.constant 0 : i32
    %19 = arith.cmpi ne, %18, %c0_i32_10 : i32
    %c0_i32_11 = arith.constant 0 : i32
    %20 = arith.cmpi slt, %18, %c0_i32_11 : i32
    %c0_i32_12 = arith.constant 0 : i32
    %21 = arith.cmpi slt, %17, %c0_i32_12 : i32
    %22 = arith.xori %20, %21 : i1
    %23 = arith.andi %22, %19 : i1
    %24 = arith.addi %18, %17 : i32
    %25 = arith.select %23, %24, %18 : i32
    %26 = tpu.dynamic_rotate %13 by %25 dim 1 : vector<16x512xf32>, i32 -> vector<16x512xf32>
    %27 = vector.extract_strided_slice %14 {offsets = [0, 0], sizes = [1, 512], strides = [1, 1]} : vector<9x512xf32> to vector<1x512xf32>
    %cst_13 = arith.constant 5.000000e-01 : f32
    %28 = vector.broadcast %cst_13 : f32 to vector<1x512xf32>
    %29 = arith.cmpf ogt, %27, %28 : vector<1x512xf32>
    %cst_14 = arith.constant -1.000000e+30 : f32
    %30 = vector.shape_cast %29 : vector<1x512xi1> to vector<1x512xi1>
    %31 = vector.broadcast %30 : vector<1x512xi1> to vector<16x512xi1>
    %32 = vector.broadcast %cst_14 : f32 to vector<16x512xf32>
    %33 = arith.select %31, %26, %32 : vector<16x512xi1>, vector<16x512xf32>
    %c-16_i32 = arith.constant -16 : i32
    %34 = arith.muli %5, %c-16_i32 : i32
    %c512_i32_15 = arith.constant 512 : i32
    %c0_i32_16 = arith.constant 0 : i32
    %35 = arith.cmpi eq, %c512_i32_15, %c0_i32_16 : i32
    %c1_i32_17 = arith.constant 1 : i32
    %36 = arith.select %35, %c1_i32_17, %c512_i32_15 : i32
    %37 = arith.remsi %34, %36 : i32
    %c0_i32_18 = arith.constant 0 : i32
    %38 = arith.cmpi ne, %37, %c0_i32_18 : i32
    %c0_i32_19 = arith.constant 0 : i32
    %39 = arith.cmpi slt, %37, %c0_i32_19 : i32
    %c0_i32_20 = arith.constant 0 : i32
    %40 = arith.cmpi slt, %36, %c0_i32_20 : i32
    %41 = arith.xori %39, %40 : i1
    %42 = arith.andi %41, %38 : i1
    %43 = arith.addi %37, %36 : i32
    %44 = arith.select %42, %43, %37 : i32
    %45 = tpu.dynamic_rotate %13 by %44 dim 1 : vector<16x512xf32>, i32 -> vector<16x512xf32>
    %46 = vector.extract_strided_slice %14 {offsets = [1, 0], sizes = [1, 512], strides = [1, 1]} : vector<9x512xf32> to vector<1x512xf32>
    %cst_21 = arith.constant 5.000000e-01 : f32
    %47 = vector.broadcast %cst_21 : f32 to vector<1x512xf32>
    %48 = arith.cmpf ogt, %46, %47 : vector<1x512xf32>
    %cst_22 = arith.constant -1.000000e+30 : f32
    %49 = vector.shape_cast %48 : vector<1x512xi1> to vector<1x512xi1>
    %50 = vector.broadcast %49 : vector<1x512xi1> to vector<16x512xi1>
    %51 = vector.broadcast %cst_22 : f32 to vector<16x512xf32>
    %52 = arith.select %50, %45, %51 : vector<16x512xi1>, vector<16x512xf32>
    %53 = arith.maximumf %33, %52 : vector<16x512xf32>
    %c-15_i32 = arith.constant -15 : i32
    %54 = arith.muli %5, %c-15_i32 : i32
    %c512_i32_23 = arith.constant 512 : i32
    %c0_i32_24 = arith.constant 0 : i32
    %55 = arith.cmpi eq, %c512_i32_23, %c0_i32_24 : i32
    %c1_i32_25 = arith.constant 1 : i32
    %56 = arith.select %55, %c1_i32_25, %c512_i32_23 : i32
    %57 = arith.remsi %54, %56 : i32
    %c0_i32_26 = arith.constant 0 : i32
    %58 = arith.cmpi ne, %57, %c0_i32_26 : i32
    %c0_i32_27 = arith.constant 0 : i32
    %59 = arith.cmpi slt, %57, %c0_i32_27 : i32
    %c0_i32_28 = arith.constant 0 : i32
    %60 = arith.cmpi slt, %56, %c0_i32_28 : i32
    %61 = arith.xori %59, %60 : i1
    %62 = arith.andi %61, %58 : i1
    %63 = arith.addi %57, %56 : i32
    %64 = arith.select %62, %63, %57 : i32
    %65 = tpu.dynamic_rotate %13 by %64 dim 1 : vector<16x512xf32>, i32 -> vector<16x512xf32>
    %66 = vector.extract_strided_slice %14 {offsets = [2, 0], sizes = [1, 512], strides = [1, 1]} : vector<9x512xf32> to vector<1x512xf32>
    %cst_29 = arith.constant 5.000000e-01 : f32
    %67 = vector.broadcast %cst_29 : f32 to vector<1x512xf32>
    %68 = arith.cmpf ogt, %66, %67 : vector<1x512xf32>
    %cst_30 = arith.constant -1.000000e+30 : f32
    %69 = vector.shape_cast %68 : vector<1x512xi1> to vector<1x512xi1>
    %70 = vector.broadcast %69 : vector<1x512xi1> to vector<16x512xi1>
    %71 = vector.broadcast %cst_30 : f32 to vector<16x512xf32>
    %72 = arith.select %70, %65, %71 : vector<16x512xi1>, vector<16x512xf32>
    %73 = arith.maximumf %53, %72 : vector<16x512xf32>
    %c-1_i32_31 = arith.constant -1 : i32
    %74 = arith.muli %5, %c-1_i32_31 : i32
    %c512_i32_32 = arith.constant 512 : i32
    %c0_i32_33 = arith.constant 0 : i32
    %75 = arith.cmpi eq, %c512_i32_32, %c0_i32_33 : i32
    %c1_i32_34 = arith.constant 1 : i32
    %76 = arith.select %75, %c1_i32_34, %c512_i32_32 : i32
    %77 = arith.remsi %74, %76 : i32
    %c0_i32_35 = arith.constant 0 : i32
    %78 = arith.cmpi ne, %77, %c0_i32_35 : i32
    %c0_i32_36 = arith.constant 0 : i32
    %79 = arith.cmpi slt, %77, %c0_i32_36 : i32
    %c0_i32_37 = arith.constant 0 : i32
    %80 = arith.cmpi slt, %76, %c0_i32_37 : i32
    %81 = arith.xori %79, %80 : i1
    %82 = arith.andi %81, %78 : i1
    %83 = arith.addi %77, %76 : i32
    %84 = arith.select %82, %83, %77 : i32
    %85 = tpu.dynamic_rotate %13 by %84 dim 1 : vector<16x512xf32>, i32 -> vector<16x512xf32>
    %86 = vector.extract_strided_slice %14 {offsets = [3, 0], sizes = [1, 512], strides = [1, 1]} : vector<9x512xf32> to vector<1x512xf32>
    %cst_38 = arith.constant 5.000000e-01 : f32
    %87 = vector.broadcast %cst_38 : f32 to vector<1x512xf32>
    %88 = arith.cmpf ogt, %86, %87 : vector<1x512xf32>
    %cst_39 = arith.constant -1.000000e+30 : f32
    %89 = vector.shape_cast %88 : vector<1x512xi1> to vector<1x512xi1>
    %90 = vector.broadcast %89 : vector<1x512xi1> to vector<16x512xi1>
    %91 = vector.broadcast %cst_39 : f32 to vector<16x512xf32>
    %92 = arith.select %90, %85, %91 : vector<16x512xi1>, vector<16x512xf32>
    %93 = arith.maximumf %73, %92 : vector<16x512xf32>
    %94 = vector.extract_strided_slice %14 {offsets = [4, 0], sizes = [1, 512], strides = [1, 1]} : vector<9x512xf32> to vector<1x512xf32>
    %cst_40 = arith.constant 5.000000e-01 : f32
    %95 = vector.broadcast %cst_40 : f32 to vector<1x512xf32>
    %96 = arith.cmpf ogt, %94, %95 : vector<1x512xf32>
    %cst_41 = arith.constant -1.000000e+30 : f32
    %97 = vector.shape_cast %96 : vector<1x512xi1> to vector<1x512xi1>
    %98 = vector.broadcast %97 : vector<1x512xi1> to vector<16x512xi1>
    %99 = vector.broadcast %cst_41 : f32 to vector<16x512xf32>
    %100 = arith.select %98, %13, %99 : vector<16x512xi1>, vector<16x512xf32>
    %101 = arith.maximumf %93, %100 : vector<16x512xf32>
    %c1_i32_42 = arith.constant 1 : i32
    %102 = arith.muli %5, %c1_i32_42 : i32
    %c512_i32_43 = arith.constant 512 : i32
    %c0_i32_44 = arith.constant 0 : i32
    %103 = arith.cmpi eq, %c512_i32_43, %c0_i32_44 : i32
    %c1_i32_45 = arith.constant 1 : i32
    %104 = arith.select %103, %c1_i32_45, %c512_i32_43 : i32
    %105 = arith.remsi %102, %104 : i32
    %c0_i32_46 = arith.constant 0 : i32
    %106 = arith.cmpi ne, %105, %c0_i32_46 : i32
    %c0_i32_47 = arith.constant 0 : i32
    %107 = arith.cmpi slt, %105, %c0_i32_47 : i32
    %c0_i32_48 = arith.constant 0 : i32
    %108 = arith.cmpi slt, %104, %c0_i32_48 : i32
    %109 = arith.xori %107, %108 : i1
    %110 = arith.andi %109, %106 : i1
    %111 = arith.addi %105, %104 : i32
    %112 = arith.select %110, %111, %105 : i32
    %113 = tpu.dynamic_rotate %13 by %112 dim 1 : vector<16x512xf32>, i32 -> vector<16x512xf32>
    %114 = vector.extract_strided_slice %14 {offsets = [5, 0], sizes = [1, 512], strides = [1, 1]} : vector<9x512xf32> to vector<1x512xf32>
    %cst_49 = arith.constant 5.000000e-01 : f32
    %115 = vector.broadcast %cst_49 : f32 to vector<1x512xf32>
    %116 = arith.cmpf ogt, %114, %115 : vector<1x512xf32>
    %cst_50 = arith.constant -1.000000e+30 : f32
    %117 = vector.shape_cast %116 : vector<1x512xi1> to vector<1x512xi1>
    %118 = vector.broadcast %117 : vector<1x512xi1> to vector<16x512xi1>
    %119 = vector.broadcast %cst_50 : f32 to vector<16x512xf32>
    %120 = arith.select %118, %113, %119 : vector<16x512xi1>, vector<16x512xf32>
    %121 = arith.maximumf %101, %120 : vector<16x512xf32>
    %c15_i32 = arith.constant 15 : i32
    %122 = arith.muli %5, %c15_i32 : i32
    %c512_i32_51 = arith.constant 512 : i32
    %c0_i32_52 = arith.constant 0 : i32
    %123 = arith.cmpi eq, %c512_i32_51, %c0_i32_52 : i32
    %c1_i32_53 = arith.constant 1 : i32
    %124 = arith.select %123, %c1_i32_53, %c512_i32_51 : i32
    %125 = arith.remsi %122, %124 : i32
    %c0_i32_54 = arith.constant 0 : i32
    %126 = arith.cmpi ne, %125, %c0_i32_54 : i32
    %c0_i32_55 = arith.constant 0 : i32
    %127 = arith.cmpi slt, %125, %c0_i32_55 : i32
    %c0_i32_56 = arith.constant 0 : i32
    %128 = arith.cmpi slt, %124, %c0_i32_56 : i32
    %129 = arith.xori %127, %128 : i1
    %130 = arith.andi %129, %126 : i1
    %131 = arith.addi %125, %124 : i32
    %132 = arith.select %130, %131, %125 : i32
    %133 = tpu.dynamic_rotate %13 by %132 dim 1 : vector<16x512xf32>, i32 -> vector<16x512xf32>
    %134 = vector.extract_strided_slice %14 {offsets = [6, 0], sizes = [1, 512], strides = [1, 1]} : vector<9x512xf32> to vector<1x512xf32>
    %cst_57 = arith.constant 5.000000e-01 : f32
    %135 = vector.broadcast %cst_57 : f32 to vector<1x512xf32>
    %136 = arith.cmpf ogt, %134, %135 : vector<1x512xf32>
    %cst_58 = arith.constant -1.000000e+30 : f32
    %137 = vector.shape_cast %136 : vector<1x512xi1> to vector<1x512xi1>
    %138 = vector.broadcast %137 : vector<1x512xi1> to vector<16x512xi1>
    %139 = vector.broadcast %cst_58 : f32 to vector<16x512xf32>
    %140 = arith.select %138, %133, %139 : vector<16x512xi1>, vector<16x512xf32>
    %141 = arith.maximumf %121, %140 : vector<16x512xf32>
    %c16_i32 = arith.constant 16 : i32
    %142 = arith.muli %5, %c16_i32 : i32
    %c512_i32_59 = arith.constant 512 : i32
    %c0_i32_60 = arith.constant 0 : i32
    %143 = arith.cmpi eq, %c512_i32_59, %c0_i32_60 : i32
    %c1_i32_61 = arith.constant 1 : i32
    %144 = arith.select %143, %c1_i32_61, %c512_i32_59 : i32
    %145 = arith.remsi %142, %144 : i32
    %c0_i32_62 = arith.constant 0 : i32
    %146 = arith.cmpi ne, %145, %c0_i32_62 : i32
    %c0_i32_63 = arith.constant 0 : i32
    %147 = arith.cmpi slt, %145, %c0_i32_63 : i32
    %c0_i32_64 = arith.constant 0 : i32
    %148 = arith.cmpi slt, %144, %c0_i32_64 : i32
    %149 = arith.xori %147, %148 : i1
    %150 = arith.andi %149, %146 : i1
    %151 = arith.addi %145, %144 : i32
    %152 = arith.select %150, %151, %145 : i32
    %153 = tpu.dynamic_rotate %13 by %152 dim 1 : vector<16x512xf32>, i32 -> vector<16x512xf32>
    %154 = vector.extract_strided_slice %14 {offsets = [7, 0], sizes = [1, 512], strides = [1, 1]} : vector<9x512xf32> to vector<1x512xf32>
    %cst_65 = arith.constant 5.000000e-01 : f32
    %155 = vector.broadcast %cst_65 : f32 to vector<1x512xf32>
    %156 = arith.cmpf ogt, %154, %155 : vector<1x512xf32>
    %cst_66 = arith.constant -1.000000e+30 : f32
    %157 = vector.shape_cast %156 : vector<1x512xi1> to vector<1x512xi1>
    %158 = vector.broadcast %157 : vector<1x512xi1> to vector<16x512xi1>
    %159 = vector.broadcast %cst_66 : f32 to vector<16x512xf32>
    %160 = arith.select %158, %153, %159 : vector<16x512xi1>, vector<16x512xf32>
    %161 = arith.maximumf %141, %160 : vector<16x512xf32>
    %c17_i32 = arith.constant 17 : i32
    %162 = arith.muli %5, %c17_i32 : i32
    %c512_i32_67 = arith.constant 512 : i32
    %c0_i32_68 = arith.constant 0 : i32
    %163 = arith.cmpi eq, %c512_i32_67, %c0_i32_68 : i32
    %c1_i32_69 = arith.constant 1 : i32
    %164 = arith.select %163, %c1_i32_69, %c512_i32_67 : i32
    %165 = arith.remsi %162, %164 : i32
    %c0_i32_70 = arith.constant 0 : i32
    %166 = arith.cmpi ne, %165, %c0_i32_70 : i32
    %c0_i32_71 = arith.constant 0 : i32
    %167 = arith.cmpi slt, %165, %c0_i32_71 : i32
    %c0_i32_72 = arith.constant 0 : i32
    %168 = arith.cmpi slt, %164, %c0_i32_72 : i32
    %169 = arith.xori %167, %168 : i1
    %170 = arith.andi %169, %166 : i1
    %171 = arith.addi %165, %164 : i32
    %172 = arith.select %170, %171, %165 : i32
    %173 = tpu.dynamic_rotate %13 by %172 dim 1 : vector<16x512xf32>, i32 -> vector<16x512xf32>
    %174 = vector.extract_strided_slice %14 {offsets = [8, 0], sizes = [1, 512], strides = [1, 1]} : vector<9x512xf32> to vector<1x512xf32>
    %cst_73 = arith.constant 5.000000e-01 : f32
    %175 = vector.broadcast %cst_73 : f32 to vector<1x512xf32>
    %176 = arith.cmpf ogt, %174, %175 : vector<1x512xf32>
    %cst_74 = arith.constant -1.000000e+30 : f32
    %177 = vector.shape_cast %176 : vector<1x512xi1> to vector<1x512xi1>
    %178 = vector.broadcast %177 : vector<1x512xi1> to vector<16x512xi1>
    %179 = vector.broadcast %cst_74 : f32 to vector<16x512xf32>
    %180 = arith.select %178, %173, %179 : vector<16x512xi1>, vector<16x512xf32>
    %181 = arith.maximumf %161, %180 : vector<16x512xf32>
    %182 = arith.truncf %181 : vector<16x512xf32> to vector<16x512xbf16>
    %c0_75 = arith.constant 0 : index
    %c0_76 = arith.constant 0 : index
    %183 = vector.load %arg4[%c0_75, %c0_76] : memref<512x128xbf16, #tpu.memory_space<vmem>>, vector<512x128xbf16>
    %cst_77 = arith.constant dense<0.000000e+00> : vector<16x128xf32>
    %184 = tpu.matmul %182, %183, %cst_77 {dimension_numbers = #tpu.dot_dimension_numbers<[1], [0], [0], [1], [0, 0, 1, 1], [], []>} : vector<16x512xbf16>, vector<512x128xbf16>, vector<16x128xf32> -> vector<16x128xf32>
    %185 = arith.truncf %184 : vector<16x128xf32> to vector<16x128xbf16>
    %c0_78 = arith.constant 0 : index
    %c0_79 = arith.constant 0 : index
    %186 = vector.load %arg5[%c0_78, %c0_79] : memref<8x16xbf16, #tpu.memory_space<vmem>>, vector<8x16xbf16>
    %cst_80 = arith.constant dense<0.000000e+00> : vector<8x128xf32>
    %187 = tpu.matmul %186, %185, %cst_80 {dimension_numbers = #tpu.dot_dimension_numbers<[1], [0], [0], [1], [0, 0, 1, 1], [], []>} : vector<8x16xbf16>, vector<16x128xbf16>, vector<8x128xf32> -> vector<8x128xf32>
    %c0_81 = arith.constant 0 : index
    %c0_82 = arith.constant 0 : index
    %188 = vector.load %arg6[%c0_81, %c0_82] : memref<8x1xf32, #tpu.memory_space<vmem>>, vector<8x1xf32>
    %189 = vector.broadcast %188 : vector<8x1xf32> to vector<8x128xf32>
    %190 = arith.addf %187, %189 : vector<8x128xf32>
    %cst_83 = arith.constant 0.000000e+00 : f32
    %191 = vector.broadcast %cst_83 : f32 to vector<8x128xf32>
    %192 = arith.maximumf %190, %191 : vector<8x128xf32>
    %c0_84 = arith.constant 0 : index
    %c0_85 = arith.constant 0 : index
    %c0_86 = arith.constant 0 : index
    %193 = vector.load %arg7[%c0_84, %c0_85, %c0_86] : memref<9x8x8xbf16, #tpu.memory_space<vmem>>, vector<9x8x8xbf16>
    %c0_87 = arith.constant 0 : index
    %c0_88 = arith.constant 0 : index
    %194 = vector.load %arg9[%c0_87, %c0_88] : memref<9x128xf32, #tpu.memory_space<vmem>>, vector<9x128xf32>
    %c-9_i32 = arith.constant -9 : i32
    %195 = arith.muli %5, %c-9_i32 : i32
    %c128_i32 = arith.constant 128 : i32
    %c0_i32_89 = arith.constant 0 : i32
    %196 = arith.cmpi eq, %c128_i32, %c0_i32_89 : i32
    %c1_i32_90 = arith.constant 1 : i32
    %197 = arith.select %196, %c1_i32_90, %c128_i32 : i32
    %198 = arith.remsi %195, %197 : i32
    %c0_i32_91 = arith.constant 0 : i32
    %199 = arith.cmpi ne, %198, %c0_i32_91 : i32
    %c0_i32_92 = arith.constant 0 : i32
    %200 = arith.cmpi slt, %198, %c0_i32_92 : i32
    %c0_i32_93 = arith.constant 0 : i32
    %201 = arith.cmpi slt, %197, %c0_i32_93 : i32
    %202 = arith.xori %200, %201 : i1
    %203 = arith.andi %202, %199 : i1
    %204 = arith.addi %198, %197 : i32
    %205 = arith.select %203, %204, %198 : i32
    %206 = tpu.dynamic_rotate %192 by %205 dim 1 : vector<8x128xf32>, i32 -> vector<8x128xf32>
    %207 = vector.extract_strided_slice %194 {offsets = [0, 0], sizes = [1, 128], strides = [1, 1]} : vector<9x128xf32> to vector<1x128xf32>
    %208 = vector.broadcast %207 : vector<1x128xf32> to vector<8x128xf32>
    %209 = arith.mulf %206, %208 : vector<8x128xf32>
    %210 = vector.extract_strided_slice %193 {offsets = [0, 0, 0], sizes = [1, 8, 8], strides = [1, 1, 1]} : vector<9x8x8xbf16> to vector<1x8x8xbf16>
    %211 = vector.shape_cast %210 : vector<1x8x8xbf16> to vector<8x8xbf16>
    %212 = arith.truncf %209 : vector<8x128xf32> to vector<8x128xbf16>
    %cst_94 = arith.constant dense<0.000000e+00> : vector<8x128xf32>
    %213 = tpu.matmul %211, %212, %cst_94 {dimension_numbers = #tpu.dot_dimension_numbers<[1], [0], [0], [1], [0, 0, 1, 1], [], []>} : vector<8x8xbf16>, vector<8x128xbf16>, vector<8x128xf32> -> vector<8x128xf32>
    %c-8_i32 = arith.constant -8 : i32
    %214 = arith.muli %5, %c-8_i32 : i32
    %c128_i32_95 = arith.constant 128 : i32
    %c0_i32_96 = arith.constant 0 : i32
    %215 = arith.cmpi eq, %c128_i32_95, %c0_i32_96 : i32
    %c1_i32_97 = arith.constant 1 : i32
    %216 = arith.select %215, %c1_i32_97, %c128_i32_95 : i32
    %217 = arith.remsi %214, %216 : i32
    %c0_i32_98 = arith.constant 0 : i32
    %218 = arith.cmpi ne, %217, %c0_i32_98 : i32
    %c0_i32_99 = arith.constant 0 : i32
    %219 = arith.cmpi slt, %217, %c0_i32_99 : i32
    %c0_i32_100 = arith.constant 0 : i32
    %220 = arith.cmpi slt, %216, %c0_i32_100 : i32
    %221 = arith.xori %219, %220 : i1
    %222 = arith.andi %221, %218 : i1
    %223 = arith.addi %217, %216 : i32
    %224 = arith.select %222, %223, %217 : i32
    %225 = tpu.dynamic_rotate %192 by %224 dim 1 : vector<8x128xf32>, i32 -> vector<8x128xf32>
    %226 = vector.extract_strided_slice %194 {offsets = [1, 0], sizes = [1, 128], strides = [1, 1]} : vector<9x128xf32> to vector<1x128xf32>
    %227 = vector.broadcast %226 : vector<1x128xf32> to vector<8x128xf32>
    %228 = arith.mulf %225, %227 : vector<8x128xf32>
    %229 = vector.extract_strided_slice %193 {offsets = [1, 0, 0], sizes = [1, 8, 8], strides = [1, 1, 1]} : vector<9x8x8xbf16> to vector<1x8x8xbf16>
    %230 = vector.shape_cast %229 : vector<1x8x8xbf16> to vector<8x8xbf16>
    %231 = arith.truncf %228 : vector<8x128xf32> to vector<8x128xbf16>
    %cst_101 = arith.constant dense<0.000000e+00> : vector<8x128xf32>
    %232 = tpu.matmul %230, %231, %cst_101 {dimension_numbers = #tpu.dot_dimension_numbers<[1], [0], [0], [1], [0, 0, 1, 1], [], []>} : vector<8x8xbf16>, vector<8x128xbf16>, vector<8x128xf32> -> vector<8x128xf32>
    %233 = arith.addf %213, %232 : vector<8x128xf32>
    %c-7_i32 = arith.constant -7 : i32
    %234 = arith.muli %5, %c-7_i32 : i32
    %c128_i32_102 = arith.constant 128 : i32
    %c0_i32_103 = arith.constant 0 : i32
    %235 = arith.cmpi eq, %c128_i32_102, %c0_i32_103 : i32
    %c1_i32_104 = arith.constant 1 : i32
    %236 = arith.select %235, %c1_i32_104, %c128_i32_102 : i32
    %237 = arith.remsi %234, %236 : i32
    %c0_i32_105 = arith.constant 0 : i32
    %238 = arith.cmpi ne, %237, %c0_i32_105 : i32
    %c0_i32_106 = arith.constant 0 : i32
    %239 = arith.cmpi slt, %237, %c0_i32_106 : i32
    %c0_i32_107 = arith.constant 0 : i32
    %240 = arith.cmpi slt, %236, %c0_i32_107 : i32
    %241 = arith.xori %239, %240 : i1
    %242 = arith.andi %241, %238 : i1
    %243 = arith.addi %237, %236 : i32
    %244 = arith.select %242, %243, %237 : i32
    %245 = tpu.dynamic_rotate %192 by %244 dim 1 : vector<8x128xf32>, i32 -> vector<8x128xf32>
    %246 = vector.extract_strided_slice %194 {offsets = [2, 0], sizes = [1, 128], strides = [1, 1]} : vector<9x128xf32> to vector<1x128xf32>
    %247 = vector.broadcast %246 : vector<1x128xf32> to vector<8x128xf32>
    %248 = arith.mulf %245, %247 : vector<8x128xf32>
    %249 = vector.extract_strided_slice %193 {offsets = [2, 0, 0], sizes = [1, 8, 8], strides = [1, 1, 1]} : vector<9x8x8xbf16> to vector<1x8x8xbf16>
    %250 = vector.shape_cast %249 : vector<1x8x8xbf16> to vector<8x8xbf16>
    %251 = arith.truncf %248 : vector<8x128xf32> to vector<8x128xbf16>
    %cst_108 = arith.constant dense<0.000000e+00> : vector<8x128xf32>
    %252 = tpu.matmul %250, %251, %cst_108 {dimension_numbers = #tpu.dot_dimension_numbers<[1], [0], [0], [1], [0, 0, 1, 1], [], []>} : vector<8x8xbf16>, vector<8x128xbf16>, vector<8x128xf32> -> vector<8x128xf32>
    %253 = arith.addf %233, %252 : vector<8x128xf32>
    %c-1_i32_109 = arith.constant -1 : i32
    %254 = arith.muli %5, %c-1_i32_109 : i32
    %c128_i32_110 = arith.constant 128 : i32
    %c0_i32_111 = arith.constant 0 : i32
    %255 = arith.cmpi eq, %c128_i32_110, %c0_i32_111 : i32
    %c1_i32_112 = arith.constant 1 : i32
    %256 = arith.select %255, %c1_i32_112, %c128_i32_110 : i32
    %257 = arith.remsi %254, %256 : i32
    %c0_i32_113 = arith.constant 0 : i32
    %258 = arith.cmpi ne, %257, %c0_i32_113 : i32
    %c0_i32_114 = arith.constant 0 : i32
    %259 = arith.cmpi slt, %257, %c0_i32_114 : i32
    %c0_i32_115 = arith.constant 0 : i32
    %260 = arith.cmpi slt, %256, %c0_i32_115 : i32
    %261 = arith.xori %259, %260 : i1
    %262 = arith.andi %261, %258 : i1
    %263 = arith.addi %257, %256 : i32
    %264 = arith.select %262, %263, %257 : i32
    %265 = tpu.dynamic_rotate %192 by %264 dim 1 : vector<8x128xf32>, i32 -> vector<8x128xf32>
    %266 = vector.extract_strided_slice %194 {offsets = [3, 0], sizes = [1, 128], strides = [1, 1]} : vector<9x128xf32> to vector<1x128xf32>
    %267 = vector.broadcast %266 : vector<1x128xf32> to vector<8x128xf32>
    %268 = arith.mulf %265, %267 : vector<8x128xf32>
    %269 = vector.extract_strided_slice %193 {offsets = [3, 0, 0], sizes = [1, 8, 8], strides = [1, 1, 1]} : vector<9x8x8xbf16> to vector<1x8x8xbf16>
    %270 = vector.shape_cast %269 : vector<1x8x8xbf16> to vector<8x8xbf16>
    %271 = arith.truncf %268 : vector<8x128xf32> to vector<8x128xbf16>
    %cst_116 = arith.constant dense<0.000000e+00> : vector<8x128xf32>
    %272 = tpu.matmul %270, %271, %cst_116 {dimension_numbers = #tpu.dot_dimension_numbers<[1], [0], [0], [1], [0, 0, 1, 1], [], []>} : vector<8x8xbf16>, vector<8x128xbf16>, vector<8x128xf32> -> vector<8x128xf32>
    %273 = arith.addf %253, %272 : vector<8x128xf32>
    %274 = vector.extract_strided_slice %194 {offsets = [4, 0], sizes = [1, 128], strides = [1, 1]} : vector<9x128xf32> to vector<1x128xf32>
    %275 = vector.broadcast %274 : vector<1x128xf32> to vector<8x128xf32>
    %276 = arith.mulf %192, %275 : vector<8x128xf32>
    %277 = vector.extract_strided_slice %193 {offsets = [4, 0, 0], sizes = [1, 8, 8], strides = [1, 1, 1]} : vector<9x8x8xbf16> to vector<1x8x8xbf16>
    %278 = vector.shape_cast %277 : vector<1x8x8xbf16> to vector<8x8xbf16>
    %279 = arith.truncf %276 : vector<8x128xf32> to vector<8x128xbf16>
    %cst_117 = arith.constant dense<0.000000e+00> : vector<8x128xf32>
    %280 = tpu.matmul %278, %279, %cst_117 {dimension_numbers = #tpu.dot_dimension_numbers<[1], [0], [0], [1], [0, 0, 1, 1], [], []>} : vector<8x8xbf16>, vector<8x128xbf16>, vector<8x128xf32> -> vector<8x128xf32>
    %281 = arith.addf %273, %280 : vector<8x128xf32>
    %c1_i32_118 = arith.constant 1 : i32
    %282 = arith.muli %5, %c1_i32_118 : i32
    %c128_i32_119 = arith.constant 128 : i32
    %c0_i32_120 = arith.constant 0 : i32
    %283 = arith.cmpi eq, %c128_i32_119, %c0_i32_120 : i32
    %c1_i32_121 = arith.constant 1 : i32
    %284 = arith.select %283, %c1_i32_121, %c128_i32_119 : i32
    %285 = arith.remsi %282, %284 : i32
    %c0_i32_122 = arith.constant 0 : i32
    %286 = arith.cmpi ne, %285, %c0_i32_122 : i32
    %c0_i32_123 = arith.constant 0 : i32
    %287 = arith.cmpi slt, %285, %c0_i32_123 : i32
    %c0_i32_124 = arith.constant 0 : i32
    %288 = arith.cmpi slt, %284, %c0_i32_124 : i32
    %289 = arith.xori %287, %288 : i1
    %290 = arith.andi %289, %286 : i1
    %291 = arith.addi %285, %284 : i32
    %292 = arith.select %290, %291, %285 : i32
    %293 = tpu.dynamic_rotate %192 by %292 dim 1 : vector<8x128xf32>, i32 -> vector<8x128xf32>
    %294 = vector.extract_strided_slice %194 {offsets = [5, 0], sizes = [1, 128], strides = [1, 1]} : vector<9x128xf32> to vector<1x128xf32>
    %295 = vector.broadcast %294 : vector<1x128xf32> to vector<8x128xf32>
    %296 = arith.mulf %293, %295 : vector<8x128xf32>
    %297 = vector.extract_strided_slice %193 {offsets = [5, 0, 0], sizes = [1, 8, 8], strides = [1, 1, 1]} : vector<9x8x8xbf16> to vector<1x8x8xbf16>
    %298 = vector.shape_cast %297 : vector<1x8x8xbf16> to vector<8x8xbf16>
    %299 = arith.truncf %296 : vector<8x128xf32> to vector<8x128xbf16>
    %cst_125 = arith.constant dense<0.000000e+00> : vector<8x128xf32>
    %300 = tpu.matmul %298, %299, %cst_125 {dimension_numbers = #tpu.dot_dimension_numbers<[1], [0], [0], [1], [0, 0, 1, 1], [], []>} : vector<8x8xbf16>, vector<8x128xbf16>, vector<8x128xf32> -> vector<8x128xf32>
    %301 = arith.addf %281, %300 : vector<8x128xf32>
    %c7_i32 = arith.constant 7 : i32
    %302 = arith.muli %5, %c7_i32 : i32
    %c128_i32_126 = arith.constant 128 : i32
    %c0_i32_127 = arith.constant 0 : i32
    %303 = arith.cmpi eq, %c128_i32_126, %c0_i32_127 : i32
    %c1_i32_128 = arith.constant 1 : i32
    %304 = arith.select %303, %c1_i32_128, %c128_i32_126 : i32
    %305 = arith.remsi %302, %304 : i32
    %c0_i32_129 = arith.constant 0 : i32
    %306 = arith.cmpi ne, %305, %c0_i32_129 : i32
    %c0_i32_130 = arith.constant 0 : i32
    %307 = arith.cmpi slt, %305, %c0_i32_130 : i32
    %c0_i32_131 = arith.constant 0 : i32
    %308 = arith.cmpi slt, %304, %c0_i32_131 : i32
    %309 = arith.xori %307, %308 : i1
    %310 = arith.andi %309, %306 : i1
    %311 = arith.addi %305, %304 : i32
    %312 = arith.select %310, %311, %305 : i32
    %313 = tpu.dynamic_rotate %192 by %312 dim 1 : vector<8x128xf32>, i32 -> vector<8x128xf32>
    %314 = vector.extract_strided_slice %194 {offsets = [6, 0], sizes = [1, 128], strides = [1, 1]} : vector<9x128xf32> to vector<1x128xf32>
    %315 = vector.broadcast %314 : vector<1x128xf32> to vector<8x128xf32>
    %316 = arith.mulf %313, %315 : vector<8x128xf32>
    %317 = vector.extract_strided_slice %193 {offsets = [6, 0, 0], sizes = [1, 8, 8], strides = [1, 1, 1]} : vector<9x8x8xbf16> to vector<1x8x8xbf16>
    %318 = vector.shape_cast %317 : vector<1x8x8xbf16> to vector<8x8xbf16>
    %319 = arith.truncf %316 : vector<8x128xf32> to vector<8x128xbf16>
    %cst_132 = arith.constant dense<0.000000e+00> : vector<8x128xf32>
    %320 = tpu.matmul %318, %319, %cst_132 {dimension_numbers = #tpu.dot_dimension_numbers<[1], [0], [0], [1], [0, 0, 1, 1], [], []>} : vector<8x8xbf16>, vector<8x128xbf16>, vector<8x128xf32> -> vector<8x128xf32>
    %321 = arith.addf %301, %320 : vector<8x128xf32>
    %c8_i32 = arith.constant 8 : i32
    %322 = arith.muli %5, %c8_i32 : i32
    %c128_i32_133 = arith.constant 128 : i32
    %c0_i32_134 = arith.constant 0 : i32
    %323 = arith.cmpi eq, %c128_i32_133, %c0_i32_134 : i32
    %c1_i32_135 = arith.constant 1 : i32
    %324 = arith.select %323, %c1_i32_135, %c128_i32_133 : i32
    %325 = arith.remsi %322, %324 : i32
    %c0_i32_136 = arith.constant 0 : i32
    %326 = arith.cmpi ne, %325, %c0_i32_136 : i32
    %c0_i32_137 = arith.constant 0 : i32
    %327 = arith.cmpi slt, %325, %c0_i32_137 : i32
    %c0_i32_138 = arith.constant 0 : i32
    %328 = arith.cmpi slt, %324, %c0_i32_138 : i32
    %329 = arith.xori %327, %328 : i1
    %330 = arith.andi %329, %326 : i1
    %331 = arith.addi %325, %324 : i32
    %332 = arith.select %330, %331, %325 : i32
    %333 = tpu.dynamic_rotate %192 by %332 dim 1 : vector<8x128xf32>, i32 -> vector<8x128xf32>
    %334 = vector.extract_strided_slice %194 {offsets = [7, 0], sizes = [1, 128], strides = [1, 1]} : vector<9x128xf32> to vector<1x128xf32>
    %335 = vector.broadcast %334 : vector<1x128xf32> to vector<8x128xf32>
    %336 = arith.mulf %333, %335 : vector<8x128xf32>
    %337 = vector.extract_strided_slice %193 {offsets = [7, 0, 0], sizes = [1, 8, 8], strides = [1, 1, 1]} : vector<9x8x8xbf16> to vector<1x8x8xbf16>
    %338 = vector.shape_cast %337 : vector<1x8x8xbf16> to vector<8x8xbf16>
    %339 = arith.truncf %336 : vector<8x128xf32> to vector<8x128xbf16>
    %cst_139 = arith.constant dense<0.000000e+00> : vector<8x128xf32>
    %340 = tpu.matmul %338, %339, %cst_139 {dimension_numbers = #tpu.dot_dimension_numbers<[1], [0], [0], [1], [0, 0, 1, 1], [], []>} : vector<8x8xbf16>, vector<8x128xbf16>, vector<8x128xf32> -> vector<8x128xf32>
    %341 = arith.addf %321, %340 : vector<8x128xf32>
    %c9_i32 = arith.constant 9 : i32
    %342 = arith.muli %5, %c9_i32 : i32
    %c128_i32_140 = arith.constant 128 : i32
    %c0_i32_141 = arith.constant 0 : i32
    %343 = arith.cmpi eq, %c128_i32_140, %c0_i32_141 : i32
    %c1_i32_142 = arith.constant 1 : i32
    %344 = arith.select %343, %c1_i32_142, %c128_i32_140 : i32
    %345 = arith.remsi %342, %344 : i32
    %c0_i32_143 = arith.constant 0 : i32
    %346 = arith.cmpi ne, %345, %c0_i32_143 : i32
    %c0_i32_144 = arith.constant 0 : i32
    %347 = arith.cmpi slt, %345, %c0_i32_144 : i32
    %c0_i32_145 = arith.constant 0 : i32
    %348 = arith.cmpi slt, %344, %c0_i32_145 : i32
    %349 = arith.xori %347, %348 : i1
    %350 = arith.andi %349, %346 : i1
    %351 = arith.addi %345, %344 : i32
    %352 = arith.select %350, %351, %345 : i32
    %353 = tpu.dynamic_rotate %192 by %352 dim 1 : vector<8x128xf32>, i32 -> vector<8x128xf32>
    %354 = vector.extract_strided_slice %194 {offsets = [8, 0], sizes = [1, 128], strides = [1, 1]} : vector<9x128xf32> to vector<1x128xf32>
    %355 = vector.broadcast %354 : vector<1x128xf32> to vector<8x128xf32>
    %356 = arith.mulf %353, %355 : vector<8x128xf32>
    %357 = vector.extract_strided_slice %193 {offsets = [8, 0, 0], sizes = [1, 8, 8], strides = [1, 1, 1]} : vector<9x8x8xbf16> to vector<1x8x8xbf16>
    %358 = vector.shape_cast %357 : vector<1x8x8xbf16> to vector<8x8xbf16>
    %359 = arith.truncf %356 : vector<8x128xf32> to vector<8x128xbf16>
    %cst_146 = arith.constant dense<0.000000e+00> : vector<8x128xf32>
    %360 = tpu.matmul %358, %359, %cst_146 {dimension_numbers = #tpu.dot_dimension_numbers<[1], [0], [0], [1], [0, 0, 1, 1], [], []>} : vector<8x8xbf16>, vector<8x128xbf16>, vector<8x128xf32> -> vector<8x128xf32>
    %361 = arith.addf %341, %360 : vector<8x128xf32>
    %c0_147 = arith.constant 0 : index
    %c0_148 = arith.constant 0 : index
    %362 = vector.load %arg8[%c0_147, %c0_148] : memref<8x1xf32, #tpu.memory_space<vmem>>, vector<8x1xf32>
    %363 = vector.broadcast %362 : vector<8x1xf32> to vector<8x128xf32>
    %364 = arith.addf %361, %363 : vector<8x128xf32>
    %cst_149 = arith.constant 0.000000e+00 : f32
    %365 = vector.broadcast %cst_149 : f32 to vector<8x128xf32>
    %366 = arith.maximumf %364, %365 : vector<8x128xf32>
    %c0_150 = arith.constant 0 : index
    %c0_151 = arith.constant 0 : index
    %367 = vector.load %arg10[%c0_150, %c0_151] : memref<32x8xbf16, #tpu.memory_space<vmem>>, vector<32x8xbf16>
    %368 = arith.truncf %366 : vector<8x128xf32> to vector<8x128xbf16>
    %cst_152 = arith.constant dense<0.000000e+00> : vector<32x128xf32>
    %369 = tpu.matmul %367, %368, %cst_152 {dimension_numbers = #tpu.dot_dimension_numbers<[1], [0], [0], [1], [0, 0, 1, 1], [], []>} : vector<32x8xbf16>, vector<8x128xbf16>, vector<32x128xf32> -> vector<32x128xf32>
    %c0_153 = arith.constant 0 : index
    %c0_154 = arith.constant 0 : index
    %370 = vector.load %arg11[%c0_153, %c0_154] : memref<32x1xf32, #tpu.memory_space<vmem>>, vector<32x1xf32>
    %371 = vector.broadcast %370 : vector<32x1xf32> to vector<32x128xf32>
    %372 = arith.addf %369, %371 : vector<32x128xf32>
    %c0_155 = arith.constant 0 : index
    %c0_156 = arith.constant 0 : index
    %373 = vector.load %arg12[%c0_155, %c0_156] : memref<32x16xbf16, #tpu.memory_space<vmem>>, vector<32x16xbf16>
    %cst_157 = arith.constant dense<0.000000e+00> : vector<32x128xf32>
    %374 = tpu.matmul %373, %185, %cst_157 {dimension_numbers = #tpu.dot_dimension_numbers<[1], [0], [0], [1], [0, 0, 1, 1], [], []>} : vector<32x16xbf16>, vector<16x128xbf16>, vector<32x128xf32> -> vector<32x128xf32>
    %c0_158 = arith.constant 0 : index
    %c0_159 = arith.constant 0 : index
    %375 = vector.load %arg13[%c0_158, %c0_159] : memref<32x1xf32, #tpu.memory_space<vmem>>, vector<32x1xf32>
    %376 = vector.broadcast %375 : vector<32x1xf32> to vector<32x128xf32>
    %377 = arith.addf %374, %376 : vector<32x128xf32>
    %378 = arith.addf %372, %377 : vector<32x128xf32>
    %cst_160 = arith.constant 0.000000e+00 : f32
    %379 = vector.broadcast %cst_160 : f32 to vector<32x128xf32>
    %380 = arith.maximumf %378, %379 : vector<32x128xf32>
    %381 = arith.truncf %380 : vector<32x128xf32> to vector<32x128xbf16>
    %c0_161 = arith.constant 0 : index
    %c0_162 = arith.constant 0 : index
    %382 = vector.load %arg14[%c0_161, %c0_162] : memref<128x2xbf16, #tpu.memory_space<vmem>>, vector<128x2xbf16>
    %cst_163 = arith.constant dense<0.000000e+00> : vector<32x2xf32>
    %383 = tpu.matmul %381, %382, %cst_163 {dimension_numbers = #tpu.dot_dimension_numbers<[1], [0], [0], [1], [0, 0, 1, 1], [], []>} : vector<32x128xbf16>, vector<128x2xbf16>, vector<32x2xf32> -> vector<32x2xf32>
    %c0_164 = arith.constant 0 : index
    %c0_165 = arith.constant 0 : index
    %384 = vector.load %arg15[%c0_164, %c0_165] : memref<10x32xbf16, #tpu.memory_space<vmem>>, vector<10x32xbf16>
    %385 = arith.truncf %383 : vector<32x2xf32> to vector<32x2xbf16>
    %cst_166 = arith.constant dense<0.000000e+00> : vector<10x2xf32>
    %386 = tpu.matmul %384, %385, %cst_166 {dimension_numbers = #tpu.dot_dimension_numbers<[1], [0], [0], [1], [0, 0, 1, 1], [], []>} : vector<10x32xbf16>, vector<32x2xbf16>, vector<10x2xf32> -> vector<10x2xf32>
    %c0_167 = arith.constant 0 : index
    %c0_168 = arith.constant 0 : index
    %387 = vector.load %arg16[%c0_167, %c0_168] : memref<10x1xf32, #tpu.memory_space<vmem>>, vector<10x1xf32>
    %388 = vector.broadcast %387 : vector<10x1xf32> to vector<10x2xf32>
    %389 = arith.addf %386, %388 : vector<10x2xf32>
    %c0_169 = arith.constant 0 : index
    %c0_170 = arith.constant 0 : index
    %390 = vector.load %arg17[%c0_169, %c0_170] : memref<10x2xf32, #tpu.memory_space<vmem>>, vector<10x2xf32>
    tpu.vector_store %arg17[%c0_169, %c0_170], %389 {strides = array<i32>} : memref<10x2xf32, #tpu.memory_space<vmem>>, vector<10x2xf32>,
    return
  }
}

</mosaic_0001>

<llo_original>
// kernel: forward.1
$region0: #{forward.1}
  #allocation0 [shape = 'u32[]', space=smem, size = 0x4, offset = 0x4, fixed_abs, tag = 'smem constant byte address 0x4 - core index']
  #allocation1 [shape = 'u32[144,128]{1,0:T(1,128)}', space=vmem, size = 0x12000, scoped, tag = 'internal scratch']
  %s0 = inlined_call_operand.vmem [shape: bf16[256,512], index: 0, kind: input, shape index: {}]
  %s1 = inlined_call_operand.vmem [shape: bf16[16,256], index: 1, kind: input, shape index: {}]
  %s2 = inlined_call_operand.vmem [shape: f32[16,1], index: 2, kind: input, shape index: {}]
  %s3 = inlined_call_operand.vmem [shape: f32[9,512], index: 3, kind: input, shape index: {}]
  %s4 = inlined_call_operand.vmem [shape: bf16[512,128], index: 4, kind: input, shape index: {}]
  %s5 = inlined_call_operand.vmem [shape: bf16[8,16], index: 5, kind: input, shape index: {}]
  %s6 = inlined_call_operand.vmem [shape: f32[8,1], index: 6, kind: input, shape index: {}]
  %s7 = inlined_call_operand.vmem [shape: bf16[9,8,8], index: 7, kind: input, shape index: {}]
  %s8 = inlined_call_operand.vmem [shape: f32[8,1], index: 8, kind: input, shape index: {}]
  %s9 = inlined_call_operand.vmem [shape: f32[9,128], index: 9, kind: input, shape index: {}]
  %s10 = inlined_call_operand.vmem [shape: bf16[32,8], index: 10, kind: input, shape index: {}]
  %s11 = inlined_call_operand.vmem [shape: f32[32,1], index: 11, kind: input, shape index: {}]
  %s12 = inlined_call_operand.vmem [shape: bf16[32,16], index: 12, kind: input, shape index: {}]
  %s13 = inlined_call_operand.vmem [shape: f32[32,1], index: 13, kind: input, shape index: {}]
  %s14 = inlined_call_operand.vmem [shape: bf16[128,2], index: 14, kind: input, shape index: {}]
  %s15 = inlined_call_operand.vmem [shape: bf16[10,32], index: 15, kind: input, shape index: {}]
  %s16 = inlined_call_operand.vmem [shape: f32[10,1], index: 16, kind: input, shape index: {}]
  %s17 = inlined_call_operand.vmem [shape: f32[10,2], index: 17, kind: output, shape index: {}]
  %s18 = sld [smem:[#allocation0]]
  $region78: #{forward.1} parent=0
    _
  %s20 = ssub.s32 1, %s18
  %s21 = scalar_select 0, %s20, %s18
  // Predicated region
  $region2: #{forward.1} parent=0 // pred_check
    _
  $region3: #{forward.1} parent=0 // pred_check_branch
    %23 = sbr.rel (0) target = $region5
  $region4: #{forward.1} parent=0 // pred_region
    _
  $region5: #{forward.1} parent=0 // pred_fallthru
    _
  // Predicated region
  $region6: #{forward.1} parent=0 // pred_check
    _
  $region7: #{forward.1} parent=0 // pred_check_branch
    %25 = sbr.rel (0) target = $region9
  $region8: #{forward.1} parent=0 // pred_region
    _
  $region9: #{forward.1} parent=0 // pred_fallthru
    _
  // Predicated region
  $region10: #{forward.1} parent=0 // pred_check
    _
  $region11: #{forward.1} parent=0 // pred_check_branch
    %27 = sbr.rel (0) target = $region13
  $region12: #{forward.1} parent=0 // pred_region
    _
  $region13: #{forward.1} parent=0 // pred_fallthru
    _
  // Predicated region
  $region14: #{forward.1} parent=0 // pred_check
    _
  $region15: #{forward.1} parent=0 // pred_check_branch
    %29 = sbr.rel (0) target = $region17
  $region16: #{forward.1} parent=0 // pred_region
    _
  $region17: #{forward.1} parent=0 // pred_fallthru
    _
  // Predicated region
  $region18: #{forward.1} parent=0 // pred_check
    _
  $region19: #{forward.1} parent=0 // pred_check_branch
    %31 = sbr.rel (0) target = $region21
  $region20: #{forward.1} parent=0 // pred_region
    _
  $region21: #{forward.1} parent=0 // pred_fallthru
    _
  // Predicated region
  $region22: #{forward.1} parent=0 // pred_check
    _
  $region23: #{forward.1} parent=0 // pred_check_branch
    %33 = sbr.rel (0) target = $region25
  $region24: #{forward.1} parent=0 // pred_region
    _
  $region25: #{forward.1} parent=0 // pred_fallthru
    _
  // Predicated region
  $region26: #{forward.1} parent=0 // pred_check
    _
  $region27: #{forward.1} parent=0 // pred_check_branch
    %35 = sbr.rel (0) target = $region29
  $region28: #{forward.1} parent=0 // pred_region
    _
  $region29: #{forward.1} parent=0 // pred_fallthru
    _
  // Predicated region
  $region30: #{forward.1} parent=0 // pred_check
    _
  $region31: #{forward.1} parent=0 // pred_check_branch
    %37 = sbr.rel (0) target = $region33
  $region32: #{forward.1} parent=0 // pred_region
    _
  $region33: #{forward.1} parent=0 // pred_fallthru
    _
  // Predicated region
  $region34: #{forward.1} parent=0 // pred_check
    _
  $region35: #{forward.1} parent=0 // pred_check_branch
    %39 = sbr.rel (0) target = $region37
  $region36: #{forward.1} parent=0 // pred_region
    _
  $region37: #{forward.1} parent=0 // pred_fallthru
    _
  // Predicated region
  $region38: #{forward.1} parent=0 // pred_check
    _
  $region39: #{forward.1} parent=0 // pred_check_branch
    %41 = sbr.rel (0) target = $region41
  $region40: #{forward.1} parent=0 // pred_region
    _
  $region41: #{forward.1} parent=0 // pred_fallthru
    _
  // Predicated region
  $region42: #{forward.1} parent=0 // pred_check
    _
  $region43: #{forward.1} parent=0 // pred_check_branch
    %43 = sbr.rel (0) target = $region45
  $region44: #{forward.1} parent=0 // pred_region
    _
  $region45: #{forward.1} parent=0 // pred_fallthru
    _
  // Predicated region
  $region46: #{forward.1} parent=0 // pred_check
    _
  $region47: #{forward.1} parent=0 // pred_check_branch
    %45 = sbr.rel (0) target = $region49
  $region48: #{forward.1} parent=0 // pred_region
    _
  $region49: #{forward.1} parent=0 // pred_fallthru
    _
  // Predicated region
  $region50: #{forward.1} parent=0 // pred_check
    _
  $region51: #{forward.1} parent=0 // pred_check_branch
    %47 = sbr.rel (0) target = $region53
  $region52: #{forward.1} parent=0 // pred_region
    _
  $region53: #{forward.1} parent=0 // pred_fallthru
    _
  // Predicated region
  $region54: #{forward.1} parent=0 // pred_check
    _
  $region55: #{forward.1} parent=0 // pred_check_branch
    %49 = sbr.rel (0) target = $region57
  $region56: #{forward.1} parent=0 // pred_region
    _
  $region57: #{forward.1} parent=0 // pred_fallthru
    _
  // Predicated region
  $region58: #{forward.1} parent=0 // pred_check
    _
  $region59: #{forward.1} parent=0 // pred_check_branch
    %51 = sbr.rel (0) target = $region61
  $region60: #{forward.1} parent=0 // pred_region
    _
  $region61: #{forward.1} parent=0 // pred_fallthru
    _
  // Predicated region
  $region62: #{forward.1} parent=0 // pred_check
    _
  $region63: #{forward.1} parent=0 // pred_check_branch
    %53 = sbr.rel (0) target = $region65
  $region64: #{forward.1} parent=0 // pred_region
    _
  $region65: #{forward.1} parent=0 // pred_fallthru
    _
  // Predicated region
  $region66: #{forward.1} parent=0 // pred_check
    _
  $region67: #{forward.1} parent=0 // pred_check_branch
    %55 = sbr.rel (0) target = $region69
  $region68: #{forward.1} parent=0 // pred_region
    _
  $region69: #{forward.1} parent=0 // pred_fallthru
    _
  %v57 = vlaneseq
  %v58 = vand.u32 %v57, 127
  %59 = vrot.lane.b32.xlu0 %v58, 1
  %v60 = vpop.permute.xlu0 %59
  %s61 = vtos %v60
  %p62 = scmp.eq.s32.totalorder %s61, 127
  %s63 = scalar_select %p62, 4294967295, 1
  %v64 = vld [vmem:[%s1] sm:$0xff]
  %v65 = vld [vmem:[%s1 + $0x8] sm:$0xff]
  %v66 = vld [vmem:[%s0] sm:$0xff]
  %v67 = vld [vmem:[%s0 + $0x8] sm:$0xff]
  %v68 = vld [vmem:[%s0 + $0x10] sm:$0xff]
  %v69 = vld [vmem:[%s0 + $0x18] sm:$0xff]
  %v70 = vld [vmem:[%s0 + $0x20] sm:$0xff]
  %v71 = vld [vmem:[%s0 + $0x28] sm:$0xff]
  %v72 = vld [vmem:[%s0 + $0x30] sm:$0xff]
  %v73 = vld [vmem:[%s0 + $0x38] sm:$0xff]
  %v74 = vld [vmem:[%s0 + $0x40] sm:$0xff]
  %v75 = vld [vmem:[%s0 + $0x48] sm:$0xff]
  %v76 = vld [vmem:[%s0 + $0x50] sm:$0xff]
  %v77 = vld [vmem:[%s0 + $0x58] sm:$0xff]
  %v78 = vld [vmem:[%s0 + $0x60] sm:$0xff]
  %v79 = vld [vmem:[%s0 + $0x68] sm:$0xff]
  %v80 = vld [vmem:[%s0 + $0x70] sm:$0xff]
  %v81 = vld [vmem:[%s0 + $0x78] sm:$0xff]
  %v82 = vld [vmem:[%s0 + $0x80] sm:$0xff]
  %v83 = vld [vmem:[%s0 + $0x88] sm:$0xff]
  %v84 = vld [vmem:[%s0 + $0x90] sm:$0xff]
  %v85 = vld [vmem:[%s0 + $0x98] sm:$0xff]
  %v86 = vld [vmem:[%s0 + $0xa0] sm:$0xff]
  %v87 = vld [vmem:[%s0 + $0xa8] sm:$0xff]
  %v88 = vld [vmem:[%s0 + $0xb0] sm:$0xff]
  %v89 = vld [vmem:[%s0 + $0xb8] sm:$0xff]
  %v90 = vld [vmem:[%s0 + $0xc0] sm:$0xff]
  %v91 = vld [vmem:[%s0 + $0xc8] sm:$0xff]
  %v92 = vld [vmem:[%s0 + $0xd0] sm:$0xff]
  %v93 = vld [vmem:[%s0 + $0xd8] sm:$0xff]
  %v94 = vld [vmem:[%s0 + $0xe0] sm:$0xff]
  %v95 = vld [vmem:[%s0 + $0xe8] sm:$0xff]
  %v96 = vld [vmem:[%s0 + $0xf0] sm:$0xff]
  %v97 = vld [vmem:[%s0 + $0xf8] sm:$0xff]
  %v98 = vld [vmem:[%s0 + $0x100] sm:$0xff]
  %v99 = vld [vmem:[%s0 + $0x108] sm:$0xff]
  %v100 = vld [vmem:[%s0 + $0x110] sm:$0xff]
  %v101 = vld [vmem:[%s0 + $0x118] sm:$0xff]
  %v102 = vld [vmem:[%s0 + $0x120] sm:$0xff]
  %v103 = vld [vmem:[%s0 + $0x128] sm:$0xff]
  %v104 = vld [vmem:[%s0 + $0x130] sm:$0xff]
  %v105 = vld [vmem:[%s0 + $0x138] sm:$0xff]
  %v106 = vld [vmem:[%s0 + $0x140] sm:$0xff]
  %v107 = vld [vmem:[%s0 + $0x148] sm:$0xff]
  %v108 = vld [vmem:[%s0 + $0x150] sm:$0xff]
  %v109 = vld [vmem:[%s0 + $0x158] sm:$0xff]
  %v110 = vld [vmem:[%s0 + $0x160] sm:$0xff]
  %v111 = vld [vmem:[%s0 + $0x168] sm:$0xff]
  %v112 = vld [vmem:[%s0 + $0x170] sm:$0xff]
  %v113 = vld [vmem:[%s0 + $0x178] sm:$0xff]
  %v114 = vld [vmem:[%s0 + $0x180] sm:$0xff]
  %v115 = vld [vmem:[%s0 + $0x188] sm:$0xff]
  %v116 = vld [vmem:[%s0 + $0x190] sm:$0xff]
  %v117 = vld [vmem:[%s0 + $0x198] sm:$0xff]
  %v118 = vld [vmem:[%s0 + $0x1a0] sm:$0xff]
  %v119 = vld [vmem:[%s0 + $0x1a8] sm:$0xff]
  %v120 = vld [vmem:[%s0 + $0x1b0] sm:$0xff]
  %v121 = vld [vmem:[%s0 + $0x1b8] sm:$0xff]
  %v122 = vld [vmem:[%s0 + $0x1c0] sm:$0xff]
  %v123 = vld [vmem:[%s0 + $0x1c8] sm:$0xff]
  %v124 = vld [vmem:[%s0 + $0x1d0] sm:$0xff]
  %v125 = vld [vmem:[%s0 + $0x1d8] sm:$0xff]
  %v126 = vld [vmem:[%s0 + $0x1e0] sm:$0xff]
  %v127 = vld [vmem:[%s0 + $0x1e8] sm:$0xff]
  %v128 = vld [vmem:[%s0 + $0x1f0] sm:$0xff]
  %v129 = vld [vmem:[%s0 + $0x1f8] sm:$0xff]
  %v130 = vld [vmem:[%s2] sm:$0xff]
  %v131 = vld [vmem:[%s2 + $0x8] sm:$0xff]
  %133 = vset.pattern.permute.xlu0 0
  %134 = vperm.xlu0 %133, %v130
  %v135 = vpop.permute.xlu0 %134
  %138 = vset.pattern.permute.xlu0 0
  %139 = vperm.xlu0 %138, %v131
  %v140 = vpop.permute.xlu0 %139
  %v144 = vunpack.c.l.b16 %v64
  %v145 = vunpack.c.h.b16 %v64
  %v146 = vunpack.c.l.b16 %v65
  %v147 = vunpack.c.h.b16 %v65
  %v148 = vpack.c.b16 %v146, %v144
  %v149 = vpack.c.b16 %v147, %v145
  %v216 = vunpack.c.l.b16 %v66
  %v217 = vunpack.c.h.b16 %v66
  %v218 = vunpack.c.l.b16 %v67
  %v219 = vunpack.c.h.b16 %v67
  %v220 = vunpack.c.l.b16 %v68
  %v221 = vunpack.c.h.b16 %v68
  %v222 = vunpack.c.l.b16 %v69
  %v223 = vunpack.c.h.b16 %v69
  %v224 = vunpack.c.l.b16 %v70
  %v225 = vunpack.c.h.b16 %v70
  %v226 = vunpack.c.l.b16 %v71
  %v227 = vunpack.c.h.b16 %v71
  %v228 = vunpack.c.l.b16 %v72
  %v229 = vunpack.c.h.b16 %v72
  %v230 = vunpack.c.l.b16 %v73
  %v231 = vunpack.c.h.b16 %v73
  %v232 = vunpack.c.l.b16 %v74
  %v233 = vunpack.c.h.b16 %v74
  %v234 = vunpack.c.l.b16 %v75
  %v235 = vunpack.c.h.b16 %v75
  %v236 = vunpack.c.l.b16 %v76
  %v237 = vunpack.c.h.b16 %v76
  %v238 = vunpack.c.l.b16 %v77
  %v239 = vunpack.c.h.b16 %v77
  %v240 = vunpack.c.l.b16 %v78
  %v241 = vunpack.c.h.b16 %v78
  %v242 = vunpack.c.l.b16 %v79
  %v243 = vunpack.c.h.b16 %v79
  %v244 = vunpack.c.l.b16 %v80
  %v245 = vunpack.c.h.b16 %v80
  %v246 = vunpack.c.l.b16 %v81
  %v247 = vunpack.c.h.b16 %v81
  %v248 = vunpack.c.l.b16 %v82
  %v249 = vunpack.c.h.b16 %v82
  %v250 = vunpack.c.l.b16 %v83
  %v251 = vunpack.c.h.b16 %v83
  %v252 = vunpack.c.l.b16 %v84
  %v253 = vunpack.c.h.b16 %v84
  %v254 = vunpack.c.l.b16 %v85
  %v255 = vunpack.c.h.b16 %v85
  %v256 = vunpack.c.l.b16 %v86
  %v257 = vunpack.c.h.b16 %v86
  %v258 = vunpack.c.l.b16 %v87
  %v259 = vunpack.c.h.b16 %v87
  %v260 = vunpack.c.l.b16 %v88
  %v261 = vunpack.c.h.b16 %v88
  %v262 = vunpack.c.l.b16 %v89
  %v263 = vunpack.c.h.b16 %v89
  %v264 = vunpack.c.l.b16 %v90
  %v265 = vunpack.c.h.b16 %v90
  %v266 = vunpack.c.l.b16 %v91
  %v267 = vunpack.c.h.b16 %v91
  %v268 = vunpack.c.l.b16 %v92
  %v269 = vunpack.c.h.b16 %v92
  %v270 = vunpack.c.l.b16 %v93
  %v271 = vunpack.c.h.b16 %v93
  %v272 = vunpack.c.l.b16 %v94
  %v273 = vunpack.c.h.b16 %v94
  %v274 = vunpack.c.l.b16 %v95
  %v275 = vunpack.c.h.b16 %v95
  %v276 = vunpack.c.l.b16 %v96
  %v277 = vunpack.c.h.b16 %v96
  %v278 = vunpack.c.l.b16 %v97
  %v279 = vunpack.c.h.b16 %v97
  %v280 = vunpack.c.l.b16 %v98
  %v281 = vunpack.c.h.b16 %v98
  %v282 = vunpack.c.l.b16 %v99
  %v283 = vunpack.c.h.b16 %v99
  %v284 = vunpack.c.l.b16 %v100
  %v285 = vunpack.c.h.b16 %v100
  %v286 = vunpack.c.l.b16 %v101
  %v287 = vunpack.c.h.b16 %v101
  %v288 = vunpack.c.l.b16 %v102
  %v289 = vunpack.c.h.b16 %v102
  %v290 = vunpack.c.l.b16 %v103
  %v291 = vunpack.c.h.b16 %v103
  %v292 = vunpack.c.l.b16 %v104
  %v293 = vunpack.c.h.b16 %v104
  %v294 = vunpack.c.l.b16 %v105
  %v295 = vunpack.c.h.b16 %v105
  %v296 = vunpack.c.l.b16 %v106
  %v297 = vunpack.c.h.b16 %v106
  %v298 = vunpack.c.l.b16 %v107
  %v299 = vunpack.c.h.b16 %v107
  %v300 = vunpack.c.l.b16 %v108
  %v301 = vunpack.c.h.b16 %v108
  %v302 = vunpack.c.l.b16 %v109
  %v303 = vunpack.c.h.b16 %v109
  %v304 = vunpack.c.l.b16 %v110
  %v305 = vunpack.c.h.b16 %v110
  %v306 = vunpack.c.l.b16 %v111
  %v307 = vunpack.c.h.b16 %v111
  %v308 = vunpack.c.l.b16 %v112
  %v309 = vunpack.c.h.b16 %v112
  %v310 = vunpack.c.l.b16 %v113
  %v311 = vunpack.c.h.b16 %v113
  %v312 = vunpack.c.l.b16 %v114
  %v313 = vunpack.c.h.b16 %v114
  %v314 = vunpack.c.l.b16 %v115
  %v315 = vunpack.c.h.b16 %v115
  %v316 = vunpack.c.l.b16 %v116
  %v317 = vunpack.c.h.b16 %v116
  %v318 = vunpack.c.l.b16 %v117
  %v319 = vunpack.c.h.b16 %v117
  %v320 = vunpack.c.l.b16 %v118
  %v321 = vunpack.c.h.b16 %v118
  %v322 = vunpack.c.l.b16 %v119
  %v323 = vunpack.c.h.b16 %v119
  %v324 = vunpack.c.l.b16 %v120
  %v325 = vunpack.c.h.b16 %v120
  %v326 = vunpack.c.l.b16 %v121
  %v327 = vunpack.c.h.b16 %v121
  %v328 = vunpack.c.l.b16 %v122
  %v329 = vunpack.c.h.b16 %v122
  %v330 = vunpack.c.l.b16 %v123
  %v331 = vunpack.c.h.b16 %v123
  %v332 = vunpack.c.l.b16 %v124
  %v333 = vunpack.c.h.b16 %v124
  %v334 = vunpack.c.l.b16 %v125
  %v335 = vunpack.c.h.b16 %v125
  %v336 = vunpack.c.l.b16 %v126
  %v337 = vunpack.c.h.b16 %v126
  %v338 = vunpack.c.l.b16 %v127
  %v339 = vunpack.c.h.b16 %v127
  %v340 = vunpack.c.l.b16 %v128
  %v341 = vunpack.c.h.b16 %v128
  %v342 = vunpack.c.l.b16 %v129
  %v343 = vunpack.c.h.b16 %v129
  %v344 = vpack.c.b16 %v220, %v216
  %v345 = vpack.c.b16 %v221, %v217
  %v346 = vpack.c.b16 %v222, %v218
  %v347 = vpack.c.b16 %v223, %v219
  %v348 = vpack.c.b16 %v228, %v224
  %v349 = vpack.c.b16 %v229, %v225
  %v350 = vpack.c.b16 %v230, %v226
  %v351 = vpack.c.b16 %v231, %v227
  %v352 = vpack.c.b16 %v236, %v232
  %v353 = vpack.c.b16 %v237, %v233
  %v354 = vpack.c.b16 %v238, %v234
  %v355 = vpack.c.b16 %v239, %v235
  %v356 = vpack.c.b16 %v244, %v240
  %v357 = vpack.c.b16 %v245, %v241
  %v358 = vpack.c.b16 %v246, %v242
  %v359 = vpack.c.b16 %v247, %v243
  %v360 = vpack.c.b16 %v252, %v248
  %v361 = vpack.c.b16 %v253, %v249
  %v362 = vpack.c.b16 %v254, %v250
  %v363 = vpack.c.b16 %v255, %v251
  %v364 = vpack.c.b16 %v260, %v256
  %v365 = vpack.c.b16 %v261, %v257
  %v366 = vpack.c.b16 %v262, %v258
  %v367 = vpack.c.b16 %v263, %v259
  %v368 = vpack.c.b16 %v268, %v264
  %v369 = vpack.c.b16 %v269, %v265
  %v370 = vpack.c.b16 %v270, %v266
  %v371 = vpack.c.b16 %v271, %v267
  %v372 = vpack.c.b16 %v276, %v272
  %v373 = vpack.c.b16 %v277, %v273
  %v374 = vpack.c.b16 %v278, %v274
  %v375 = vpack.c.b16 %v279, %v275
  %v376 = vpack.c.b16 %v284, %v280
  %v377 = vpack.c.b16 %v285, %v281
  %v378 = vpack.c.b16 %v286, %v282
  %v379 = vpack.c.b16 %v287, %v283
  %v380 = vpack.c.b16 %v292, %v288
  %v381 = vpack.c.b16 %v293, %v289
  %v382 = vpack.c.b16 %v294, %v290
  %v383 = vpack.c.b16 %v295, %v291
  %v384 = vpack.c.b16 %v300, %v296
  %v385 = vpack.c.b16 %v301, %v297
  %v386 = vpack.c.b16 %v302, %v298
  %v387 = vpack.c.b16 %v303, %v299
  %v388 = vpack.c.b16 %v308, %v304
  %v389 = vpack.c.b16 %v309, %v305
  %v390 = vpack.c.b16 %v310, %v306
  %v391 = vpack.c.b16 %v311, %v307
  %v392 = vpack.c.b16 %v316, %v312
  %v393 = vpack.c.b16 %v317, %v313
  %v394 = vpack.c.b16 %v318, %v314
  %v395 = vpack.c.b16 %v319, %v315
  %v396 = vpack.c.b16 %v324, %v320
  %v397 = vpack.c.b16 %v325, %v321
  %v398 = vpack.c.b16 %v326, %v322
  %v399 = vpack.c.b16 %v327, %v323
  %v400 = vpack.c.b16 %v332, %v328
  %v401 = vpack.c.b16 %v333, %v329
  %v402 = vpack.c.b16 %v334, %v330
  %v403 = vpack.c.b16 %v335, %v331
  %v404 = vpack.c.b16 %v340, %v336
  %v405 = vpack.c.b16 %v341, %v337
  %v406 = vpack.c.b16 %v342, %v338
  %v407 = vpack.c.b16 %v343, %v339
  %472 = vmatprep.subr.bf16.mxu0 %v373
  %473 = vmatpush1.bf16.msra.mxu0 %v372
  %474 = vmatprep.subr.bf16.mxu0 %v369
  %475 = vmatpush1.bf16.msra.mxu0 %v368
  %476 = vmatprep.subr.bf16.mxu0 %v365
  %477 = vmatpush1.bf16.msra.mxu0 %v364
  %478 = vmatprep.subr.bf16.mxu0 %v361
  %479 = vmatpush1.bf16.msra.mxu0 %v360
  %480 = vmatprep.subr.bf16.mxu0 %v357
  %481 = vmatpush1.bf16.msra.mxu0 %v356
  %482 = vmatprep.subr.bf16.mxu0 %v353
  %483 = vmatpush1.bf16.msra.mxu0 %v352
  %484 = vmatprep.subr.bf16.mxu0 %v349
  %485 = vmatpush1.bf16.msra.mxu0 %v348
  %486 = vmatprep.subr.bf16.mxu0 %v345
  %487 = vmatpush1.bf16.msra.mxu0 %v344
  %488 = vmatprep.subr.bf16.mxu0 %v405
  %489 = vmatpush2.bf16.msra.mxu0 %v404
  %490 = vmatprep.subr.bf16.mxu0 %v401
  %491 = vmatpush2.bf16.msra.mxu0 %v400
  %492 = vmatprep.subr.bf16.mxu0 %v397
  %493 = vmatpush2.bf16.msra.mxu0 %v396
  %494 = vmatprep.subr.bf16.mxu0 %v393
  %495 = vmatpush2.bf16.msra.mxu0 %v392
  %496 = vmatprep.subr.bf16.mxu0 %v389
  %497 = vmatpush2.bf16.msra.mxu0 %v388
  %498 = vmatprep.subr.bf16.mxu0 %v385
  %499 = vmatpush2.bf16.msra.mxu0 %v384
  %500 = vmatprep.subr.bf16.mxu0 %v381
  %501 = vmatpush2.bf16.msra.mxu0 %v380
  %502 = vmatprep.subr.bf16.mxu0 %v377
  %503 = vmatpush2.bf16.msra.mxu0 %v376
  %504 = vmatprep.mubr.bf16.mxu0 %v149
  %505 = vmatmul.mubr.bf16.gmra.mxu0 %v148
  %v506 = vpop.f32.mrf.mxu0
  %v507 = vadd.f32 %v135, %v506
  %v508 = vpop.f32.mrf.mxu0
  %v509 = vadd.f32 %v135, %v508
  %v510 = vpop.f32.mrf.mxu0
  %v511 = vadd.f32 %v140, %v510
  %v512 = vpop.f32.mrf.mxu0
  %v513 = vadd.f32 %v140, %v512
  %514 = vdwg.mxu0
  %515 = vmatprep.subr.bf16.mxu0 %v375
  %516 = vmatpush1.bf16.msra.mxu0 %v374
  %517 = vmatprep.subr.bf16.mxu0 %v371
  %518 = vmatpush1.bf16.msra.mxu0 %v370
  %519 = vmatprep.subr.bf16.mxu0 %v367
  %520 = vmatpush1.bf16.msra.mxu0 %v366
  %521 = vmatprep.subr.bf16.mxu0 %v363
  %522 = vmatpush1.bf16.msra.mxu0 %v362
  %523 = vmatprep.subr.bf16.mxu0 %v359
  %524 = vmatpush1.bf16.msra.mxu0 %v358
  %525 = vmatprep.subr.bf16.mxu0 %v355
  %526 = vmatpush1.bf16.msra.mxu0 %v354
  %527 = vmatprep.subr.bf16.mxu0 %v351
  %528 = vmatpush1.bf16.msra.mxu0 %v350
  %529 = vmatprep.subr.bf16.mxu0 %v347
  %530 = vmatpush1.bf16.msra.mxu0 %v346
  %531 = vmatprep.subr.bf16.mxu0 %v407
  %532 = vmatpush2.bf16.msra.mxu0 %v406
  %533 = vmatprep.subr.bf16.mxu0 %v403
  %534 = vmatpush2.bf16.msra.mxu0 %v402
  %535 = vmatprep.subr.bf16.mxu0 %v399
  %536 = vmatpush2.bf16.msra.mxu0 %v398
  %537 = vmatprep.subr.bf16.mxu0 %v395
  %538 = vmatpush2.bf16.msra.mxu0 %v394
  %539 = vmatprep.subr.bf16.mxu0 %v391
  %540 = vmatpush2.bf16.msra.mxu0 %v390
  %541 = vmatprep.subr.bf16.mxu0 %v387
  %542 = vmatpush2.bf16.msra.mxu0 %v386
  %543 = vmatprep.subr.bf16.mxu0 %v383
  %544 = vmatpush2.bf16.msra.mxu0 %v382
  %545 = vmatprep.subr.bf16.mxu0 %v379
  %546 = vmatpush2.bf16.msra.mxu0 %v378
  %547 = vmatprep.mubr.bf16.mxu0 %v149
  %548 = vmatmul.mubr.bf16.gmra.mxu0 %v148
  %v549 = vpop.f32.mrf.mxu0
  %v550 = vadd.f32 %v135, %v549
  %v551 = vpop.f32.mrf.mxu0
  %v552 = vadd.f32 %v135, %v551
  %v553 = vpop.f32.mrf.mxu0
  %v554 = vadd.f32 %v140, %v553
  %v555 = vpop.f32.mrf.mxu0
  %v556 = vadd.f32 %v140, %v555
  %557 = vdwg.mxu0
  %v558 = vmax.f32 %v507, 0.0
  %v559 = vmax.f32 %v509, 0.0
  %v560 = vmax.f32 %v550, 0.0
  %v561 = vmax.f32 %v552, 0.0
  %v562 = vmax.f32 %v511, 0.0
  %v563 = vmax.f32 %v513, 0.0
  %v564 = vmax.f32 %v554, 0.0
  %v565 = vmax.f32 %v556, 0.0
  %v566 = vld [vmem:[%s3] sm:$0xff]
  %v567 = vld [vmem:[%s3 + $0x8] sm:$0xff]
  %v568 = vld [vmem:[%s3 + $0x10] sm:$0xff]
  %v569 = vld [vmem:[%s3 + $0x18] sm:$0xff]
  %v570 = vld [vmem:[%s3 + $0x20] sm:$0x1]
  %v571 = vld [vmem:[%s3 + $0x28] sm:$0x1]
  %v572 = vld [vmem:[%s3 + $0x30] sm:$0x1]
  %v573 = vld [vmem:[%s3 + $0x38] sm:$0x1]
  %s574 = smul.u32 %s63, 4294967279
  %p575 = scmp.lt.s32.totalorder %s574, 0
  %s576 = ssub.s32 0, %s574
  %s577 = scalar_select %p575, %s576, %s574
  %s578 = sand.u32 %s577, 511
  %s579 = ssub.s32 0, %s578
  %s580 = scalar_select %p575, %s579, %s578
  %p581 = scmp.ne.s32.totalorder %s580, 0
  %p582 = scmp.lt.s32.totalorder %s580, 0
  %p583 = pnand %p582, %p581
  %p584 = pneg %p583
  %s585 = sadd.s32 %s580, 512
  %s586 = scalar_select %p584, %s585, %s580
  %s587 = sand.u32 %s586, 511
  %s588 = sand.u32 %s587, 127
  %s589 = sshrl.u32 %s587, 7
  %590 = vrot.lane.b32.xlu0 %v558, %s588
  %v591 = vpop.permute.xlu0 %590
  %592 = vrot.lane.b32.xlu0 %v562, %s588
  %v593 = vpop.permute.xlu0 %592
  %594 = vrot.lane.b32.xlu0 %v559, %s588
  %v595 = vpop.permute.xlu0 %594
  %596 = vrot.lane.b32.xlu0 %v563, %s588
  %v597 = vpop.permute.xlu0 %596
  %598 = vrot.lane.b32.xlu0 %v560, %s588
  %v599 = vpop.permute.xlu0 %598
  %600 = vrot.lane.b32.xlu0 %v564, %s588
  %v601 = vpop.permute.xlu0 %600
  %602 = vrot.lane.b32.xlu0 %v561, %s588
  %v603 = vpop.permute.xlu0 %602
  %604 = vrot.lane.b32.xlu0 %v565, %s588
  %v605 = vpop.permute.xlu0 %604
  %v606 = vstv %s588
  %vm607 = vcmp.lt.s32.totalorder %v58, %v606
  %v608 = vsel %vm607, %v599, %v603
  %v609 = vsel %vm607, %v601, %v605
  %v610 = vsel %vm607, %v595, %v599
  %v611 = vsel %vm607, %v597, %v601
  %v612 = vsel %vm607, %v591, %v595
  %v613 = vsel %vm607, %v593, %v597
  %v614 = vsel %vm607, %v603, %v591
  %v615 = vsel %vm607, %v605, %v593
  %s616 = sand.u32 %s589, 1
  %v617 = vstv %s616
  %vm618 = vcmp.ne.s32.totalorder %v617, 0
  %v619 = vsel %vm618, %v608, %v614
  %v620 = vsel %vm618, %v614, %v612
  %v621 = vsel %vm618, %v612, %v610
  %v622 = vsel %vm618, %v610, %v608
  %v623 = vsel %vm618, %v609, %v615
  %v624 = vsel %vm618, %v615, %v613
  %v625 = vsel %vm618, %v613, %v611
  %v626 = vsel %vm618, %v611, %v609
  %s627 = sand.u32 %s589, 2
  %v628 = vstv %s627
  %vm629 = vcmp.ne.s32.totalorder %v628, 0
  %v630 = vsel %vm629, %v621, %v619
  %v631 = vsel %vm629, %v622, %v620
  %v632 = vsel %vm629, %v619, %v621
  %v633 = vsel %vm629, %v620, %v622
  %v634 = vsel %vm629, %v625, %v623
  %v635 = vsel %vm629, %v626, %v624
  %v636 = vsel %vm629, %v623, %v625
  %v637 = vsel %vm629, %v624, %v626
  %vm638 = vcmp.gt.f32.partialorder %v566, 0.5
  %vm639 = vcmp.gt.f32.partialorder %v567, 0.5
  %vm640 = vcmp.gt.f32.partialorder %v568, 0.5
  %vm641 = vcmp.gt.f32.partialorder %v569, 0.5
  %v642 = vsel %vm638, 1, 0
  %v643 = vsel %vm639, 1, 0
  %v644 = vsel %vm640, 1, 0
  %v645 = vsel %vm641, 1, 0
  %v646 = vlaneseq
  %v647 = vshrl.u32 %v646, 7
  %v648 = vsub.s32 0, %v647
  %v649 = vrot.slane %v642, %v648
  %v650 = vlaneseq
  %v651 = vshrl.u32 %v650, 7
  %v652 = vsub.s32 0, %v651
  %v653 = vrot.slane %v643, %v652
  %v654 = vlaneseq
  %v655 = vshrl.u32 %v654, 7
  %v656 = vsub.s32 0, %v655
  %v657 = vrot.slane %v644, %v656
  %v658 = vlaneseq
  %v659 = vshrl.u32 %v658, 7
  %v660 = vsub.s32 0, %v659
  %v661 = vrot.slane %v645, %v660
  %vm662 = vcmp.eq.s32.totalorder %v649, 1
  %vm663 = vcmp.eq.s32.totalorder %v653, 1
  %vm664 = vcmp.eq.s32.totalorder %v657, 1
  %vm665 = vcmp.eq.s32.totalorder %v661, 1
  %v666 = vsel %vm662, %v630, -1e+30
  %v667 = vsel %vm663, %v631, -1e+30
  %v668 = vsel %vm664, %v632, -1e+30
  %v669 = vsel %vm665, %v633, -1e+30
  %v670 = vsel %vm662, %v634, -1e+30
  %v671 = vsel %vm663, %v635, -1e+30
  %v672 = vsel %vm664, %v636, -1e+30
  %v673 = vsel %vm665, %v637, -1e+30
  %s674 = smul.u32 %s63, 4294967280
  %p675 = scmp.lt.s32.totalorder %s674, 0
  %s676 = ssub.s32 0, %s674
  %s677 = scalar_select %p675, %s676, %s674
  %s678 = sand.u32 %s677, 511
  %s679 = ssub.s32 0, %s678
  %s680 = scalar_select %p675, %s679, %s678
  %p681 = scmp.ne.s32.totalorder %s680, 0
  %p682 = scmp.lt.s32.totalorder %s680, 0
  %p683 = pnand %p682, %p681
  %p684 = pneg %p683
  %s685 = sadd.s32 %s680, 512
  %s686 = scalar_select %p684, %s685, %s680
  %s687 = sand.u32 %s686, 511
  %s688 = sand.u32 %s687, 127
  %s689 = sshrl.u32 %s687, 7
  %690 = vrot.lane.b32.xlu0 %v558, %s688
  %v691 = vpop.permute.xlu0 %690
  %692 = vrot.lane.b32.xlu0 %v562, %s688
  %v693 = vpop.permute.xlu0 %692
  %694 = vrot.lane.b32.xlu0 %v559, %s688
  %v695 = vpop.permute.xlu0 %694
  %696 = vrot.lane.b32.xlu0 %v563, %s688
  %v697 = vpop.permute.xlu0 %696
  %698 = vrot.lane.b32.xlu0 %v560, %s688
  %v699 = vpop.permute.xlu0 %698
  %700 = vrot.lane.b32.xlu0 %v564, %s688
  %v701 = vpop.permute.xlu0 %700
  %702 = vrot.lane.b32.xlu0 %v561, %s688
  %v703 = vpop.permute.xlu0 %702
  %704 = vrot.lane.b32.xlu0 %v565, %s688
  %v705 = vpop.permute.xlu0 %704
  %v706 = vstv %s688
  %vm707 = vcmp.lt.s32.totalorder %v58, %v706
  %v708 = vsel %vm707, %v699, %v703
  %v709 = vsel %vm707, %v701, %v705
  %v710 = vsel %vm707, %v695, %v699
  %v711 = vsel %vm707, %v697, %v701
  %v712 = vsel %vm707, %v691, %v695
  %v713 = vsel %vm707, %v693, %v697
  %v714 = vsel %vm707, %v703, %v691
  %v715 = vsel %vm707, %v705, %v693
  %s716 = sand.u32 %s689, 1
  %v717 = vstv %s716
  %vm718 = vcmp.ne.s32.totalorder %v717, 0
  %v719 = vsel %vm718, %v708, %v714
  %v720 = vsel %vm718, %v714, %v712
  %v721 = vsel %vm718, %v712, %v710
  %v722 = vsel %vm718, %v710, %v708
  %v723 = vsel %vm718, %v709, %v715
  %v724 = vsel %vm718, %v715, %v713
  %v725 = vsel %vm718, %v713, %v711
  %v726 = vsel %vm718, %v711, %v709
  %s727 = sand.u32 %s689, 2
  %v728 = vstv %s727
  %vm729 = vcmp.ne.s32.totalorder %v728, 0
  %v730 = vsel %vm729, %v721, %v719
  %v731 = vsel %vm729, %v722, %v720
  %v732 = vsel %vm729, %v719, %v721
  %v733 = vsel %vm729, %v720, %v722
  %v734 = vsel %vm729, %v725, %v723
  %v735 = vsel %vm729, %v726, %v724
  %v736 = vsel %vm729, %v723, %v725
  %v737 = vsel %vm729, %v724, %v726
  %v738 = vlaneseq
  %v739 = vshrl.u32 %v738, 7
  %v740 = vsub.s32 1, %v739
  %v741 = vrot.slane %v642, %v740
  %v742 = vlaneseq
  %v743 = vshrl.u32 %v742, 7
  %v744 = vsub.s32 1, %v743
  %v745 = vrot.slane %v643, %v744
  %v746 = vlaneseq
  %v747 = vshrl.u32 %v746, 7
  %v748 = vsub.s32 1, %v747
  %v749 = vrot.slane %v644, %v748
  %v750 = vlaneseq
  %v751 = vshrl.u32 %v750, 7
  %v752 = vsub.s32 1, %v751
  %v753 = vrot.slane %v645, %v752
  %vm754 = vcmp.eq.s32.totalorder %v741, 1
  %vm755 = vcmp.eq.s32.totalorder %v745, 1
  %vm756 = vcmp.eq.s32.totalorder %v749, 1
  %vm757 = vcmp.eq.s32.totalorder %v753, 1
  %v758 = vsel %vm754, %v730, -1e+30
  %v759 = vsel %vm755, %v731, -1e+30
  %v760 = vsel %vm756, %v732, -1e+30
  %v761 = vsel %vm757, %v733, -1e+30
  %v762 = vsel %vm754, %v734, -1e+30
  %v763 = vsel %vm755, %v735, -1e+30
  %v764 = vsel %vm756, %v736, -1e+30
  %v765 = vsel %vm757, %v737, -1e+30
  %v766 = vmax.f32 %v666, %v758
  %v767 = vmax.f32 %v667, %v759
  %v768 = vmax.f32 %v668, %v760
  %v769 = vmax.f32 %v669, %v761
  %v770 = vmax.f32 %v670, %v762
  %v771 = vmax.f32 %v671, %v763
  %v772 = vmax.f32 %v672, %v764
  %v773 = vmax.f32 %v673, %v765
  %s774 = smul.u32 %s63, 4294967281
  %p775 = scmp.lt.s32.totalorder %s774, 0
  %s776 = ssub.s32 0, %s774
  %s777 = scalar_select %p775, %s776, %s774
  %s778 = sand.u32 %s777, 511
  %s779 = ssub.s32 0, %s778
  %s780 = scalar_select %p775, %s779, %s778
  %p781 = scmp.ne.s32.totalorder %s780, 0
  %p782 = scmp.lt.s32.totalorder %s780, 0
  %p783 = pnand %p782, %p781
  %p784 = pneg %p783
  %s785 = sadd.s32 %s780, 512
  %s786 = scalar_select %p784, %s785, %s780
  %s787 = sand.u32 %s786, 511
  %s788 = sand.u32 %s787, 127
  %s789 = sshrl.u32 %s787, 7
  %790 = vrot.lane.b32.xlu0 %v558, %s788
  %v791 = vpop.permute.xlu0 %790
  %792 = vrot.lane.b32.xlu0 %v562, %s788
  %v793 = vpop.permute.xlu0 %792
  %794 = vrot.lane.b32.xlu0 %v559, %s788
  %v795 = vpop.permute.xlu0 %794
  %796 = vrot.lane.b32.xlu0 %v563, %s788
  %v797 = vpop.permute.xlu0 %796
  %798 = vrot.lane.b32.xlu0 %v560, %s788
  %v799 = vpop.permute.xlu0 %798
  %800 = vrot.lane.b32.xlu0 %v564, %s788
  %v801 = vpop.permute.xlu0 %800
  %802 = vrot.lane.b32.xlu0 %v561, %s788
  %v803 = vpop.permute.xlu0 %802
  %804 = vrot.lane.b32.xlu0 %v565, %s788
  %v805 = vpop.permute.xlu0 %804
  %v806 = vstv %s788
  %vm807 = vcmp.lt.s32.totalorder %v58, %v806
  %v808 = vsel %vm807, %v799, %v803
  %v809 = vsel %vm807, %v801, %v805
  %v810 = vsel %vm807, %v795, %v799
  %v811 = vsel %vm807, %v797, %v801
  %v812 = vsel %vm807, %v791, %v795
  %v813 = vsel %vm807, %v793, %v797
  %v814 = vsel %vm807, %v803, %v791
  %v815 = vsel %vm807, %v805, %v793
  %s816 = sand.u32 %s789, 1
  %v817 = vstv %s816
  %vm818 = vcmp.ne.s32.totalorder %v817, 0
  %v819 = vsel %vm818, %v808, %v814
  %v820 = vsel %vm818, %v814, %v812
  %v821 = vsel %vm818, %v812, %v810
  %v822 = vsel %vm818, %v810, %v808
  %v823 = vsel %vm818, %v809, %v815
  %v824 = vsel %vm818, %v815, %v813
  %v825 = vsel %vm818, %v813, %v811
  %v826 = vsel %vm818, %v811, %v809
  %s827 = sand.u32 %s789, 2
  %v828 = vstv %s827
  %vm829 = vcmp.ne.s32.totalorder %v828, 0
  %v830 = vsel %vm829, %v821, %v819
  %v831 = vsel %vm829, %v822, %v820
  %v832 = vsel %vm829, %v819, %v821
  %v833 = vsel %vm829, %v820, %v822
  %v834 = vsel %vm829, %v825, %v823
  %v835 = vsel %vm829, %v826, %v824
  %v836 = vsel %vm829, %v823, %v825
  %v837 = vsel %vm829, %v824, %v826
  %v838 = vlaneseq
  %v839 = vshrl.u32 %v838, 7
  %v840 = vsub.s32 2, %v839
  %v841 = vrot.slane %v642, %v840
  %v842 = vlaneseq
  %v843 = vshrl.u32 %v842, 7
  %v844 = vsub.s32 2, %v843
  %v845 = vrot.slane %v643, %v844
  %v846 = vlaneseq
  %v847 = vshrl.u32 %v846, 7
  %v848 = vsub.s32 2, %v847
  %v849 = vrot.slane %v644, %v848
  %v850 = vlaneseq
  %v851 = vshrl.u32 %v850, 7
  %v852 = vsub.s32 2, %v851
  %v853 = vrot.slane %v645, %v852
  %vm854 = vcmp.eq.s32.totalorder %v841, 1
  %vm855 = vcmp.eq.s32.totalorder %v845, 1
  %vm856 = vcmp.eq.s32.totalorder %v849, 1
  %vm857 = vcmp.eq.s32.totalorder %v853, 1
  %v858 = vsel %vm854, %v830, -1e+30
  %v859 = vsel %vm855, %v831, -1e+30
  %v860 = vsel %vm856, %v832, -1e+30
  %v861 = vsel %vm857, %v833, -1e+30
  %v862 = vsel %vm854, %v834, -1e+30
  %v863 = vsel %vm855, %v835, -1e+30
  %v864 = vsel %vm856, %v836, -1e+30
  %v865 = vsel %vm857, %v837, -1e+30
  %v866 = vmax.f32 %v766, %v858
  %v867 = vmax.f32 %v767, %v859
  %v868 = vmax.f32 %v768, %v860
  %v869 = vmax.f32 %v769, %v861
  %v870 = vmax.f32 %v770, %v862
  %v871 = vmax.f32 %v771, %v863
  %v872 = vmax.f32 %v772, %v864
  %v873 = vmax.f32 %v773, %v865
  %s874 = smul.u32 %s63, 4294967295
  %p875 = scmp.lt.s32.totalorder %s874, 0
  %s876 = ssub.s32 0, %s874
  %s877 = scalar_select %p875, %s876, %s874
  %s878 = sand.u32 %s877, 511
  %s879 = ssub.s32 0, %s878
  %s880 = scalar_select %p875, %s879, %s878
  %p881 = scmp.ne.s32.totalorder %s880, 0
  %p882 = scmp.lt.s32.totalorder %s880, 0
  %p883 = pnand %p882, %p881
  %p884 = pneg %p883
  %s885 = sadd.s32 %s880, 512
  %s886 = scalar_select %p884, %s885, %s880
  %s887 = sand.u32 %s886, 511
  %s888 = sand.u32 %s887, 127
  %s889 = sshrl.u32 %s887, 7
  %890 = vrot.lane.b32.xlu0 %v558, %s888
  %v891 = vpop.permute.xlu0 %890
  %892 = vrot.lane.b32.xlu0 %v562, %s888
  %v893 = vpop.permute.xlu0 %892
  %894 = vrot.lane.b32.xlu0 %v559, %s888
  %v895 = vpop.permute.xlu0 %894
  %896 = vrot.lane.b32.xlu0 %v563, %s888
  %v897 = vpop.permute.xlu0 %896
  %898 = vrot.lane.b32.xlu0 %v560, %s888
  %v899 = vpop.permute.xlu0 %898
  %900 = vrot.lane.b32.xlu0 %v564, %s888
  %v901 = vpop.permute.xlu0 %900
  %902 = vrot.lane.b32.xlu0 %v561, %s888
  %v903 = vpop.permute.xlu0 %902
  %904 = vrot.lane.b32.xlu0 %v565, %s888
  %v905 = vpop.permute.xlu0 %904
  %v906 = vstv %s888
  %vm907 = vcmp.lt.s32.totalorder %v58, %v906
  %v908 = vsel %vm907, %v899, %v903
  %v909 = vsel %vm907, %v901, %v905
  %v910 = vsel %vm907, %v895, %v899
  %v911 = vsel %vm907, %v897, %v901
  %v912 = vsel %vm907, %v891, %v895
  %v913 = vsel %vm907, %v893, %v897
  %v914 = vsel %vm907, %v903, %v891
  %v915 = vsel %vm907, %v905, %v893
  %s916 = sand.u32 %s889, 1
  %v917 = vstv %s916
  %vm918 = vcmp.ne.s32.totalorder %v917, 0
  %v919 = vsel %vm918, %v908, %v914
  %v920 = vsel %vm918, %v914, %v912
  %v921 = vsel %vm918, %v912, %v910
  %v922 = vsel %vm918, %v910, %v908
  %v923 = vsel %vm918, %v909, %v915
  %v924 = vsel %vm918, %v915, %v913
  %v925 = vsel %vm918, %v913, %v911
  %v926 = vsel %vm918, %v911, %v909
  %s927 = sand.u32 %s889, 2
  %v928 = vstv %s927
  %vm929 = vcmp.ne.s32.totalorder %v928, 0
  %v930 = vsel %vm929, %v921, %v919
  %v931 = vsel %vm929, %v922, %v920
  %v932 = vsel %vm929, %v919, %v921
  %v933 = vsel %vm929, %v920, %v922
  %v934 = vsel %vm929, %v925, %v923
  %v935 = vsel %vm929, %v926, %v924
  %v936 = vsel %vm929, %v923, %v925
  %v937 = vsel %vm929, %v924, %v926
  %v938 = vlaneseq
  %v939 = vshrl.u32 %v938, 7
  %v940 = vsub.s32 3, %v939
  %v941 = vrot.slane %v642, %v940
  %v942 = vlaneseq
  %v943 = vshrl.u32 %v942, 7
  %v944 = vsub.s32 3, %v943
  %v945 = vrot.slane %v643, %v944
  %v946 = vlaneseq
  %v947 = vshrl.u32 %v946, 7
  %v948 = vsub.s32 3, %v947
  %v949 = vrot.slane %v644, %v948
  %v950 = vlaneseq
  %v951 = vshrl.u32 %v950, 7
  %v952 = vsub.s32 3, %v951
  %v953 = vrot.slane %v645, %v952
  %vm954 = vcmp.eq.s32.totalorder %v941, 1
  %vm955 = vcmp.eq.s32.totalorder %v945, 1
  %vm956 = vcmp.eq.s32.totalorder %v949, 1
  %vm957 = vcmp.eq.s32.totalorder %v953, 1
  %v958 = vsel %vm954, %v930, -1e+30
  %v959 = vsel %vm955, %v931, -1e+30
  %v960 = vsel %vm956, %v932, -1e+30
  %v961 = vsel %vm957, %v933, -1e+30
  %v962 = vsel %vm954, %v934, -1e+30
  %v963 = vsel %vm955, %v935, -1e+30
  %v964 = vsel %vm956, %v936, -1e+30
  %v965 = vsel %vm957, %v937, -1e+30
  %v966 = vmax.f32 %v866, %v958
  %v967 = vmax.f32 %v867, %v959
  %v968 = vmax.f32 %v868, %v960
  %v969 = vmax.f32 %v869, %v961
  %v970 = vmax.f32 %v870, %v962
  %v971 = vmax.f32 %v871, %v963
  %v972 = vmax.f32 %v872, %v964
  %v973 = vmax.f32 %v873, %v965
  %v974 = vlaneseq
  %v975 = vshrl.u32 %v974, 7
  %v976 = vsub.s32 4, %v975
  %v977 = vrot.slane %v642, %v976
  %v978 = vlaneseq
  %v979 = vshrl.u32 %v978, 7
  %v980 = vsub.s32 4, %v979
  %v981 = vrot.slane %v643, %v980
  %v982 = vlaneseq
  %v983 = vshrl.u32 %v982, 7
  %v984 = vsub.s32 4, %v983
  %v985 = vrot.slane %v644, %v984
  %v986 = vlaneseq
  %v987 = vshrl.u32 %v986, 7
  %v988 = vsub.s32 4, %v987
  %v989 = vrot.slane %v645, %v988
  %vm990 = vcmp.eq.s32.totalorder %v977, 1
  %vm991 = vcmp.eq.s32.totalorder %v981, 1
  %vm992 = vcmp.eq.s32.totalorder %v985, 1
  %vm993 = vcmp.eq.s32.totalorder %v989, 1
  %v994 = vsel %vm990, %v558, -1e+30
  %v995 = vsel %vm991, %v559, -1e+30
  %v996 = vsel %vm992, %v560, -1e+30
  %v997 = vsel %vm993, %v561, -1e+30
  %v998 = vsel %vm990, %v562, -1e+30
  %v999 = vsel %vm991, %v563, -1e+30
  %v1000 = vsel %vm992, %v564, -1e+30
  %v1001 = vsel %vm993, %v565, -1e+30
  %v1002 = vmax.f32 %v966, %v994
  %v1003 = vmax.f32 %v967, %v995
  %v1004 = vmax.f32 %v968, %v996
  %v1005 = vmax.f32 %v969, %v997
  %v1006 = vmax.f32 %v970, %v998
  %v1007 = vmax.f32 %v971, %v999
  %v1008 = vmax.f32 %v972, %v1000
  %v1009 = vmax.f32 %v973, %v1001
  %s1010 = ssub.s32 0, %s63
  %s1011 = scalar_select %p62, %s1010, %s63
  %s1012 = sand.u32 %s1011, 511
  %s1013 = ssub.s32 0, %s1012
  %s1014 = scalar_select %p62, %s1013, %s1012
  %p1015 = scmp.ne.s32.totalorder %s1014, 0
  %p1016 = scmp.lt.s32.totalorder %s1014, 0
  %p1017 = pnand %p1016, %p1015
  %p1018 = pneg %p1017
  %s1019 = sadd.s32 %s1014, 512
  %s1020 = scalar_select %p1018, %s1019, %s1014
  %s1021 = sand.u32 %s1020, 511
  %s1022 = sand.u32 %s1021, 127
  %s1023 = sshrl.u32 %s1021, 7
  %1024 = vrot.lane.b32.xlu0 %v558, %s1022
  %v1025 = vpop.permute.xlu0 %1024
  %1026 = vrot.lane.b32.xlu0 %v562, %s1022
  %v1027 = vpop.permute.xlu0 %1026
  %1028 = vrot.lane.b32.xlu0 %v559, %s1022
  %v1029 = vpop.permute.xlu0 %1028
  %1030 = vrot.lane.b32.xlu0 %v563, %s1022
  %v1031 = vpop.permute.xlu0 %1030
  %1032 = vrot.lane.b32.xlu0 %v560, %s1022
  %v1033 = vpop.permute.xlu0 %1032
  %1034 = vrot.lane.b32.xlu0 %v564, %s1022
  %v1035 = vpop.permute.xlu0 %1034
  %1036 = vrot.lane.b32.xlu0 %v561, %s1022
  %v1037 = vpop.permute.xlu0 %1036
  %1038 = vrot.lane.b32.xlu0 %v565, %s1022
  %v1039 = vpop.permute.xlu0 %1038
  %v1040 = vstv %s1022
  %vm1041 = vcmp.lt.s32.totalorder %v58, %v1040
  %v1042 = vsel %vm1041, %v1033, %v1037
  %v1043 = vsel %vm1041, %v1035, %v1039
  %v1044 = vsel %vm1041, %v1029, %v1033
  %v1045 = vsel %vm1041, %v1031, %v1035
  %v1046 = vsel %vm1041, %v1025, %v1029
  %v1047 = vsel %vm1041, %v1027, %v1031
  %v1048 = vsel %vm1041, %v1037, %v1025
  %v1049 = vsel %vm1041, %v1039, %v1027
  %s1050 = sand.u32 %s1023, 1
  %v1051 = vstv %s1050
  %vm1052 = vcmp.ne.s32.totalorder %v1051, 0
  %v1053 = vsel %vm1052, %v1042, %v1048
  %v1054 = vsel %vm1052, %v1048, %v1046
  %v1055 = vsel %vm1052, %v1046, %v1044
  %v1056 = vsel %vm1052, %v1044, %v1042
  %v1057 = vsel %vm1052, %v1043, %v1049
  %v1058 = vsel %vm1052, %v1049, %v1047
  %v1059 = vsel %vm1052, %v1047, %v1045
  %v1060 = vsel %vm1052, %v1045, %v1043
  %s1061 = sand.u32 %s1023, 2
  %v1062 = vstv %s1061
  %vm1063 = vcmp.ne.s32.totalorder %v1062, 0
  %v1064 = vsel %vm1063, %v1055, %v1053
  %v1065 = vsel %vm1063, %v1056, %v1054
  %v1066 = vsel %vm1063, %v1053, %v1055
  %v1067 = vsel %vm1063, %v1054, %v1056
  %v1068 = vsel %vm1063, %v1059, %v1057
  %v1069 = vsel %vm1063, %v1060, %v1058
  %v1070 = vsel %vm1063, %v1057, %v1059
  %v1071 = vsel %vm1063, %v1058, %v1060
  %v1072 = vlaneseq
  %v1073 = vshrl.u32 %v1072, 7
  %v1074 = vsub.s32 5, %v1073
  %v1075 = vrot.slane %v642, %v1074
  %v1076 = vlaneseq
  %v1077 = vshrl.u32 %v1076, 7
  %v1078 = vsub.s32 5, %v1077
  %v1079 = vrot.slane %v643, %v1078
  %v1080 = vlaneseq
  %v1081 = vshrl.u32 %v1080, 7
  %v1082 = vsub.s32 5, %v1081
  %v1083 = vrot.slane %v644, %v1082
  %v1084 = vlaneseq
  %v1085 = vshrl.u32 %v1084, 7
  %v1086 = vsub.s32 5, %v1085
  %v1087 = vrot.slane %v645, %v1086
  %vm1088 = vcmp.eq.s32.totalorder %v1075, 1
  %vm1089 = vcmp.eq.s32.totalorder %v1079, 1
  %vm1090 = vcmp.eq.s32.totalorder %v1083, 1
  %vm1091 = vcmp.eq.s32.totalorder %v1087, 1
  %v1092 = vsel %vm1088, %v1064, -1e+30
  %v1093 = vsel %vm1089, %v1065, -1e+30
  %v1094 = vsel %vm1090, %v1066, -1e+30
  %v1095 = vsel %vm1091, %v1067, -1e+30
  %v1096 = vsel %vm1088, %v1068, -1e+30
  %v1097 = vsel %vm1089, %v1069, -1e+30
  %v1098 = vsel %vm1090, %v1070, -1e+30
  %v1099 = vsel %vm1091, %v1071, -1e+30
  %v1100 = vmax.f32 %v1002, %v1092
  %v1101 = vmax.f32 %v1003, %v1093
  %v1102 = vmax.f32 %v1004, %v1094
  %v1103 = vmax.f32 %v1005, %v1095
  %v1104 = vmax.f32 %v1006, %v1096
  %v1105 = vmax.f32 %v1007, %v1097
  %v1106 = vmax.f32 %v1008, %v1098
  %v1107 = vmax.f32 %v1009, %v1099
  %s1108 = smul.u32 %s63, 15
  %p1109 = scmp.lt.s32.totalorder %s1108, 0
  %s1110 = ssub.s32 0, %s1108
  %s1111 = scalar_select %p1109, %s1110, %s1108
  %s1112 = sand.u32 %s1111, 511
  %s1113 = ssub.s32 0, %s1112
  %s1114 = scalar_select %p1109, %s1113, %s1112
  %p1115 = scmp.ne.s32.totalorder %s1114, 0
  %p1116 = scmp.lt.s32.totalorder %s1114, 0
  %p1117 = pnand %p1116, %p1115
  %p1118 = pneg %p1117
  %s1119 = sadd.s32 %s1114, 512
  %s1120 = scalar_select %p1118, %s1119, %s1114
  %s1121 = sand.u32 %s1120, 511
  %s1122 = sand.u32 %s1121, 127
  %s1123 = sshrl.u32 %s1121, 7
  %1124 = vrot.lane.b32.xlu0 %v558, %s1122
  %v1125 = vpop.permute.xlu0 %1124
  %1126 = vrot.lane.b32.xlu0 %v562, %s1122
  %v1127 = vpop.permute.xlu0 %1126
  %1128 = vrot.lane.b32.xlu0 %v559, %s1122
  %v1129 = vpop.permute.xlu0 %1128
  %1130 = vrot.lane.b32.xlu0 %v563, %s1122
  %v1131 = vpop.permute.xlu0 %1130
  %1132 = vrot.lane.b32.xlu0 %v560, %s1122
  %v1133 = vpop.permute.xlu0 %1132
  %1134 = vrot.lane.b32.xlu0 %v564, %s1122
  %v1135 = vpop.permute.xlu0 %1134
  %1136 = vrot.lane.b32.xlu0 %v561, %s1122
  %v1137 = vpop.permute.xlu0 %1136
  %1138 = vrot.lane.b32.xlu0 %v565, %s1122
  %v1139 = vpop.permute.xlu0 %1138
  %v1140 = vstv %s1122
  %vm1141 = vcmp.lt.s32.totalorder %v58, %v1140
  %v1142 = vsel %vm1141, %v1133, %v1137
  %v1143 = vsel %vm1141, %v1135, %v1139
  %v1144 = vsel %vm1141, %v1129, %v1133
  %v1145 = vsel %vm1141, %v1131, %v1135
  %v1146 = vsel %vm1141, %v1125, %v1129
  %v1147 = vsel %vm1141, %v1127, %v1131
  %v1148 = vsel %vm1141, %v1137, %v1125
  %v1149 = vsel %vm1141, %v1139, %v1127
  %s1150 = sand.u32 %s1123, 1
  %v1151 = vstv %s1150
  %vm1152 = vcmp.ne.s32.totalorder %v1151, 0
  %v1153 = vsel %vm1152, %v1142, %v1148
  %v1154 = vsel %vm1152, %v1148, %v1146
  %v1155 = vsel %vm1152, %v1146, %v1144
  %v1156 = vsel %vm1152, %v1144, %v1142
  %v1157 = vsel %vm1152, %v1143, %v1149
  %v1158 = vsel %vm1152, %v1149, %v1147
  %v1159 = vsel %vm1152, %v1147, %v1145
  %v1160 = vsel %vm1152, %v1145, %v1143
  %s1161 = sand.u32 %s1123, 2
  %v1162 = vstv %s1161
  %vm1163 = vcmp.ne.s32.totalorder %v1162, 0
  %v1164 = vsel %vm1163, %v1155, %v1153
  %v1165 = vsel %vm1163, %v1156, %v1154
  %v1166 = vsel %vm1163, %v1153, %v1155
  %v1167 = vsel %vm1163, %v1154, %v1156
  %v1168 = vsel %vm1163, %v1159, %v1157
  %v1169 = vsel %vm1163, %v1160, %v1158
  %v1170 = vsel %vm1163, %v1157, %v1159
  %v1171 = vsel %vm1163, %v1158, %v1160
  %v1172 = vlaneseq
  %v1173 = vshrl.u32 %v1172, 7
  %v1174 = vsub.s32 6, %v1173
  %v1175 = vrot.slane %v642, %v1174
  %v1176 = vlaneseq
  %v1177 = vshrl.u32 %v1176, 7
  %v1178 = vsub.s32 6, %v1177
  %v1179 = vrot.slane %v643, %v1178
  %v1180 = vlaneseq
  %v1181 = vshrl.u32 %v1180, 7
  %v1182 = vsub.s32 6, %v1181
  %v1183 = vrot.slane %v644, %v1182
  %v1184 = vlaneseq
  %v1185 = vshrl.u32 %v1184, 7
  %v1186 = vsub.s32 6, %v1185
  %v1187 = vrot.slane %v645, %v1186
  %vm1188 = vcmp.eq.s32.totalorder %v1175, 1
  %vm1189 = vcmp.eq.s32.totalorder %v1179, 1
  %vm1190 = vcmp.eq.s32.totalorder %v1183, 1
  %vm1191 = vcmp.eq.s32.totalorder %v1187, 1
  %v1192 = vsel %vm1188, %v1164, -1e+30
  %v1193 = vsel %vm1189, %v1165, -1e+30
  %v1194 = vsel %vm1190, %v1166, -1e+30
  %v1195 = vsel %vm1191, %v1167, -1e+30
  %v1196 = vsel %vm1188, %v1168, -1e+30
  %v1197 = vsel %vm1189, %v1169, -1e+30
  %v1198 = vsel %vm1190, %v1170, -1e+30
  %v1199 = vsel %vm1191, %v1171, -1e+30
  %v1200 = vmax.f32 %v1100, %v1192
  %v1201 = vmax.f32 %v1101, %v1193
  %v1202 = vmax.f32 %v1102, %v1194
  %v1203 = vmax.f32 %v1103, %v1195
  %v1204 = vmax.f32 %v1104, %v1196
  %v1205 = vmax.f32 %v1105, %v1197
  %v1206 = vmax.f32 %v1106, %v1198
  %v1207 = vmax.f32 %v1107, %v1199
  %s1208 = smul.u32 %s63, 16
  %p1209 = scmp.lt.s32.totalorder %s1208, 0
  %s1210 = ssub.s32 0, %s1208
  %s1211 = scalar_select %p1209, %s1210, %s1208
  %s1212 = sand.u32 %s1211, 511
  %s1213 = ssub.s32 0, %s1212
  %s1214 = scalar_select %p1209, %s1213, %s1212
  %p1215 = scmp.ne.s32.totalorder %s1214, 0
  %p1216 = scmp.lt.s32.totalorder %s1214, 0
  %p1217 = pnand %p1216, %p1215
  %p1218 = pneg %p1217
  %s1219 = sadd.s32 %s1214, 512
  %s1220 = scalar_select %p1218, %s1219, %s1214
  %s1221 = sand.u32 %s1220, 511
  %s1222 = sand.u32 %s1221, 127
  %s1223 = sshrl.u32 %s1221, 7
  %1224 = vrot.lane.b32.xlu0 %v558, %s1222
  %v1225 = vpop.permute.xlu0 %1224
  %1226 = vrot.lane.b32.xlu0 %v562, %s1222
  %v1227 = vpop.permute.xlu0 %1226
  %1228 = vrot.lane.b32.xlu0 %v559, %s1222
  %v1229 = vpop.permute.xlu0 %1228
  %1230 = vrot.lane.b32.xlu0 %v563, %s1222
  %v1231 = vpop.permute.xlu0 %1230
  %1232 = vrot.lane.b32.xlu0 %v560, %s1222
  %v1233 = vpop.permute.xlu0 %1232
  %1234 = vrot.lane.b32.xlu0 %v564, %s1222
  %v1235 = vpop.permute.xlu0 %1234
  %1236 = vrot.lane.b32.xlu0 %v561, %s1222
  %v1237 = vpop.permute.xlu0 %1236
  %1238 = vrot.lane.b32.xlu0 %v565, %s1222
  %v1239 = vpop.permute.xlu0 %1238
  %v1240 = vstv %s1222
  %vm1241 = vcmp.lt.s32.totalorder %v58, %v1240
  %v1242 = vsel %vm1241, %v1233, %v1237
  %v1243 = vsel %vm1241, %v1235, %v1239
  %v1244 = vsel %vm1241, %v1229, %v1233
  %v1245 = vsel %vm1241, %v1231, %v1235
  %v1246 = vsel %vm1241, %v1225, %v1229
  %v1247 = vsel %vm1241, %v1227, %v1231
  %v1248 = vsel %vm1241, %v1237, %v1225
  %v1249 = vsel %vm1241, %v1239, %v1227
  %s1250 = sand.u32 %s1223, 1
  %v1251 = vstv %s1250
  %vm1252 = vcmp.ne.s32.totalorder %v1251, 0
  %v1253 = vsel %vm1252, %v1242, %v1248
  %v1254 = vsel %vm1252, %v1248, %v1246
  %v1255 = vsel %vm1252, %v1246, %v1244
  %v1256 = vsel %vm1252, %v1244, %v1242
  %v1257 = vsel %vm1252, %v1243, %v1249
  %v1258 = vsel %vm1252, %v1249, %v1247
  %v1259 = vsel %vm1252, %v1247, %v1245
  %v1260 = vsel %vm1252, %v1245, %v1243
  %s1261 = sand.u32 %s1223, 2
  %v1262 = vstv %s1261
  %vm1263 = vcmp.ne.s32.totalorder %v1262, 0
  %v1264 = vsel %vm1263, %v1255, %v1253
  %v1265 = vsel %vm1263, %v1256, %v1254
  %v1266 = vsel %vm1263, %v1253, %v1255
  %v1267 = vsel %vm1263, %v1254, %v1256
  %v1268 = vsel %vm1263, %v1259, %v1257
  %v1269 = vsel %vm1263, %v1260, %v1258
  %v1270 = vsel %vm1263, %v1257, %v1259
  %v1271 = vsel %vm1263, %v1258, %v1260
  %v1272 = vlaneseq
  %v1273 = vshrl.u32 %v1272, 7
  %v1274 = vsub.s32 7, %v1273
  %v1275 = vrot.slane %v642, %v1274
  %v1276 = vlaneseq
  %v1277 = vshrl.u32 %v1276, 7
  %v1278 = vsub.s32 7, %v1277
  %v1279 = vrot.slane %v643, %v1278
  %v1280 = vlaneseq
  %v1281 = vshrl.u32 %v1280, 7
  %v1282 = vsub.s32 7, %v1281
  %v1283 = vrot.slane %v644, %v1282
  %v1284 = vlaneseq
  %v1285 = vshrl.u32 %v1284, 7
  %v1286 = vsub.s32 7, %v1285
  %v1287 = vrot.slane %v645, %v1286
  %vm1288 = vcmp.eq.s32.totalorder %v1275, 1
  %vm1289 = vcmp.eq.s32.totalorder %v1279, 1
  %vm1290 = vcmp.eq.s32.totalorder %v1283, 1
  %vm1291 = vcmp.eq.s32.totalorder %v1287, 1
  %v1292 = vsel %vm1288, %v1264, -1e+30
  %v1293 = vsel %vm1289, %v1265, -1e+30
  %v1294 = vsel %vm1290, %v1266, -1e+30
  %v1295 = vsel %vm1291, %v1267, -1e+30
  %v1296 = vsel %vm1288, %v1268, -1e+30
  %v1297 = vsel %vm1289, %v1269, -1e+30
  %v1298 = vsel %vm1290, %v1270, -1e+30
  %v1299 = vsel %vm1291, %v1271, -1e+30
  %v1300 = vmax.f32 %v1200, %v1292
  %v1301 = vmax.f32 %v1201, %v1293
  %v1302 = vmax.f32 %v1202, %v1294
  %v1303 = vmax.f32 %v1203, %v1295
  %v1304 = vmax.f32 %v1204, %v1296
  %v1305 = vmax.f32 %v1205, %v1297
  %v1306 = vmax.f32 %v1206, %v1298
  %v1307 = vmax.f32 %v1207, %v1299
  %s1308 = smul.u32 %s63, 17
  %p1309 = scmp.lt.s32.totalorder %s1308, 0
  %s1310 = ssub.s32 0, %s1308
  %s1311 = scalar_select %p1309, %s1310, %s1308
  %s1312 = sand.u32 %s1311, 511
  %s1313 = ssub.s32 0, %s1312
  %s1314 = scalar_select %p1309, %s1313, %s1312
  %p1315 = scmp.ne.s32.totalorder %s1314, 0
  %p1316 = scmp.lt.s32.totalorder %s1314, 0
  %p1317 = pnand %p1316, %p1315
  %p1318 = pneg %p1317
  %s1319 = sadd.s32 %s1314, 512
  %s1320 = scalar_select %p1318, %s1319, %s1314
  %s1321 = sand.u32 %s1320, 511
  %s1322 = sand.u32 %s1321, 127
  %s1323 = sshrl.u32 %s1321, 7
  %1324 = vrot.lane.b32.xlu0 %v558, %s1322
  %v1325 = vpop.permute.xlu0 %1324
  %1326 = vrot.lane.b32.xlu0 %v562, %s1322
  %v1327 = vpop.permute.xlu0 %1326
  %1328 = vrot.lane.b32.xlu0 %v559, %s1322
  %v1329 = vpop.permute.xlu0 %1328
  %1330 = vrot.lane.b32.xlu0 %v563, %s1322
  %v1331 = vpop.permute.xlu0 %1330
  %1332 = vrot.lane.b32.xlu0 %v560, %s1322
  %v1333 = vpop.permute.xlu0 %1332
  %1334 = vrot.lane.b32.xlu0 %v564, %s1322
  %v1335 = vpop.permute.xlu0 %1334
  %1336 = vrot.lane.b32.xlu0 %v561, %s1322
  %v1337 = vpop.permute.xlu0 %1336
  %1338 = vrot.lane.b32.xlu0 %v565, %s1322
  %v1339 = vpop.permute.xlu0 %1338
  %v1340 = vstv %s1322
  %vm1341 = vcmp.lt.s32.totalorder %v58, %v1340
  %v1342 = vsel %vm1341, %v1333, %v1337
  %v1343 = vsel %vm1341, %v1335, %v1339
  %v1344 = vsel %vm1341, %v1329, %v1333
  %v1345 = vsel %vm1341, %v1331, %v1335
  %v1346 = vsel %vm1341, %v1325, %v1329
  %v1347 = vsel %vm1341, %v1327, %v1331
  %v1348 = vsel %vm1341, %v1337, %v1325
  %v1349 = vsel %vm1341, %v1339, %v1327
  %s1350 = sand.u32 %s1323, 1
  %v1351 = vstv %s1350
  %vm1352 = vcmp.ne.s32.totalorder %v1351, 0
  %v1353 = vsel %vm1352, %v1342, %v1348
  %v1354 = vsel %vm1352, %v1348, %v1346
  %v1355 = vsel %vm1352, %v1346, %v1344
  %v1356 = vsel %vm1352, %v1344, %v1342
  %v1357 = vsel %vm1352, %v1343, %v1349
  %v1358 = vsel %vm1352, %v1349, %v1347
  %v1359 = vsel %vm1352, %v1347, %v1345
  %v1360 = vsel %vm1352, %v1345, %v1343
  %s1361 = sand.u32 %s1323, 2
  %v1362 = vstv %s1361
  %vm1363 = vcmp.ne.s32.totalorder %v1362, 0
  %v1364 = vsel %vm1363, %v1355, %v1353
  %v1365 = vsel %vm1363, %v1356, %v1354
  %v1366 = vsel %vm1363, %v1353, %v1355
  %v1367 = vsel %vm1363, %v1354, %v1356
  %v1368 = vsel %vm1363, %v1359, %v1357
  %v1369 = vsel %vm1363, %v1360, %v1358
  %v1370 = vsel %vm1363, %v1357, %v1359
  %v1371 = vsel %vm1363, %v1358, %v1360
  %vm1372 = vcmp.gt.f32.partialorder %v570, 0.5
  %vm1373 = vcmp.gt.f32.partialorder %v571, 0.5
  %vm1374 = vcmp.gt.f32.partialorder %v572, 0.5
  %vm1375 = vcmp.gt.f32.partialorder %v573, 0.5
  %v1376 = vsel %vm1372, 1, 0
  %v1377 = vsel %vm1373, 1, 0
  %v1378 = vsel %vm1374, 1, 0
  %v1379 = vsel %vm1375, 1, 0
  %v1380 = vlaneseq
  %v1381 = vshrl.u32 %v1380, 7
  %v1382 = vsub.s32 0, %v1381
  %v1383 = vrot.slane %v1376, %v1382
  %v1384 = vlaneseq
  %v1385 = vshrl.u32 %v1384, 7
  %v1386 = vsub.s32 0, %v1385
  %v1387 = vrot.slane %v1377, %v1386
  %v1388 = vlaneseq
  %v1389 = vshrl.u32 %v1388, 7
  %v1390 = vsub.s32 0, %v1389
  %v1391 = vrot.slane %v1378, %v1390
  %v1392 = vlaneseq
  %v1393 = vshrl.u32 %v1392, 7
  %v1394 = vsub.s32 0, %v1393
  %v1395 = vrot.slane %v1379, %v1394
  %vm1396 = vcmp.eq.s32.totalorder %v1383, 1
  %vm1397 = vcmp.eq.s32.totalorder %v1387, 1
  %vm1398 = vcmp.eq.s32.totalorder %v1391, 1
  %vm1399 = vcmp.eq.s32.totalorder %v1395, 1
  %v1400 = vsel %vm1396, %v1364, -1e+30
  %v1401 = vsel %vm1397, %v1365, -1e+30
  %v1402 = vsel %vm1398, %v1366, -1e+30
  %v1403 = vsel %vm1399, %v1367, -1e+30
  %v1404 = vsel %vm1396, %v1368, -1e+30
  %v1405 = vsel %vm1397, %v1369, -1e+30
  %v1406 = vsel %vm1398, %v1370, -1e+30
  %v1407 = vsel %vm1399, %v1371, -1e+30
  %v1408 = vmax.f32 %v1300, %v1400
  %v1409 = vmax.f32 %v1301, %v1401
  %v1410 = vmax.f32 %v1302, %v1402
  %v1411 = vmax.f32 %v1303, %v1403
  %v1412 = vmax.f32 %v1304, %v1404
  %v1413 = vmax.f32 %v1305, %v1405
  %v1414 = vmax.f32 %v1306, %v1406
  %v1415 = vmax.f32 %v1307, %v1407
  %v1416 = vpack.c.bf16 %v1412, %v1408
  %v1417 = vpack.c.bf16 %v1413, %v1409
  %v1418 = vpack.c.bf16 %v1414, %v1410
  %v1419 = vpack.c.bf16 %v1415, %v1411
  %v1420 = vld [vmem:[%s4] sm:$0xf]
  %v1421 = vld [vmem:[%s4 + $0x4] sm:$0xf]
  %v1422 = vld [vmem:[%s4 + $0x8] sm:$0xf]
  %v1423 = vld [vmem:[%s4 + $0xc] sm:$0xf]
  %v1424 = vld [vmem:[%s4 + $0x10] sm:$0xf]
  %v1425 = vld [vmem:[%s4 + $0x14] sm:$0xf]
  %v1426 = vld [vmem:[%s4 + $0x18] sm:$0xf]
  %v1427 = vld [vmem:[%s4 + $0x1c] sm:$0xf]
  %v1428 = vld [vmem:[%s4 + $0x20] sm:$0xf]
  %v1429 = vld [vmem:[%s4 + $0x24] sm:$0xf]
  %v1430 = vld [vmem:[%s4 + $0x28] sm:$0xf]
  %v1431 = vld [vmem:[%s4 + $0x2c] sm:$0xf]
  %v1432 = vld [vmem:[%s4 + $0x30] sm:$0xf]
  %v1433 = vld [vmem:[%s4 + $0x34] sm:$0xf]
  %v1434 = vld [vmem:[%s4 + $0x38] sm:$0xf]
  %v1435 = vld [vmem:[%s4 + $0x3c] sm:$0xf]
  %v1436 = vld [vmem:[%s4 + $0x40] sm:$0xf]
  %v1437 = vld [vmem:[%s4 + $0x44] sm:$0xf]
  %v1438 = vld [vmem:[%s4 + $0x48] sm:$0xf]
  %v1439 = vld [vmem:[%s4 + $0x4c] sm:$0xf]
  %v1440 = vld [vmem:[%s4 + $0x50] sm:$0xf]
  %v1441 = vld [vmem:[%s4 + $0x54] sm:$0xf]
  %v1442 = vld [vmem:[%s4 + $0x58] sm:$0xf]
  %v1443 = vld [vmem:[%s4 + $0x5c] sm:$0xf]
  %v1444 = vld [vmem:[%s4 + $0x60] sm:$0xf]
  %v1445 = vld [vmem:[%s4 + $0x64] sm:$0xf]
  %v1446 = vld [vmem:[%s4 + $0x68] sm:$0xf]
  %v1447 = vld [vmem:[%s4 + $0x6c] sm:$0xf]
  %v1448 = vld [vmem:[%s4 + $0x70] sm:$0xf]
  %v1449 = vld [vmem:[%s4 + $0x74] sm:$0xf]
  %v1450 = vld [vmem:[%s4 + $0x78] sm:$0xf]
  %v1451 = vld [vmem:[%s4 + $0x7c] sm:$0xf]
  %v1452 = vld [vmem:[%s4 + $0x80] sm:$0xf]
  %v1453 = vld [vmem:[%s4 + $0x84] sm:$0xf]
  %v1454 = vld [vmem:[%s4 + $0x88] sm:$0xf]
  %v1455 = vld [vmem:[%s4 + $0x8c] sm:$0xf]
  %v1456 = vld [vmem:[%s4 + $0x90] sm:$0xf]
  %v1457 = vld [vmem:[%s4 + $0x94] sm:$0xf]
  %v1458 = vld [vmem:[%s4 + $0x98] sm:$0xf]
  %v1459 = vld [vmem:[%s4 + $0x9c] sm:$0xf]
  %v1460 = vld [vmem:[%s4 + $0xa0] sm:$0xf]
  %v1461 = vld [vmem:[%s4 + $0xa4] sm:$0xf]
  %v1462 = vld [vmem:[%s4 + $0xa8] sm:$0xf]
  %v1463 = vld [vmem:[%s4 + $0xac] sm:$0xf]
  %v1464 = vld [vmem:[%s4 + $0xb0] sm:$0xf]
  %v1465 = vld [vmem:[%s4 + $0xb4] sm:$0xf]
  %v1466 = vld [vmem:[%s4 + $0xb8] sm:$0xf]
  %v1467 = vld [vmem:[%s4 + $0xbc] sm:$0xf]
  %v1468 = vld [vmem:[%s4 + $0xc0] sm:$0xf]
  %v1469 = vld [vmem:[%s4 + $0xc4] sm:$0xf]
  %v1470 = vld [vmem:[%s4 + $0xc8] sm:$0xf]
  %v1471 = vld [vmem:[%s4 + $0xcc] sm:$0xf]
  %v1472 = vld [vmem:[%s4 + $0xd0] sm:$0xf]
  %v1473 = vld [vmem:[%s4 + $0xd4] sm:$0xf]
  %v1474 = vld [vmem:[%s4 + $0xd8] sm:$0xf]
  %v1475 = vld [vmem:[%s4 + $0xdc] sm:$0xf]
  %v1476 = vld [vmem:[%s4 + $0xe0] sm:$0xf]
  %v1477 = vld [vmem:[%s4 + $0xe4] sm:$0xf]
  %v1478 = vld [vmem:[%s4 + $0xe8] sm:$0xf]
  %v1479 = vld [vmem:[%s4 + $0xec] sm:$0xf]
  %v1480 = vld [vmem:[%s4 + $0xf0] sm:$0xf]
  %v1481 = vld [vmem:[%s4 + $0xf4] sm:$0xf]
  %v1482 = vld [vmem:[%s4 + $0xf8] sm:$0xf]
  %v1483 = vld [vmem:[%s4 + $0xfc] sm:$0xf]
  %v1548 = vunpack.c.l.b16 %v1420
  %v1549 = vunpack.c.l.b16 %v1421
  %v1550 = vunpack.c.l.b16 %v1422
  %v1551 = vunpack.c.l.b16 %v1423
  %v1552 = vunpack.c.l.b16 %v1424
  %v1553 = vunpack.c.l.b16 %v1425
  %v1554 = vunpack.c.l.b16 %v1426
  %v1555 = vunpack.c.l.b16 %v1427
  %v1556 = vunpack.c.l.b16 %v1428
  %v1557 = vunpack.c.l.b16 %v1429
  %v1558 = vunpack.c.l.b16 %v1430
  %v1559 = vunpack.c.l.b16 %v1431
  %v1560 = vunpack.c.l.b16 %v1432
  %v1561 = vunpack.c.l.b16 %v1433
  %v1562 = vunpack.c.l.b16 %v1434
  %v1563 = vunpack.c.l.b16 %v1435
  %v1564 = vunpack.c.l.b16 %v1436
  %v1565 = vunpack.c.l.b16 %v1437
  %v1566 = vunpack.c.l.b16 %v1438
  %v1567 = vunpack.c.l.b16 %v1439
  %v1568 = vunpack.c.l.b16 %v1440
  %v1569 = vunpack.c.l.b16 %v1441
  %v1570 = vunpack.c.l.b16 %v1442
  %v1571 = vunpack.c.l.b16 %v1443
  %v1572 = vunpack.c.l.b16 %v1444
  %v1573 = vunpack.c.l.b16 %v1445
  %v1574 = vunpack.c.l.b16 %v1446
  %v1575 = vunpack.c.l.b16 %v1447
  %v1576 = vunpack.c.l.b16 %v1448
  %v1577 = vunpack.c.l.b16 %v1449
  %v1578 = vunpack.c.l.b16 %v1450
  %v1579 = vunpack.c.l.b16 %v1451
  %v1580 = vunpack.c.l.b16 %v1452
  %v1581 = vunpack.c.l.b16 %v1453
  %v1582 = vunpack.c.l.b16 %v1454
  %v1583 = vunpack.c.l.b16 %v1455
  %v1584 = vunpack.c.l.b16 %v1456
  %v1585 = vunpack.c.l.b16 %v1457
  %v1586 = vunpack.c.l.b16 %v1458
  %v1587 = vunpack.c.l.b16 %v1459
  %v1588 = vunpack.c.l.b16 %v1460
  %v1589 = vunpack.c.l.b16 %v1461
  %v1590 = vunpack.c.l.b16 %v1462
  %v1591 = vunpack.c.l.b16 %v1463
  %v1592 = vunpack.c.l.b16 %v1464
  %v1593 = vunpack.c.l.b16 %v1465
  %v1594 = vunpack.c.l.b16 %v1466
  %v1595 = vunpack.c.l.b16 %v1467
  %v1596 = vunpack.c.l.b16 %v1468
  %v1597 = vunpack.c.l.b16 %v1469
  %v1598 = vunpack.c.l.b16 %v1470
  %v1599 = vunpack.c.l.b16 %v1471
  %v1600 = vunpack.c.l.b16 %v1472
  %v1601 = vunpack.c.l.b16 %v1473
  %v1602 = vunpack.c.l.b16 %v1474
  %v1603 = vunpack.c.l.b16 %v1475
  %v1604 = vunpack.c.l.b16 %v1476
  %v1605 = vunpack.c.l.b16 %v1477
  %v1606 = vunpack.c.l.b16 %v1478
  %v1607 = vunpack.c.l.b16 %v1479
  %v1608 = vunpack.c.l.b16 %v1480
  %v1609 = vunpack.c.l.b16 %v1481
  %v1610 = vunpack.c.l.b16 %v1482
  %v1611 = vunpack.c.l.b16 %v1483
  %v1612 = vpack.c.b16 %v1549, %v1548
  %v1613 = vpack.c.b16 %v1551, %v1550
  %v1614 = vpack.c.b16 %v1553, %v1552
  %v1615 = vpack.c.b16 %v1555, %v1554
  %v1616 = vpack.c.b16 %v1557, %v1556
  %v1617 = vpack.c.b16 %v1559, %v1558
  %v1618 = vpack.c.b16 %v1561, %v1560
  %v1619 = vpack.c.b16 %v1563, %v1562
  %v1620 = vpack.c.b16 %v1565, %v1564
  %v1621 = vpack.c.b16 %v1567, %v1566
  %v1622 = vpack.c.b16 %v1569, %v1568
  %v1623 = vpack.c.b16 %v1571, %v1570
  %v1624 = vpack.c.b16 %v1573, %v1572
  %v1625 = vpack.c.b16 %v1575, %v1574
  %v1626 = vpack.c.b16 %v1577, %v1576
  %v1627 = vpack.c.b16 %v1579, %v1578
  %v1628 = vpack.c.b16 %v1581, %v1580
  %v1629 = vpack.c.b16 %v1583, %v1582
  %v1630 = vpack.c.b16 %v1585, %v1584
  %v1631 = vpack.c.b16 %v1587, %v1586
  %v1632 = vpack.c.b16 %v1589, %v1588
  %v1633 = vpack.c.b16 %v1591, %v1590
  %v1634 = vpack.c.b16 %v1593, %v1592
  %v1635 = vpack.c.b16 %v1595, %v1594
  %v1636 = vpack.c.b16 %v1597, %v1596
  %v1637 = vpack.c.b16 %v1599, %v1598
  %v1638 = vpack.c.b16 %v1601, %v1600
  %v1639 = vpack.c.b16 %v1603, %v1602
  %v1640 = vpack.c.b16 %v1605, %v1604
  %v1641 = vpack.c.b16 %v1607, %v1606
  %v1642 = vpack.c.b16 %v1609, %v1608
  %v1643 = vpack.c.b16 %v1611, %v1610
  %1676 = vmatprep.subr.bf16.mxu0 0
  %1677 = vmatpush1.bf16.msra.mxu0 %v1619
  %1678 = vmatprep.subr.bf16.mxu0 0
  %1679 = vmatpush1.bf16.msra.mxu0 %v1618
  %1680 = vmatprep.subr.bf16.mxu0 0
  %1681 = vmatpush1.bf16.msra.mxu0 %v1617
  %1682 = vmatprep.subr.bf16.mxu0 0
  %1683 = vmatpush1.bf16.msra.mxu0 %v1616
  %1684 = vmatprep.subr.bf16.mxu0 0
  %1685 = vmatpush1.bf16.msra.mxu0 %v1615
  %1686 = vmatprep.subr.bf16.mxu0 0
  %1687 = vmatpush1.bf16.msra.mxu0 %v1614
  %1688 = vmatprep.subr.bf16.mxu0 0
  %1689 = vmatpush1.bf16.msra.mxu0 %v1613
  %1690 = vmatprep.subr.bf16.mxu0 0
  %1691 = vmatpush1.bf16.msra.mxu0 %v1612
  %1692 = vmatprep.subr.bf16.mxu0 0
  %1693 = vmatpush2.bf16.msra.mxu0 %v1627
  %1694 = vmatprep.subr.bf16.mxu0 0
  %1695 = vmatpush2.bf16.msra.mxu0 %v1626
  %1696 = vmatprep.subr.bf16.mxu0 0
  %1697 = vmatpush2.bf16.msra.mxu0 %v1625
  %1698 = vmatprep.subr.bf16.mxu0 0
  %1699 = vmatpush2.bf16.msra.mxu0 %v1624
  %1700 = vmatprep.subr.bf16.mxu0 0
  %1701 = vmatpush2.bf16.msra.mxu0 %v1623
  %1702 = vmatprep.subr.bf16.mxu0 0
  %1703 = vmatpush2.bf16.msra.mxu0 %v1622
  %1704 = vmatprep.subr.bf16.mxu0 0
  %1705 = vmatpush2.bf16.msra.mxu0 %v1621
  %1706 = vmatprep.subr.bf16.mxu0 0
  %1707 = vmatpush2.bf16.msra.mxu0 %v1620
  %1708 = vmatprep.mubr.bf16.mxu0 %v1417
  %1709 = vmatmul.mubr.bf16.gmra.mxu0 %v1416
  %v1710 = vpop.f32.mrf.mxu0
  %v1711 = vadd.f32 0.0, %v1710
  %v1712 = vpop.f32.mrf.mxu0
  %v1713 = vpop.f32.mrf.mxu0
  %v1714 = vadd.f32 0.0, %v1713
  %v1715 = vpop.f32.mrf.mxu0
  %1716 = vdwg.mxu0
  %1717 = vmatprep.subr.bf16.mxu0 0
  %1718 = vmatpush1.bf16.msra.mxu0 %v1635
  %1719 = vmatprep.subr.bf16.mxu0 0
  %1720 = vmatpush1.bf16.msra.mxu0 %v1634
  %1721 = vmatprep.subr.bf16.mxu0 0
  %1722 = vmatpush1.bf16.msra.mxu0 %v1633
  %1723 = vmatprep.subr.bf16.mxu0 0
  %1724 = vmatpush1.bf16.msra.mxu0 %v1632
  %1725 = vmatprep.subr.bf16.mxu0 0
  %1726 = vmatpush1.bf16.msra.mxu0 %v1631
  %1727 = vmatprep.subr.bf16.mxu0 0
  %1728 = vmatpush1.bf16.msra.mxu0 %v1630
  %1729 = vmatprep.subr.bf16.mxu0 0
  %1730 = vmatpush1.bf16.msra.mxu0 %v1629
  %1731 = vmatprep.subr.bf16.mxu0 0
  %1732 = vmatpush1.bf16.msra.mxu0 %v1628
  %1733 = vmatprep.subr.bf16.mxu0 0
  %1734 = vmatpush2.bf16.msra.mxu0 %v1643
  %1735 = vmatprep.subr.bf16.mxu0 0
  %1736 = vmatpush2.bf16.msra.mxu0 %v1642
  %1737 = vmatprep.subr.bf16.mxu0 0
  %1738 = vmatpush2.bf16.msra.mxu0 %v1641
  %1739 = vmatprep.subr.bf16.mxu0 0
  %1740 = vmatpush2.bf16.msra.mxu0 %v1640
  %1741 = vmatprep.subr.bf16.mxu0 0
  %1742 = vmatpush2.bf16.msra.mxu0 %v1639
  %1743 = vmatprep.subr.bf16.mxu0 0
  %1744 = vmatpush2.bf16.msra.mxu0 %v1638
  %1745 = vmatprep.subr.bf16.mxu0 0
  %1746 = vmatpush2.bf16.msra.mxu0 %v1637
  %1747 = vmatprep.subr.bf16.mxu0 0
  %1748 = vmatpush2.bf16.msra.mxu0 %v1636
  %1749 = vmatprep.mubr.bf16.mxu0 %v1419
  %1750 = vmatmul.mubr.bf16.gmra.mxu0 %v1418
  %v1751 = vpop.f32.mrf.mxu0
  %v1752 = vadd.f32 %v1711, %v1751
  %v1753 = vpop.f32.mrf.mxu0
  %v1754 = vpop.f32.mrf.mxu0
  %v1755 = vadd.f32 %v1714, %v1754
  %v1756 = vpop.f32.mrf.mxu0
  %1757 = vdwg.mxu0
  %v1758 = vpack.c.bf16 %v1755, %v1752
  %v1759 = vld [vmem:[%s5] sm:$0xf]
  %v1760 = vld [vmem:[%s6] sm:$0xff]
  %1762 = vset.pattern.permute.xlu0 0
  %1763 = vperm.xlu0 %1762, %v1760
  %v1764 = vpop.permute.xlu0 %1763
  %vm1766 = vcmask 130048
  %v1768 = vsel %vm1766, %v1759, 0
  %1770 = vmatprep.subr.bf16.mxu0 0
  %1771 = vmatpush1.bf16.msra.mxu0 0
  %1772 = vmatprep.subr.bf16.mxu0 0
  %1773 = vmatpush1.bf16.msra.mxu0 0
  %1774 = vmatprep.subr.bf16.mxu0 0
  %1775 = vmatpush1.bf16.msra.mxu0 0
  %1776 = vmatprep.subr.bf16.mxu0 0
  %1777 = vmatpush1.bf16.msra.mxu0 0
  %1778 = vmatprep.subr.bf16.mxu0 0
  %1779 = vmatpush1.bf16.msra.mxu0 0
  %1780 = vmatprep.subr.bf16.mxu0 0
  %1781 = vmatpush1.bf16.msra.mxu0 0
  %1782 = vmatprep.subr.bf16.mxu0 0
  %1783 = vmatpush1.bf16.msra.mxu0 0
  %1784 = vmatprep.subr.bf16.mxu0 0
  %1785 = vmatpush1.bf16.msra.mxu0 %v1758
  %1786 = vmatprep.subr.bf16.mxu0 0
  %1787 = vmatpush2.bf16.msra.mxu0 0
  %1788 = vmatprep.subr.bf16.mxu0 0
  %1789 = vmatpush2.bf16.msra.mxu0 0
  %1790 = vmatprep.subr.bf16.mxu0 0
  %1791 = vmatpush2.bf16.msra.mxu0 0
  %1792 = vmatprep.subr.bf16.mxu0 0
  %1793 = vmatpush2.bf16.msra.mxu0 0
  %1794 = vmatprep.subr.bf16.mxu0 0
  %1795 = vmatpush2.bf16.msra.mxu0 0
  %1796 = vmatprep.subr.bf16.mxu0 0
  %1797 = vmatpush2.bf16.msra.mxu0 0
  %1798 = vmatprep.subr.bf16.mxu0 0
  %1799 = vmatpush2.bf16.msra.mxu0 0
  %1800 = vmatprep.subr.bf16.mxu0 0
  %1801 = vmatpush2.bf16.msra.mxu0 0
  %1802 = vmatprep.mubr.bf16.mxu0 0
  %1803 = vmatmul.mubr.bf16.gmra.mxu0 %v1768
  %v1804 = vpop.f32.mrf.mxu0
  %v1805 = vadd.f32 %v1764, %v1804
  %v1806 = vpop.f32.mrf.mxu0
  %v1807 = vpop.f32.mrf.mxu0
  %v1808 = vpop.f32.mrf.mxu0
  %1809 = vdwg.mxu0
  %v1810 = vmax.f32 %v1805, 0.0
  %v1811 = vld [vmem:[%s7] sm:$0xf]
  %v1812 = vld [vmem:[%s7 + $0x4] sm:$0xf]
  %v1813 = vld [vmem:[%s7 + $0x8] sm:$0xf]
  %v1814 = vld [vmem:[%s7 + $0xc] sm:$0xf]
  %v1815 = vld [vmem:[%s7 + $0x10] sm:$0xf]
  %v1816 = vld [vmem:[%s7 + $0x14] sm:$0xf]
  %v1817 = vld [vmem:[%s7 + $0x18] sm:$0xf]
  %v1818 = vld [vmem:[%s7 + $0x1c] sm:$0xf]
  %v1819 = vld [vmem:[%s7 + $0x20] sm:$0xf]
  %v1820 = vld [vmem:[%s9] sm:$0xff]
  %v1821 = vld [vmem:[%s9 + $0x8] sm:$0x1]
  %s1822 = smul.u32 %s63, 4294967287
  %p1823 = scmp.lt.s32.totalorder %s1822, 0
  %s1824 = ssub.s32 0, %s1822
  %s1825 = scalar_select %p1823, %s1824, %s1822
  %s1826 = sand.u32 %s1825, 127
  %s1827 = ssub.s32 0, %s1826
  %s1828 = scalar_select %p1823, %s1827, %s1826
  %p1829 = scmp.ne.s32.totalorder %s1828, 0
  %p1830 = scmp.lt.s32.totalorder %s1828, 0
  %p1831 = pnand %p1830, %p1829
  %p1832 = pneg %p1831
  %s1833 = sadd.s32 %s1828, 128
  %s1834 = scalar_select %p1832, %s1833, %s1828
  %s1835 = sand.u32 %s1834, 127
  %s1836 = sand.u32 %s1835, 127
  %1837 = vrot.lane.b32.xlu0 %v1810, %s1836
  %v1838 = vpop.permute.xlu0 %1837
  %v1839 = vlaneseq
  %v1840 = vshrl.u32 %v1839, 7
  %v1841 = vsub.s32 0, %v1840
  %v1842 = vrot.slane %v1820, %v1841
  %v1843 = vmul.f32 %v1838, %v1842
  %v1844 = vpack.c.bf16 %v1843, %v1843
  %s1845 = smul.u32 %s63, 4294967288
  %p1846 = scmp.lt.s32.totalorder %s1845, 0
  %s1847 = ssub.s32 0, %s1845
  %s1848 = scalar_select %p1846, %s1847, %s1845
  %s1849 = sand.u32 %s1848, 127
  %s1850 = ssub.s32 0, %s1849
  %s1851 = scalar_select %p1846, %s1850, %s1849
  %p1852 = scmp.ne.s32.totalorder %s1851, 0
  %p1853 = scmp.lt.s32.totalorder %s1851, 0
  %p1854 = pnand %p1853, %p1852
  %p1855 = pneg %p1854
  %s1856 = sadd.s32 %s1851, 128
  %s1857 = scalar_select %p1855, %s1856, %s1851
  %s1858 = sand.u32 %s1857, 127
  %s1859 = sand.u32 %s1858, 127
  %1860 = vrot.lane.b32.xlu0 %v1810, %s1859
  %v1861 = vpop.permute.xlu0 %1860
  %v1862 = vlaneseq
  %v1863 = vshrl.u32 %v1862, 7
  %v1864 = vsub.s32 1, %v1863
  %v1865 = vrot.slane %v1820, %v1864
  %v1866 = vmul.f32 %v1861, %v1865
  %v1867 = vpack.c.bf16 %v1866, %v1866
  %vm1868 = vcmask 64512
  %v1870 = vsel %vm1868, %v1812, 0
  %vm1872 = vcmask 1043456
  %v1874 = vsel %vm1872, %v1867, 0
  %1876 = vmatprep.subr.bf16.mxu0 0
  %1877 = vmatpush1.bf16.msra.mxu0 0
  %1878 = vmatprep.subr.bf16.mxu0 0
  %1879 = vmatpush1.bf16.msra.mxu0 0
  %1880 = vmatprep.subr.bf16.mxu0 0
  %1881 = vmatpush1.bf16.msra.mxu0 0
  %1882 = vmatprep.subr.bf16.mxu0 0
  %1883 = vmatpush1.bf16.msra.mxu0 0
  %1884 = vmatprep.subr.bf16.mxu0 0
  %1885 = vmatpush1.bf16.msra.mxu0 0
  %1886 = vmatprep.subr.bf16.mxu0 0
  %1887 = vmatpush1.bf16.msra.mxu0 0
  %1888 = vmatprep.subr.bf16.mxu0 0
  %1889 = vmatpush1.bf16.msra.mxu0 0
  %1890 = vmatprep.subr.bf16.mxu0 0
  %1891 = vmatpush1.bf16.msra.mxu0 %v1874
  %1892 = vmatprep.subr.bf16.mxu0 0
  %1893 = vmatpush2.bf16.msra.mxu0 0
  %1894 = vmatprep.subr.bf16.mxu0 0
  %1895 = vmatpush2.bf16.msra.mxu0 0
  %1896 = vmatprep.subr.bf16.mxu0 0
  %1897 = vmatpush2.bf16.msra.mxu0 0
  %1898 = vmatprep.subr.bf16.mxu0 0
  %1899 = vmatpush2.bf16.msra.mxu0 0
  %1900 = vmatprep.subr.bf16.mxu0 0
  %1901 = vmatpush2.bf16.msra.mxu0 0
  %1902 = vmatprep.subr.bf16.mxu0 0
  %1903 = vmatpush2.bf16.msra.mxu0 0
  %1904 = vmatprep.subr.bf16.mxu0 0
  %1905 = vmatpush2.bf16.msra.mxu0 0
  %1906 = vmatprep.subr.bf16.mxu0 0
  %1907 = vmatpush2.bf16.msra.mxu0 0
  %1908 = vmatprep.mubr.bf16.mxu0 0
  %1909 = vmatmul.mubr.bf16.gmra.mxu0 %v1870
  %v1910 = vpop.f32.mrf.mxu0
  %v1911 = vadd.f32 0.0, %v1910
  %v1912 = vpop.f32.mrf.mxu0
  %v1913 = vpop.f32.mrf.mxu0
  %v1914 = vpop.f32.mrf.mxu0
  %1915 = vdwg.mxu0
  %v1917 = vsel %vm1868, %v1811, 0
  %v1920 = vsel %vm1872, %v1844, 0
  %1922 = vmatprep.subr.bf16.mxu0 0
  %1923 = vmatpush1.bf16.msra.mxu0 0
  %1924 = vmatprep.subr.bf16.mxu0 0
  %1925 = vmatpush1.bf16.msra.mxu0 0
  %1926 = vmatprep.subr.bf16.mxu0 0
  %1927 = vmatpush1.bf16.msra.mxu0 0
  %1928 = vmatprep.subr.bf16.mxu0 0
  %1929 = vmatpush1.bf16.msra.mxu0 0
  %1930 = vmatprep.subr.bf16.mxu0 0
  %1931 = vmatpush1.bf16.msra.mxu0 0
  %1932 = vmatprep.subr.bf16.mxu0 0
  %1933 = vmatpush1.bf16.msra.mxu0 0
  %1934 = vmatprep.subr.bf16.mxu0 0
  %1935 = vmatpush1.bf16.msra.mxu0 0
  %1936 = vmatprep.subr.bf16.mxu0 0
  %1937 = vmatpush1.bf16.msra.mxu0 %v1920
  %1938 = vmatprep.subr.bf16.mxu0 0
  %1939 = vmatpush2.bf16.msra.mxu0 0
  %1940 = vmatprep.subr.bf16.mxu0 0
  %1941 = vmatpush2.bf16.msra.mxu0 0
  %1942 = vmatprep.subr.bf16.mxu0 0
  %1943 = vmatpush2.bf16.msra.mxu0 0
  %1944 = vmatprep.subr.bf16.mxu0 0
  %1945 = vmatpush2.bf16.msra.mxu0 0
  %1946 = vmatprep.subr.bf16.mxu0 0
  %1947 = vmatpush2.bf16.msra.mxu0 0
  %1948 = vmatprep.subr.bf16.mxu0 0
  %1949 = vmatpush2.bf16.msra.mxu0 0
  %1950 = vmatprep.subr.bf16.mxu0 0
  %1951 = vmatpush2.bf16.msra.mxu0 0
  %1952 = vmatprep.subr.bf16.mxu0 0
  %1953 = vmatpush2.bf16.msra.mxu0 0
  %1954 = vmatprep.mubr.bf16.mxu0 0
  %1955 = vmatmul.mubr.bf16.gmra.mxu0 %v1917
  %v1956 = vpop.f32.mrf.mxu0
  %v1957 = vadd.f32 %v1911, %v1956
  %v1958 = vpop.f32.mrf.mxu0
  %v1959 = vpop.f32.mrf.mxu0
  %v1960 = vpop.f32.mrf.mxu0
  %1961 = vdwg.mxu0
  %s1962 = smul.u32 %s63, 4294967289
  %p1963 = scmp.lt.s32.totalorder %s1962, 0
  %s1964 = ssub.s32 0, %s1962
  %s1965 = scalar_select %p1963, %s1964, %s1962
  %s1966 = sand.u32 %s1965, 127
  %s1967 = ssub.s32 0, %s1966
  %s1968 = scalar_select %p1963, %s1967, %s1966
  %p1969 = scmp.ne.s32.totalorder %s1968, 0
  %p1970 = scmp.lt.s32.totalorder %s1968, 0
  %p1971 = pnand %p1970, %p1969
  %p1972 = pneg %p1971
  %s1973 = sadd.s32 %s1968, 128
  %s1974 = scalar_select %p1972, %s1973, %s1968
  %s1975 = sand.u32 %s1974, 127
  %s1976 = sand.u32 %s1975, 127
  %1977 = vrot.lane.b32.xlu0 %v1810, %s1976
  %v1978 = vpop.permute.xlu0 %1977
  %v1979 = vlaneseq
  %v1980 = vshrl.u32 %v1979, 7
  %v1981 = vsub.s32 2, %v1980
  %v1982 = vrot.slane %v1820, %v1981
  %v1983 = vmul.f32 %v1978, %v1982
  %v1984 = vpack.c.bf16 %v1983, %v1983
  %v1986 = vsel %vm1868, %v1813, 0
  %v1989 = vsel %vm1872, %v1984, 0
  %1991 = vmatprep.subr.bf16.mxu0 0
  %1992 = vmatpush1.bf16.msra.mxu0 0
  %1993 = vmatprep.subr.bf16.mxu0 0
  %1994 = vmatpush1.bf16.msra.mxu0 0
  %1995 = vmatprep.subr.bf16.mxu0 0
  %1996 = vmatpush1.bf16.msra.mxu0 0
  %1997 = vmatprep.subr.bf16.mxu0 0
  %1998 = vmatpush1.bf16.msra.mxu0 0
  %1999 = vmatprep.subr.bf16.mxu0 0
  %2000 = vmatpush1.bf16.msra.mxu0 0
  %2001 = vmatprep.subr.bf16.mxu0 0
  %2002 = vmatpush1.bf16.msra.mxu0 0
  %2003 = vmatprep.subr.bf16.mxu0 0
  %2004 = vmatpush1.bf16.msra.mxu0 0
  %2005 = vmatprep.subr.bf16.mxu0 0
  %2006 = vmatpush1.bf16.msra.mxu0 %v1989
  %2007 = vmatprep.subr.bf16.mxu0 0
  %2008 = vmatpush2.bf16.msra.mxu0 0
  %2009 = vmatprep.subr.bf16.mxu0 0
  %2010 = vmatpush2.bf16.msra.mxu0 0
  %2011 = vmatprep.subr.bf16.mxu0 0
  %2012 = vmatpush2.bf16.msra.mxu0 0
  %2013 = vmatprep.subr.bf16.mxu0 0
  %2014 = vmatpush2.bf16.msra.mxu0 0
  %2015 = vmatprep.subr.bf16.mxu0 0
  %2016 = vmatpush2.bf16.msra.mxu0 0
  %2017 = vmatprep.subr.bf16.mxu0 0
  %2018 = vmatpush2.bf16.msra.mxu0 0
  %2019 = vmatprep.subr.bf16.mxu0 0
  %2020 = vmatpush2.bf16.msra.mxu0 0
  %2021 = vmatprep.subr.bf16.mxu0 0
  %2022 = vmatpush2.bf16.msra.mxu0 0
  %2023 = vmatprep.mubr.bf16.mxu0 0
  %2024 = vmatmul.mubr.bf16.gmra.mxu0 %v1986
  %v2025 = vpop.f32.mrf.mxu0
  %v2026 = vadd.f32 0.0, %v2025
  %v2027 = vpop.f32.mrf.mxu0
  %v2028 = vpop.f32.mrf.mxu0
  %v2029 = vpop.f32.mrf.mxu0
  %2030 = vdwg.mxu0
  %v2031 = vadd.f32 %v1957, %v2026
  %p2032 = scmp.lt.s32.totalorder %s874, 0
  %s2033 = ssub.s32 0, %s874
  %s2034 = scalar_select %p2032, %s2033, %s874
  %s2035 = sand.u32 %s2034, 127
  %s2036 = ssub.s32 0, %s2035
  %s2037 = scalar_select %p2032, %s2036, %s2035
  %p2038 = scmp.ne.s32.totalorder %s2037, 0
  %p2039 = scmp.lt.s32.totalorder %s2037, 0
  %p2040 = pnand %p2039, %p2038
  %p2041 = pneg %p2040
  %s2042 = sadd.s32 %s2037, 128
  %s2043 = scalar_select %p2041, %s2042, %s2037
  %s2044 = sand.u32 %s2043, 127
  %s2045 = sand.u32 %s2044, 127
  %2046 = vrot.lane.b32.xlu0 %v1810, %s2045
  %v2047 = vpop.permute.xlu0 %2046
  %v2048 = vlaneseq
  %v2049 = vshrl.u32 %v2048, 7
  %v2050 = vsub.s32 3, %v2049
  %v2051 = vrot.slane %v1820, %v2050
  %v2052 = vmul.f32 %v2047, %v2051
  %v2053 = vpack.c.bf16 %v2052, %v2052
  %v2055 = vsel %vm1868, %v1814, 0
  %v2058 = vsel %vm1872, %v2053, 0
  %2060 = vmatprep.subr.bf16.mxu0 0
  %2061 = vmatpush1.bf16.msra.mxu0 0
  %2062 = vmatprep.subr.bf16.mxu0 0
  %2063 = vmatpush1.bf16.msra.mxu0 0
  %2064 = vmatprep.subr.bf16.mxu0 0
  %2065 = vmatpush1.bf16.msra.mxu0 0
  %2066 = vmatprep.subr.bf16.mxu0 0
  %2067 = vmatpush1.bf16.msra.mxu0 0
  %2068 = vmatprep.subr.bf16.mxu0 0
  %2069 = vmatpush1.bf16.msra.mxu0 0
  %2070 = vmatprep.subr.bf16.mxu0 0
  %2071 = vmatpush1.bf16.msra.mxu0 0
  %2072 = vmatprep.subr.bf16.mxu0 0
  %2073 = vmatpush1.bf16.msra.mxu0 0
  %2074 = vmatprep.subr.bf16.mxu0 0
  %2075 = vmatpush1.bf16.msra.mxu0 %v2058
  %2076 = vmatprep.subr.bf16.mxu0 0
  %2077 = vmatpush2.bf16.msra.mxu0 0
  %2078 = vmatprep.subr.bf16.mxu0 0
  %2079 = vmatpush2.bf16.msra.mxu0 0
  %2080 = vmatprep.subr.bf16.mxu0 0
  %2081 = vmatpush2.bf16.msra.mxu0 0
  %2082 = vmatprep.subr.bf16.mxu0 0
  %2083 = vmatpush2.bf16.msra.mxu0 0
  %2084 = vmatprep.subr.bf16.mxu0 0
  %2085 = vmatpush2.bf16.msra.mxu0 0
  %2086 = vmatprep.subr.bf16.mxu0 0
  %2087 = vmatpush2.bf16.msra.mxu0 0
  %2088 = vmatprep.subr.bf16.mxu0 0
  %2089 = vmatpush2.bf16.msra.mxu0 0
  %2090 = vmatprep.subr.bf16.mxu0 0
  %2091 = vmatpush2.bf16.msra.mxu0 0
  %2092 = vmatprep.mubr.bf16.mxu0 0
  %2093 = vmatmul.mubr.bf16.gmra.mxu0 %v2055
  %v2094 = vpop.f32.mrf.mxu0
  %v2095 = vadd.f32 0.0, %v2094
  %v2096 = vpop.f32.mrf.mxu0
  %v2097 = vpop.f32.mrf.mxu0
  %v2098 = vpop.f32.mrf.mxu0
  %2099 = vdwg.mxu0
  %v2100 = vadd.f32 %v2031, %v2095
  %v2101 = vlaneseq
  %v2102 = vshrl.u32 %v2101, 7
  %v2103 = vsub.s32 4, %v2102
  %v2104 = vrot.slane %v1820, %v2103
  %v2105 = vmul.f32 %v1810, %v2104
  %v2106 = vpack.c.bf16 %v2105, %v2105
  %v2108 = vsel %vm1868, %v1815, 0
  %v2111 = vsel %vm1872, %v2106, 0
  %2113 = vmatprep.subr.bf16.mxu0 0
  %2114 = vmatpush1.bf16.msra.mxu0 0
  %2115 = vmatprep.subr.bf16.mxu0 0
  %2116 = vmatpush1.bf16.msra.mxu0 0
  %2117 = vmatprep.subr.bf16.mxu0 0
  %2118 = vmatpush1.bf16.msra.mxu0 0
  %2119 = vmatprep.subr.bf16.mxu0 0
  %2120 = vmatpush1.bf16.msra.mxu0 0
  %2121 = vmatprep.subr.bf16.mxu0 0
  %2122 = vmatpush1.bf16.msra.mxu0 0
  %2123 = vmatprep.subr.bf16.mxu0 0
  %2124 = vmatpush1.bf16.msra.mxu0 0
  %2125 = vmatprep.subr.bf16.mxu0 0
  %2126 = vmatpush1.bf16.msra.mxu0 0
  %2127 = vmatprep.subr.bf16.mxu0 0
  %2128 = vmatpush1.bf16.msra.mxu0 %v2111
  %2129 = vmatprep.subr.bf16.mxu0 0
  %2130 = vmatpush2.bf16.msra.mxu0 0
  %2131 = vmatprep.subr.bf16.mxu0 0
  %2132 = vmatpush2.bf16.msra.mxu0 0
  %2133 = vmatprep.subr.bf16.mxu0 0
  %2134 = vmatpush2.bf16.msra.mxu0 0
  %2135 = vmatprep.subr.bf16.mxu0 0
  %2136 = vmatpush2.bf16.msra.mxu0 0
  %2137 = vmatprep.subr.bf16.mxu0 0
  %2138 = vmatpush2.bf16.msra.mxu0 0
  %2139 = vmatprep.subr.bf16.mxu0 0
  %2140 = vmatpush2.bf16.msra.mxu0 0
  %2141 = vmatprep.subr.bf16.mxu0 0
  %2142 = vmatpush2.bf16.msra.mxu0 0
  %2143 = vmatprep.subr.bf16.mxu0 0
  %2144 = vmatpush2.bf16.msra.mxu0 0
  %2145 = vmatprep.mubr.bf16.mxu0 0
  %2146 = vmatmul.mubr.bf16.gmra.mxu0 %v2108
  %v2147 = vpop.f32.mrf.mxu0
  %v2148 = vadd.f32 0.0, %v2147
  %v2149 = vpop.f32.mrf.mxu0
  %v2150 = vpop.f32.mrf.mxu0
  %v2151 = vpop.f32.mrf.mxu0
  %2152 = vdwg.mxu0
  %v2153 = vadd.f32 %v2100, %v2148
  %s2154 = ssub.s32 0, %s63
  %s2155 = scalar_select %p62, %s2154, %s63
  %s2156 = sand.u32 %s2155, 127
  %s2157 = ssub.s32 0, %s2156
  %s2158 = scalar_select %p62, %s2157, %s2156
  %p2159 = scmp.ne.s32.totalorder %s2158, 0
  %p2160 = scmp.lt.s32.totalorder %s2158, 0
  %p2161 = pnand %p2160, %p2159
  %p2162 = pneg %p2161
  %s2163 = sadd.s32 %s2158, 128
  %s2164 = scalar_select %p2162, %s2163, %s2158
  %s2165 = sand.u32 %s2164, 127
  %s2166 = sand.u32 %s2165, 127
  %2167 = vrot.lane.b32.xlu0 %v1810, %s2166
  %v2168 = vpop.permute.xlu0 %2167
  %v2169 = vlaneseq
  %v2170 = vshrl.u32 %v2169, 7
  %v2171 = vsub.s32 5, %v2170
  %v2172 = vrot.slane %v1820, %v2171
  %v2173 = vmul.f32 %v2168, %v2172
  %v2174 = vpack.c.bf16 %v2173, %v2173
  %v2176 = vsel %vm1868, %v1816, 0
  %v2179 = vsel %vm1872, %v2174, 0
  %2181 = vmatprep.subr.bf16.mxu0 0
  %2182 = vmatpush1.bf16.msra.mxu0 0
  %2183 = vmatprep.subr.bf16.mxu0 0
  %2184 = vmatpush1.bf16.msra.mxu0 0
  %2185 = vmatprep.subr.bf16.mxu0 0
  %2186 = vmatpush1.bf16.msra.mxu0 0
  %2187 = vmatprep.subr.bf16.mxu0 0
  %2188 = vmatpush1.bf16.msra.mxu0 0
  %2189 = vmatprep.subr.bf16.mxu0 0
  %2190 = vmatpush1.bf16.msra.mxu0 0
  %2191 = vmatprep.subr.bf16.mxu0 0
  %2192 = vmatpush1.bf16.msra.mxu0 0
  %2193 = vmatprep.subr.bf16.mxu0 0
  %2194 = vmatpush1.bf16.msra.mxu0 0
  %2195 = vmatprep.subr.bf16.mxu0 0
  %2196 = vmatpush1.bf16.msra.mxu0 %v2179
  %2197 = vmatprep.subr.bf16.mxu0 0
  %2198 = vmatpush2.bf16.msra.mxu0 0
  %2199 = vmatprep.subr.bf16.mxu0 0
  %2200 = vmatpush2.bf16.msra.mxu0 0
  %2201 = vmatprep.subr.bf16.mxu0 0
  %2202 = vmatpush2.bf16.msra.mxu0 0
  %2203 = vmatprep.subr.bf16.mxu0 0
  %2204 = vmatpush2.bf16.msra.mxu0 0
  %2205 = vmatprep.subr.bf16.mxu0 0
  %2206 = vmatpush2.bf16.msra.mxu0 0
  %2207 = vmatprep.subr.bf16.mxu0 0
  %2208 = vmatpush2.bf16.msra.mxu0 0
  %2209 = vmatprep.subr.bf16.mxu0 0
  %2210 = vmatpush2.bf16.msra.mxu0 0
  %2211 = vmatprep.subr.bf16.mxu0 0
  %2212 = vmatpush2.bf16.msra.mxu0 0
  %2213 = vmatprep.mubr.bf16.mxu0 0
  %2214 = vmatmul.mubr.bf16.gmra.mxu0 %v2176
  %v2215 = vpop.f32.mrf.mxu0
  %v2216 = vadd.f32 0.0, %v2215
  %v2217 = vpop.f32.mrf.mxu0
  %v2218 = vpop.f32.mrf.mxu0
  %v2219 = vpop.f32.mrf.mxu0
  %2220 = vdwg.mxu0
  %v2221 = vadd.f32 %v2153, %v2216
  %s2222 = smul.u32 %s63, 7
  %p2223 = scmp.lt.s32.totalorder %s2222, 0
  %s2224 = ssub.s32 0, %s2222
  %s2225 = scalar_select %p2223, %s2224, %s2222
  %s2226 = sand.u32 %s2225, 127
  %s2227 = ssub.s32 0, %s2226
  %s2228 = scalar_select %p2223, %s2227, %s2226
  %p2229 = scmp.ne.s32.totalorder %s2228, 0
  %p2230 = scmp.lt.s32.totalorder %s2228, 0
  %p2231 = pnand %p2230, %p2229
  %p2232 = pneg %p2231
  %s2233 = sadd.s32 %s2228, 128
  %s2234 = scalar_select %p2232, %s2233, %s2228
  %s2235 = sand.u32 %s2234, 127
  %s2236 = sand.u32 %s2235, 127
  %2237 = vrot.lane.b32.xlu0 %v1810, %s2236
  %v2238 = vpop.permute.xlu0 %2237
  %v2239 = vlaneseq
  %v2240 = vshrl.u32 %v2239, 7
  %v2241 = vsub.s32 6, %v2240
  %v2242 = vrot.slane %v1820, %v2241
  %v2243 = vmul.f32 %v2238, %v2242
  %v2244 = vpack.c.bf16 %v2243, %v2243
  %v2246 = vsel %vm1868, %v1817, 0
  %v2249 = vsel %vm1872, %v2244, 0
  %2251 = vmatprep.subr.bf16.mxu0 0
  %2252 = vmatpush1.bf16.msra.mxu0 0
  %2253 = vmatprep.subr.bf16.mxu0 0
  %2254 = vmatpush1.bf16.msra.mxu0 0
  %2255 = vmatprep.subr.bf16.mxu0 0
  %2256 = vmatpush1.bf16.msra.mxu0 0
  %2257 = vmatprep.subr.bf16.mxu0 0
  %2258 = vmatpush1.bf16.msra.mxu0 0
  %2259 = vmatprep.subr.bf16.mxu0 0
  %2260 = vmatpush1.bf16.msra.mxu0 0
  %2261 = vmatprep.subr.bf16.mxu0 0
  %2262 = vmatpush1.bf16.msra.mxu0 0
  %2263 = vmatprep.subr.bf16.mxu0 0
  %2264 = vmatpush1.bf16.msra.mxu0 0
  %2265 = vmatprep.subr.bf16.mxu0 0
  %2266 = vmatpush1.bf16.msra.mxu0 %v2249
  %2267 = vmatprep.subr.bf16.mxu0 0
  %2268 = vmatpush2.bf16.msra.mxu0 0
  %2269 = vmatprep.subr.bf16.mxu0 0
  %2270 = vmatpush2.bf16.msra.mxu0 0
  %2271 = vmatprep.subr.bf16.mxu0 0
  %2272 = vmatpush2.bf16.msra.mxu0 0
  %2273 = vmatprep.subr.bf16.mxu0 0
  %2274 = vmatpush2.bf16.msra.mxu0 0
  %2275 = vmatprep.subr.bf16.mxu0 0
  %2276 = vmatpush2.bf16.msra.mxu0 0
  %2277 = vmatprep.subr.bf16.mxu0 0
  %2278 = vmatpush2.bf16.msra.mxu0 0
  %2279 = vmatprep.subr.bf16.mxu0 0
  %2280 = vmatpush2.bf16.msra.mxu0 0
  %2281 = vmatprep.subr.bf16.mxu0 0
  %2282 = vmatpush2.bf16.msra.mxu0 0
  %2283 = vmatprep.mubr.bf16.mxu0 0
  %2284 = vmatmul.mubr.bf16.gmra.mxu0 %v2246
  %v2285 = vpop.f32.mrf.mxu0
  %v2286 = vadd.f32 0.0, %v2285
  %v2287 = vpop.f32.mrf.mxu0
  %v2288 = vpop.f32.mrf.mxu0
  %v2289 = vpop.f32.mrf.mxu0
  %2290 = vdwg.mxu0
  %v2291 = vadd.f32 %v2221, %v2286
  %s2292 = smul.u32 %s63, 8
  %p2293 = scmp.lt.s32.totalorder %s2292, 0
  %s2294 = ssub.s32 0, %s2292
  %s2295 = scalar_select %p2293, %s2294, %s2292
  %s2296 = sand.u32 %s2295, 127
  %s2297 = ssub.s32 0, %s2296
  %s2298 = scalar_select %p2293, %s2297, %s2296
  %p2299 = scmp.ne.s32.totalorder %s2298, 0
  %p2300 = scmp.lt.s32.totalorder %s2298, 0
  %p2301 = pnand %p2300, %p2299
  %p2302 = pneg %p2301
  %s2303 = sadd.s32 %s2298, 128
  %s2304 = scalar_select %p2302, %s2303, %s2298
  %s2305 = sand.u32 %s2304, 127
  %s2306 = sand.u32 %s2305, 127
  %2307 = vrot.lane.b32.xlu0 %v1810, %s2306
  %v2308 = vpop.permute.xlu0 %2307
  %v2309 = vlaneseq
  %v2310 = vshrl.u32 %v2309, 7
  %v2311 = vsub.s32 7, %v2310
  %v2312 = vrot.slane %v1820, %v2311
  %v2313 = vmul.f32 %v2308, %v2312
  %v2314 = vpack.c.bf16 %v2313, %v2313
  %v2316 = vsel %vm1868, %v1818, 0
  %v2319 = vsel %vm1872, %v2314, 0
  %2321 = vmatprep.subr.bf16.mxu0 0
  %2322 = vmatpush1.bf16.msra.mxu0 0
  %2323 = vmatprep.subr.bf16.mxu0 0
  %2324 = vmatpush1.bf16.msra.mxu0 0
  %2325 = vmatprep.subr.bf16.mxu0 0
  %2326 = vmatpush1.bf16.msra.mxu0 0
  %2327 = vmatprep.subr.bf16.mxu0 0
  %2328 = vmatpush1.bf16.msra.mxu0 0
  %2329 = vmatprep.subr.bf16.mxu0 0
  %2330 = vmatpush1.bf16.msra.mxu0 0
  %2331 = vmatprep.subr.bf16.mxu0 0
  %2332 = vmatpush1.bf16.msra.mxu0 0
  %2333 = vmatprep.subr.bf16.mxu0 0
  %2334 = vmatpush1.bf16.msra.mxu0 0
  %2335 = vmatprep.subr.bf16.mxu0 0
  %2336 = vmatpush1.bf16.msra.mxu0 %v2319
  %2337 = vmatprep.subr.bf16.mxu0 0
  %2338 = vmatpush2.bf16.msra.mxu0 0
  %2339 = vmatprep.subr.bf16.mxu0 0
  %2340 = vmatpush2.bf16.msra.mxu0 0
  %2341 = vmatprep.subr.bf16.mxu0 0
  %2342 = vmatpush2.bf16.msra.mxu0 0
  %2343 = vmatprep.subr.bf16.mxu0 0
  %2344 = vmatpush2.bf16.msra.mxu0 0
  %2345 = vmatprep.subr.bf16.mxu0 0
  %2346 = vmatpush2.bf16.msra.mxu0 0
  %2347 = vmatprep.subr.bf16.mxu0 0
  %2348 = vmatpush2.bf16.msra.mxu0 0
  %2349 = vmatprep.subr.bf16.mxu0 0
  %2350 = vmatpush2.bf16.msra.mxu0 0
  %2351 = vmatprep.subr.bf16.mxu0 0
  %2352 = vmatpush2.bf16.msra.mxu0 0
  %2353 = vmatprep.mubr.bf16.mxu0 0
  %2354 = vmatmul.mubr.bf16.gmra.mxu0 %v2316
  %v2355 = vpop.f32.mrf.mxu0
  %v2356 = vadd.f32 0.0, %v2355
  %v2357 = vpop.f32.mrf.mxu0
  %v2358 = vpop.f32.mrf.mxu0
  %v2359 = vpop.f32.mrf.mxu0
  %2360 = vdwg.mxu0
  %v2361 = vadd.f32 %v2291, %v2356
  %s2362 = smul.u32 %s63, 9
  %p2363 = scmp.lt.s32.totalorder %s2362, 0
  %s2364 = ssub.s32 0, %s2362
  %s2365 = scalar_select %p2363, %s2364, %s2362
  %s2366 = sand.u32 %s2365, 127
  %s2367 = ssub.s32 0, %s2366
  %s2368 = scalar_select %p2363, %s2367, %s2366
  %p2369 = scmp.ne.s32.totalorder %s2368, 0
  %p2370 = scmp.lt.s32.totalorder %s2368, 0
  %p2371 = pnand %p2370, %p2369
  %p2372 = pneg %p2371
  %s2373 = sadd.s32 %s2368, 128
  %s2374 = scalar_select %p2372, %s2373, %s2368
  %s2375 = sand.u32 %s2374, 127
  %s2376 = sand.u32 %s2375, 127
  %2377 = vrot.lane.b32.xlu0 %v1810, %s2376
  %v2378 = vpop.permute.xlu0 %2377
  %v2379 = vlaneseq
  %v2380 = vshrl.u32 %v2379, 7
  %v2381 = vsub.s32 0, %v2380
  %v2382 = vrot.slane %v1821, %v2381
  %v2383 = vmul.f32 %v2378, %v2382
  %v2384 = vpack.c.bf16 %v2383, %v2383
  %v2386 = vsel %vm1868, %v1819, 0
  %v2389 = vsel %vm1872, %v2384, 0
  %2391 = vmatprep.subr.bf16.mxu0 0
  %2392 = vmatpush1.bf16.msra.mxu0 0
  %2393 = vmatprep.subr.bf16.mxu0 0
  %2394 = vmatpush1.bf16.msra.mxu0 0
  %2395 = vmatprep.subr.bf16.mxu0 0
  %2396 = vmatpush1.bf16.msra.mxu0 0
  %2397 = vmatprep.subr.bf16.mxu0 0
  %2398 = vmatpush1.bf16.msra.mxu0 0
  %2399 = vmatprep.subr.bf16.mxu0 0
  %2400 = vmatpush1.bf16.msra.mxu0 0
  %2401 = vmatprep.subr.bf16.mxu0 0
  %2402 = vmatpush1.bf16.msra.mxu0 0
  %2403 = vmatprep.subr.bf16.mxu0 0
  %2404 = vmatpush1.bf16.msra.mxu0 0
  %2405 = vmatprep.subr.bf16.mxu0 0
  %2406 = vmatpush1.bf16.msra.mxu0 %v2389
  %2407 = vmatprep.subr.bf16.mxu0 0
  %2408 = vmatpush2.bf16.msra.mxu0 0
  %2409 = vmatprep.subr.bf16.mxu0 0
  %2410 = vmatpush2.bf16.msra.mxu0 0
  %2411 = vmatprep.subr.bf16.mxu0 0
  %2412 = vmatpush2.bf16.msra.mxu0 0
  %2413 = vmatprep.subr.bf16.mxu0 0
  %2414 = vmatpush2.bf16.msra.mxu0 0
  %2415 = vmatprep.subr.bf16.mxu0 0
  %2416 = vmatpush2.bf16.msra.mxu0 0
  %2417 = vmatprep.subr.bf16.mxu0 0
  %2418 = vmatpush2.bf16.msra.mxu0 0
  %2419 = vmatprep.subr.bf16.mxu0 0
  %2420 = vmatpush2.bf16.msra.mxu0 0
  %2421 = vmatprep.subr.bf16.mxu0 0
  %2422 = vmatpush2.bf16.msra.mxu0 0
  %2423 = vmatprep.mubr.bf16.mxu0 0
  %2424 = vmatmul.mubr.bf16.gmra.mxu0 %v2386
  %v2425 = vpop.f32.mrf.mxu0
  %v2426 = vadd.f32 0.0, %v2425
  %v2427 = vpop.f32.mrf.mxu0
  %v2428 = vpop.f32.mrf.mxu0
  %v2429 = vpop.f32.mrf.mxu0
  %2430 = vdwg.mxu0
  %v2431 = vadd.f32 %v2361, %v2426
  %v2432 = vld [vmem:[%s8] sm:$0xff]
  %2434 = vset.pattern.permute.xlu0 0
  %2435 = vperm.xlu0 %2434, %v2432
  %v2436 = vpop.permute.xlu0 %2435
  %v2438 = vadd.f32 %v2431, %v2436
  %v2439 = vmax.f32 %v2438, 0.0
  %v2440 = vld [vmem:[%s10] sm:$0xf]
  %v2441 = vld [vmem:[%s10 + $0x4] sm:$0xf]
  %v2442 = vld [vmem:[%s10 + $0x8] sm:$0xf]
  %v2443 = vld [vmem:[%s10 + $0xc] sm:$0xf]
  %v2444 = vpack.c.bf16 %v2439, %v2439
  %v2445 = vld [vmem:[%s11] sm:$0xff]
  %v2446 = vld [vmem:[%s11 + $0x8] sm:$0xff]
  %v2447 = vld [vmem:[%s11 + $0x10] sm:$0xff]
  %v2448 = vld [vmem:[%s11 + $0x18] sm:$0xff]
  %2450 = vset.pattern.permute.xlu0 0
  %2451 = vperm.xlu0 %2450, %v2445
  %v2452 = vpop.permute.xlu0 %2451
  %2455 = vset.pattern.permute.xlu0 0
  %2456 = vperm.xlu0 %2455, %v2446
  %v2457 = vpop.permute.xlu0 %2456
  %2460 = vset.pattern.permute.xlu0 0
  %2461 = vperm.xlu0 %2460, %v2447
  %v2462 = vpop.permute.xlu0 %2461
  %2465 = vset.pattern.permute.xlu0 0
  %2466 = vperm.xlu0 %2465, %v2448
  %v2467 = vpop.permute.xlu0 %2466
  %v2473 = vunpack.c.l.b16 %v2440
  %v2474 = vunpack.c.l.b16 %v2441
  %v2475 = vunpack.c.l.b16 %v2442
  %v2476 = vunpack.c.l.b16 %v2443
  %v2477 = vpack.c.b16 %v2474, %v2473
  %v2478 = vpack.c.b16 %v2476, %v2475
  %v2480 = vsel %vm1868, %v2477, 0
  %v2483 = vsel %vm1868, %v2478, 0
  %v2486 = vsel %vm1872, %v2444, 0
  %2488 = vmatprep.subr.bf16.mxu0 0
  %2489 = vmatpush1.bf16.msra.mxu0 0
  %2490 = vmatprep.subr.bf16.mxu0 0
  %2491 = vmatpush1.bf16.msra.mxu0 0
  %2492 = vmatprep.subr.bf16.mxu0 0
  %2493 = vmatpush1.bf16.msra.mxu0 0
  %2494 = vmatprep.subr.bf16.mxu0 0
  %2495 = vmatpush1.bf16.msra.mxu0 0
  %2496 = vmatprep.subr.bf16.mxu0 0
  %2497 = vmatpush1.bf16.msra.mxu0 0
  %2498 = vmatprep.subr.bf16.mxu0 0
  %2499 = vmatpush1.bf16.msra.mxu0 0
  %2500 = vmatprep.subr.bf16.mxu0 0
  %2501 = vmatpush1.bf16.msra.mxu0 0
  %2502 = vmatprep.subr.bf16.mxu0 0
  %2503 = vmatpush1.bf16.msra.mxu0 %v2486
  %2504 = vmatprep.subr.bf16.mxu0 0
  %2505 = vmatpush2.bf16.msra.mxu0 0
  %2506 = vmatprep.subr.bf16.mxu0 0
  %2507 = vmatpush2.bf16.msra.mxu0 0
  %2508 = vmatprep.subr.bf16.mxu0 0
  %2509 = vmatpush2.bf16.msra.mxu0 0
  %2510 = vmatprep.subr.bf16.mxu0 0
  %2511 = vmatpush2.bf16.msra.mxu0 0
  %2512 = vmatprep.subr.bf16.mxu0 0
  %2513 = vmatpush2.bf16.msra.mxu0 0
  %2514 = vmatprep.subr.bf16.mxu0 0
  %2515 = vmatpush2.bf16.msra.mxu0 0
  %2516 = vmatprep.subr.bf16.mxu0 0
  %2517 = vmatpush2.bf16.msra.mxu0 0
  %2518 = vmatprep.subr.bf16.mxu0 0
  %2519 = vmatpush2.bf16.msra.mxu0 0
  %2520 = vmatprep.mubr.bf16.mxu0 0
  %2521 = vmatmul.mubr.bf16.gmra.mxu0 %v2480
  %v2522 = vpop.f32.mrf.mxu0
  %v2523 = vadd.f32 %v2452, %v2522
  %v2524 = vpop.f32.mrf.mxu0
  %v2525 = vpop.f32.mrf.mxu0
  %v2526 = vadd.f32 %v2457, %v2525
  %v2527 = vpop.f32.mrf.mxu0
  %2528 = vmatprep.mubr.bf16.mxu0 0
  %2529 = vmatmul.mubr.bf16.gmra.mxu0 %v2483
  %v2530 = vpop.f32.mrf.mxu0
  %v2531 = vadd.f32 %v2462, %v2530
  %v2532 = vpop.f32.mrf.mxu0
  %v2533 = vpop.f32.mrf.mxu0
  %v2534 = vadd.f32 %v2467, %v2533
  %v2535 = vpop.f32.mrf.mxu0
  %2536 = vdwg.mxu0
  %v2537 = vld [vmem:[%s12] sm:$0xf]
  %v2538 = vld [vmem:[%s12 + $0x4] sm:$0xf]
  %v2539 = vld [vmem:[%s12 + $0x8] sm:$0xf]
  %v2540 = vld [vmem:[%s12 + $0xc] sm:$0xf]
  %v2541 = vld [vmem:[%s13] sm:$0xff]
  %v2542 = vld [vmem:[%s13 + $0x8] sm:$0xff]
  %v2543 = vld [vmem:[%s13 + $0x10] sm:$0xff]
  %v2544 = vld [vmem:[%s13 + $0x18] sm:$0xff]
  %2546 = vset.pattern.permute.xlu0 0
  %2547 = vperm.xlu0 %2546, %v2541
  %v2548 = vpop.permute.xlu0 %2547
  %2551 = vset.pattern.permute.xlu0 0
  %2552 = vperm.xlu0 %2551, %v2542
  %v2553 = vpop.permute.xlu0 %2552
  %2556 = vset.pattern.permute.xlu0 0
  %2557 = vperm.xlu0 %2556, %v2543
  %v2558 = vpop.permute.xlu0 %2557
  %2561 = vset.pattern.permute.xlu0 0
  %2562 = vperm.xlu0 %2561, %v2544
  %v2563 = vpop.permute.xlu0 %2562
  %v2569 = vunpack.c.l.b16 %v2537
  %v2570 = vunpack.c.l.b16 %v2538
  %v2571 = vunpack.c.l.b16 %v2539
  %v2572 = vunpack.c.l.b16 %v2540
  %v2573 = vpack.c.b16 %v2570, %v2569
  %v2574 = vpack.c.b16 %v2572, %v2571
  %v2576 = vsel %vm1766, %v2573, 0
  %v2579 = vsel %vm1766, %v2574, 0
  %2581 = vmatprep.subr.bf16.mxu0 0
  %2582 = vmatpush1.bf16.msra.mxu0 0
  %2583 = vmatprep.subr.bf16.mxu0 0
  %2584 = vmatpush1.bf16.msra.mxu0 0
  %2585 = vmatprep.subr.bf16.mxu0 0
  %2586 = vmatpush1.bf16.msra.mxu0 0
  %2587 = vmatprep.subr.bf16.mxu0 0
  %2588 = vmatpush1.bf16.msra.mxu0 0
  %2589 = vmatprep.subr.bf16.mxu0 0
  %2590 = vmatpush1.bf16.msra.mxu0 0
  %2591 = vmatprep.subr.bf16.mxu0 0
  %2592 = vmatpush1.bf16.msra.mxu0 0
  %2593 = vmatprep.subr.bf16.mxu0 0
  %2594 = vmatpush1.bf16.msra.mxu0 0
  %2595 = vmatprep.subr.bf16.mxu0 0
  %2596 = vmatpush1.bf16.msra.mxu0 %v1758
  %2597 = vmatprep.subr.bf16.mxu0 0
  %2598 = vmatpush2.bf16.msra.mxu0 0
  %2599 = vmatprep.subr.bf16.mxu0 0
  %2600 = vmatpush2.bf16.msra.mxu0 0
  %2601 = vmatprep.subr.bf16.mxu0 0
  %2602 = vmatpush2.bf16.msra.mxu0 0
  %2603 = vmatprep.subr.bf16.mxu0 0
  %2604 = vmatpush2.bf16.msra.mxu0 0
  %2605 = vmatprep.subr.bf16.mxu0 0
  %2606 = vmatpush2.bf16.msra.mxu0 0
  %2607 = vmatprep.subr.bf16.mxu0 0
  %2608 = vmatpush2.bf16.msra.mxu0 0
  %2609 = vmatprep.subr.bf16.mxu0 0
  %2610 = vmatpush2.bf16.msra.mxu0 0
  %2611 = vmatprep.subr.bf16.mxu0 0
  %2612 = vmatpush2.bf16.msra.mxu0 0
  %2613 = vmatprep.mubr.bf16.mxu0 0
  %2614 = vmatmul.mubr.bf16.gmra.mxu0 %v2576
  %v2615 = vpop.f32.mrf.mxu0
  %v2616 = vadd.f32 %v2548, %v2615
  %v2617 = vpop.f32.mrf.mxu0
  %v2618 = vpop.f32.mrf.mxu0
  %v2619 = vadd.f32 %v2553, %v2618
  %v2620 = vpop.f32.mrf.mxu0
  %2621 = vmatprep.mubr.bf16.mxu0 0
  %2622 = vmatmul.mubr.bf16.gmra.mxu0 %v2579
  %v2623 = vpop.f32.mrf.mxu0
  %v2624 = vadd.f32 %v2558, %v2623
  %v2625 = vpop.f32.mrf.mxu0
  %v2626 = vpop.f32.mrf.mxu0
  %v2627 = vadd.f32 %v2563, %v2626
  %v2628 = vpop.f32.mrf.mxu0
  %2629 = vdwg.mxu0
  %v2630 = vadd.f32 %v2523, %v2616
  %v2631 = vadd.f32 %v2526, %v2619
  %v2632 = vadd.f32 %v2531, %v2624
  %v2633 = vadd.f32 %v2534, %v2627
  %v2634 = vmax.f32 %v2630, 0.0
  %v2635 = vmax.f32 %v2631, 0.0
  %v2636 = vmax.f32 %v2632, 0.0
  %v2637 = vmax.f32 %v2633, 0.0
  %v2638 = vpack.c.bf16 %v2635, %v2634
  %v2639 = vpack.c.bf16 %v2637, %v2636
  %v2640 = vld [vmem:[%s14] sm:$0xf]
  %v2641 = vld [vmem:[%s14 + $0x4] sm:$0xf]
  %v2642 = vld [vmem:[%s14 + $0x8] sm:$0xf]
  %v2643 = vld [vmem:[%s14 + $0xc] sm:$0xf]
  %v2644 = vld [vmem:[%s14 + $0x10] sm:$0xf]
  %v2645 = vld [vmem:[%s14 + $0x14] sm:$0xf]
  %v2646 = vld [vmem:[%s14 + $0x18] sm:$0xf]
  %v2647 = vld [vmem:[%s14 + $0x1c] sm:$0xf]
  %v2648 = vld [vmem:[%s14 + $0x20] sm:$0xf]
  %v2649 = vld [vmem:[%s14 + $0x24] sm:$0xf]
  %v2650 = vld [vmem:[%s14 + $0x28] sm:$0xf]
  %v2651 = vld [vmem:[%s14 + $0x2c] sm:$0xf]
  %v2652 = vld [vmem:[%s14 + $0x30] sm:$0xf]
  %v2653 = vld [vmem:[%s14 + $0x34] sm:$0xf]
  %v2654 = vld [vmem:[%s14 + $0x38] sm:$0xf]
  %v2655 = vld [vmem:[%s14 + $0x3c] sm:$0xf]
  %v2672 = vunpack.c.l.b16 %v2640
  %v2673 = vunpack.c.l.b16 %v2641
  %v2674 = vunpack.c.l.b16 %v2642
  %v2675 = vunpack.c.l.b16 %v2643
  %v2676 = vunpack.c.l.b16 %v2644
  %v2677 = vunpack.c.l.b16 %v2645
  %v2678 = vunpack.c.l.b16 %v2646
  %v2679 = vunpack.c.l.b16 %v2647
  %v2680 = vunpack.c.l.b16 %v2648
  %v2681 = vunpack.c.l.b16 %v2649
  %v2682 = vunpack.c.l.b16 %v2650
  %v2683 = vunpack.c.l.b16 %v2651
  %v2684 = vunpack.c.l.b16 %v2652
  %v2685 = vunpack.c.l.b16 %v2653
  %v2686 = vunpack.c.l.b16 %v2654
  %v2687 = vunpack.c.l.b16 %v2655
  %v2688 = vpack.c.b16 %v2673, %v2672
  %v2689 = vpack.c.b16 %v2675, %v2674
  %v2690 = vpack.c.b16 %v2677, %v2676
  %v2691 = vpack.c.b16 %v2679, %v2678
  %v2692 = vpack.c.b16 %v2681, %v2680
  %v2693 = vpack.c.b16 %v2683, %v2682
  %v2694 = vpack.c.b16 %v2685, %v2684
  %v2695 = vpack.c.b16 %v2687, %v2686
  %2704 = vmatprep.subr.bf16.mxu0 0
  %2705 = vmatpush1.bf16.msra.mxu0 %v2695
  %2706 = vmatprep.subr.bf16.mxu0 0
  %2707 = vmatpush1.bf16.msra.mxu0 %v2694
  %2708 = vmatprep.subr.bf16.mxu0 0
  %2709 = vmatpush1.bf16.msra.mxu0 %v2693
  %2710 = vmatprep.subr.bf16.mxu0 0
  %2711 = vmatpush1.bf16.msra.mxu0 %v2692
  %2712 = vmatprep.subr.bf16.mxu0 0
  %2713 = vmatpush1.bf16.msra.mxu0 %v2691
  %2714 = vmatprep.subr.bf16.mxu0 0
  %2715 = vmatpush1.bf16.msra.mxu0 %v2690
  %2716 = vmatprep.subr.bf16.mxu0 0
  %2717 = vmatpush1.bf16.msra.mxu0 %v2689
  %2718 = vmatprep.subr.bf16.mxu0 0
  %2719 = vmatpush1.bf16.msra.mxu0 %v2688
  %2720 = vmatprep.subr.bf16.mxu0 0
  %2721 = vmatpush2.bf16.msra.mxu0 0
  %2722 = vmatprep.subr.bf16.mxu0 0
  %2723 = vmatpush2.bf16.msra.mxu0 0
  %2724 = vmatprep.subr.bf16.mxu0 0
  %2725 = vmatpush2.bf16.msra.mxu0 0
  %2726 = vmatprep.subr.bf16.mxu0 0
  %2727 = vmatpush2.bf16.msra.mxu0 0
  %2728 = vmatprep.subr.bf16.mxu0 0
  %2729 = vmatpush2.bf16.msra.mxu0 0
  %2730 = vmatprep.subr.bf16.mxu0 0
  %2731 = vmatpush2.bf16.msra.mxu0 0
  %2732 = vmatprep.subr.bf16.mxu0 0
  %2733 = vmatpush2.bf16.msra.mxu0 0
  %2734 = vmatprep.subr.bf16.mxu0 0
  %2735 = vmatpush2.bf16.msra.mxu0 0
  %2736 = vmatprep.mubr.bf16.mxu0 0
  %2737 = vmatmul.mubr.bf16.gmra.mxu0 %v2638
  %v2738 = vpop.f32.mrf.mxu0
  %v2739 = vadd.f32 0.0, %v2738
  %v2740 = vpop.f32.mrf.mxu0
  %v2741 = vpop.f32.mrf.mxu0
  %v2742 = vadd.f32 0.0, %v2741
  %v2743 = vpop.f32.mrf.mxu0
  %2744 = vmatprep.mubr.bf16.mxu0 0
  %2745 = vmatmul.mubr.bf16.gmra.mxu0 %v2639
  %v2746 = vpop.f32.mrf.mxu0
  %v2747 = vadd.f32 0.0, %v2746
  %v2748 = vpop.f32.mrf.mxu0
  %v2749 = vpop.f32.mrf.mxu0
  %v2750 = vadd.f32 0.0, %v2749
  %v2751 = vpop.f32.mrf.mxu0
  %2752 = vdwg.mxu0
  %v2753 = vld [vmem:[%s15] sm:$0xf]
  %v2754 = vld [vmem:[%s15 + $0x4] sm:$0x1]
  %v2755 = vpack.c.bf16 %v2742, %v2739
  %v2756 = vpack.c.bf16 %v2750, %v2747
  %v2757 = vld [vmem:[%s16] sm:$0xff]
  %v2758 = vld [vmem:[%s16 + $0x8] sm:$0x3]
  %2760 = vset.pattern.permute.xlu0 0
  %2761 = vperm.xlu0 %2760, %v2757
  %v2762 = vpop.permute.xlu0 %2761
  %2765 = vset.pattern.permute.xlu0 0
  %2766 = vperm.xlu0 %2765, %v2758
  %v2767 = vpop.permute.xlu0 %2766
  %v2771 = vunpack.c.l.b16 %v2753
  %v2772 = vunpack.c.l.b16 %v2754
  %v2773 = vpack.c.b16 %v2772, %v2771
  %vm2774 = vcmask 261120
  %v2776 = vsel %vm2774, %v2773, 0
  %2778 = vmatprep.subr.bf16.mxu0 0
  %2779 = vmatpush1.bf16.msra.mxu0 0
  %2780 = vmatprep.subr.bf16.mxu0 0
  %2781 = vmatpush1.bf16.msra.mxu0 0
  %2782 = vmatprep.subr.bf16.mxu0 0
  %2783 = vmatpush1.bf16.msra.mxu0 0
  %2784 = vmatprep.subr.bf16.mxu0 0
  %2785 = vmatpush1.bf16.msra.mxu0 0
  %2786 = vmatprep.subr.bf16.mxu0 0
  %2787 = vmatpush1.bf16.msra.mxu0 0
  %2788 = vmatprep.subr.bf16.mxu0 0
  %2789 = vmatpush1.bf16.msra.mxu0 0
  %2790 = vmatprep.subr.bf16.mxu0 0
  %2791 = vmatpush1.bf16.msra.mxu0 %v2756
  %2792 = vmatprep.subr.bf16.mxu0 0
  %2793 = vmatpush1.bf16.msra.mxu0 %v2755
  %2794 = vmatprep.subr.bf16.mxu0 0
  %2795 = vmatpush2.bf16.msra.mxu0 0
  %2796 = vmatprep.subr.bf16.mxu0 0
  %2797 = vmatpush2.bf16.msra.mxu0 0
  %2798 = vmatprep.subr.bf16.mxu0 0
  %2799 = vmatpush2.bf16.msra.mxu0 0
  %2800 = vmatprep.subr.bf16.mxu0 0
  %2801 = vmatpush2.bf16.msra.mxu0 0
  %2802 = vmatprep.subr.bf16.mxu0 0
  %2803 = vmatpush2.bf16.msra.mxu0 0
  %2804 = vmatprep.subr.bf16.mxu0 0
  %2805 = vmatpush2.bf16.msra.mxu0 0
  %2806 = vmatprep.subr.bf16.mxu0 0
  %2807 = vmatpush2.bf16.msra.mxu0 0
  %2808 = vmatprep.subr.bf16.mxu0 0
  %2809 = vmatpush2.bf16.msra.mxu0 0
  %2810 = vmatprep.mubr.bf16.mxu0 0
  %2811 = vmatmul.mubr.bf16.gmra.mxu0 %v2776
  %v2812 = vpop.f32.mrf.mxu0
  %v2813 = vadd.f32 %v2762, %v2812
  %v2814 = vpop.f32.mrf.mxu0
  %v2815 = vpop.f32.mrf.mxu0
  %v2816 = vadd.f32 %v2767, %v2815
  %v2817 = vpop.f32.mrf.mxu0
  %2818 = vdwg.mxu0
  %vm2819 = vcmask 15360
  %2820 = vst.msk [vmem:[%s17] sm:$0xff] %vm2819, %v2813
  %vm2821 = vcmask 9216
  %2822 = vst.msk [vmem:[%s17 + $0x8] sm:$0x3] %vm2821, %v2816
  // Predicated region
  $region70: #{forward.1} parent=0 // pred_check
    _
  $region71: #{forward.1} parent=0 // pred_check_branch
    %2824 = sbr.rel (0) target = $region73
  $region72: #{forward.1} parent=0 // pred_region
    _
  $region73: #{forward.1} parent=0 // pred_fallthru
    _
  // Predicated region
  $region74: #{forward.1} parent=0 // pred_check
    _
  $region75: #{forward.1} parent=0 // pred_check_branch
    %2826 = sbr.rel (0) target = $region77
  $region76: #{forward.1} parent=0 // pred_region
    _
  $region77: #{forward.1} parent=0 // pred_fallthru
    _

</llo_original>
